<compile_context>
chip_gen: v7x
topology: tpu7x:2x2x1
jax: 0.10.0
libtpu: 0.0.40
codegen_flags: <defaults>
</compile_context>

<pallas_src>
import functools

import jax
import jax.numpy as jnp
import numpy as np
from jax.experimental import pallas as pl
from jax.experimental.pallas import tpu as pltpu

# ---- problem sizes (small, consistent with the module's forward) -----------
B = 2            # batch
SEQ = 1          # seq length (outputs[t] slot shape is (B, 1, OUT))
IN_DIM = 16      # input_dim  (== output_dim so fc output can feed back as x)
HID = 32         # hidden_dim (4*HID = 128 -> one TPU lane width per gate slab)
OUT_DIM = 16     # output_dim
NUM_LAYERS = 3
TIME_SIZE = 8

assert OUT_DIM == IN_DIM, "fc output feeds back as GRU input"
assert OUT_DIM <= HID


def pde_rnn_kernel(x_ref, w_ref, b_ref, wfc_ref, bfc_ref, out_ref, *,
                   time_size):
    """Full rollout: time_size steps of a 3-layer GRU (+folded fc) in one call.

    x_ref   : (B, HID)                external input, zero-padded to HID lanes
    w_ref   : (L+1, 2*HID, 4*HID)     [l0@t0, l0_folded@t>0, l1, l2] weights
    b_ref   : (L+1, 4*HID)            matching bias rows (f32)
    wfc_ref : (HID, OUT_DIM)          fc weight (pre-transposed), outputs only
    bfc_ref : (1, OUT_DIM)            fc bias (f32)
    out_ref : (B, time_size*OUT_DIM)  lane-dense output slab (f32)
    """
    H = HID
    bsz = x_ref.shape[0]

    # ---- load all parameters once; hoist loop-invariant broadcasts ---------
    W = w_ref[...]                                       # (L+1, 2H, 4H), mm dt
    Bv = b_ref[...]                                      # (L+1, 4H), f32
    Wfc = wfc_ref[...]                                   # (H, OUT), mm dtype
    mdt = W.dtype                                        # matmul dtype
    bfc = jnp.broadcast_to(bfc_ref[...], (bsz, OUT_DIM))

    Wl = [W[i] for i in range(NUM_LAYERS + 1)]
    bl = [jnp.broadcast_to(Bv[i][None, :], (bsz, 4 * H))
          for i in range(NUM_LAYERS + 1)]

    def gru_cell(Wi, bi, x_in, h):
        # Single fused matmul: [x_in | h] @ Wi -> [r | z | gi_n | gh_n] (+bias)
        # LHS cast to the matmul dtype (bf16 fast path); gate math stays f32.
        cat = jnp.concatenate([x_in, h], axis=-1).astype(mdt)     # (B, 2H)
        g = jnp.dot(cat, Wi, preferred_element_type=jnp.float32) + bi
        s = jax.nn.sigmoid(g)            # one EUP push per vreg; r/z lanes used
        r = s[:, 0:H]
        z = s[:, H:2 * H]
        n = jnp.tanh(g[:, 2 * H:3 * H] + r * g[:, 3 * H:4 * H])
        return n + z * (h - n)           # == (1 - z) * n + z * h

    # ---- fully-unrolled rollout (static trip count, tiny live state) -------
    x0 = x_ref[...].astype(jnp.float32)                  # (B, H) padded x
    hs = [jnp.zeros((bsz, H), jnp.float32) for _ in range(NUM_LAYERS)]

    ys = []
    for t in range(time_size):
        if t == 0:
            hs[0] = gru_cell(Wl[0], bl[0], x0, hs[0])
        else:
            # fc folded into layer 0: previous step's top hidden state feeds
            # straight in (no fc matmul / pad / concat on the serial chain).
            hs[0] = gru_cell(Wl[1], bl[1], hs[-1], hs[0])
        for l in range(1, NUM_LAYERS):
            hs[l] = gru_cell(Wl[l + 1], bl[l + 1], hs[l - 1], hs[l])
        # Output projection is pure fan-out now (feeds nothing) — independent
        # work the scheduler interleaves under the serial GRU chain.
        y = jnp.dot(hs[-1].astype(mdt), Wfc,
                    preferred_element_type=jnp.float32) + bfc
        ys.append(y)                                     # (B, OUT)

    # single lane-dense store: (B, time_size*OUT) — one unmasked write
    out_ref[...] = jnp.concatenate(ys, axis=-1).astype(out_ref.dtype)


def init_params(key):
    """Deterministic params in PyTorch nn.GRU / nn.Linear shapes."""
    k = 1.0 / np.sqrt(HID)
    keys = jax.random.split(key, 4 * NUM_LAYERS + 2)
    params = {}
    ki = 0
    for layer in range(NUM_LAYERS):
        in_sz = IN_DIM if layer == 0 else HID
        params[f"w_ih_{layer}"] = jax.random.uniform(
            keys[ki], (3 * HID, in_sz), jnp.float32, -k, k); ki += 1
        params[f"w_hh_{layer}"] = jax.random.uniform(
            keys[ki], (3 * HID, HID), jnp.float32, -k, k); ki += 1
        params[f"b_ih_{layer}"] = jax.random.uniform(
            keys[ki], (3 * HID,), jnp.float32, -k, k); ki += 1
        params[f"b_hh_{layer}"] = jax.random.uniform(
            keys[ki], (3 * HID,), jnp.float32, -k, k); ki += 1
    kf = 1.0 / np.sqrt(HID)
    params["w_fc"] = jax.random.uniform(
        keys[ki], (OUT_DIM, HID), jnp.float32, -kf, kf); ki += 1
    params["b_fc"] = jax.random.uniform(
        keys[ki], (OUT_DIM,), jnp.float32, -kf, kf)
    return params


def pack_params(params, mm_dtype=jnp.bfloat16):
    """One-time host-side packing (numpy, f64 composition) — NOT in the jit.

    Returns (w_blob, b_blob, w_fc_t, b_fc_row):
      w_blob[0] : layer 0 for t == 0 (external x in the x-slot rows 0:IN_DIM)
      w_blob[1] : layer 0 for t >= 1 with fc folded in: x-slot = Wfc^T @ W0x
      w_blob[2..]: layers 1..L-1
    Gate columns: [0:H]=r  [H:2H]=z  [2H:3H]=gi_n (x only)  [3H:4H]=gh_n (h only)
    Bias row: [b_ir+b_hr | b_iz+b_hz | b_in | b_hn]  (b_hn stays inside r*(.)).
    """
    H = HID
    p = {k: np.asarray(v).astype(np.float64) for k, v in params.items()}

    def layer_block(wih, whh, in_sz):
        wl = np.zeros((2 * H, 4 * H), np.float64)
        wl[0:in_sz, 0:H] = wih[0:H].T
        wl[0:in_sz, H:2 * H] = wih[H:2 * H].T
        wl[0:in_sz, 2 * H:3 * H] = wih[2 * H:3 * H].T
        wl[H:2 * H, 0:H] = whh[0:H].T
        wl[H:2 * H, H:2 * H] = whh[H:2 * H].T
        wl[H:2 * H, 3 * H:4 * H] = whh[2 * H:3 * H].T
        return wl

    def bias_row(bih, bhh):
        return np.concatenate([bih[0:H] + bhh[0:H],
                               bih[H:2 * H] + bhh[H:2 * H],
                               bih[2 * H:3 * H],
                               bhh[2 * H:3 * H]])

    blocks, biases = [], []
    # layer 0 at t == 0 (external input occupies rows 0:IN_DIM of the x-slot)
    w0 = layer_block(p["w_ih_0"], p["w_hh_0"], IN_DIM)
    b0 = bias_row(p["b_ih_0"], p["b_hh_0"])
    blocks.append(w0); biases.append(b0)

    # layer 0 at t >= 1: fold fc.  x(t) = h2(t-1) @ Wfc^T + b_fc, so
    #   x @ W0x = h2 @ (Wfc^T @ W0x) + b_fc @ W0x
    wfc_t = p["w_fc"].T                     # (H, OUT)
    w0x = w0[0:IN_DIM, :]                   # (IN_DIM, 4H); gh_n columns are 0
    w0f = w0.copy()
    w0f[0:H, :] = wfc_t @ w0x               # (H, 4H) folded x-slot
    b0f = b0 + p["b_fc"] @ w0x
    blocks.append(w0f); biases.append(b0f)

    for l in range(1, NUM_LAYERS):
        blocks.append(layer_block(p[f"w_ih_{l}"], p[f"w_hh_{l}"], H))
        biases.append(bias_row(p[f"b_ih_{l}"], p[f"b_hh_{l}"]))

    w_blob = jnp.asarray(np.stack(blocks), dtype=mm_dtype)      # (L+1, 2H, 4H)
    b_blob = jnp.asarray(np.stack(biases), dtype=jnp.float32)   # (L+1, 4H)
    w_fc_t = jnp.asarray(wfc_t, dtype=mm_dtype)                 # (H, OUT)
    b_fc_row = jnp.asarray(p["b_fc"].reshape(1, -1), dtype=jnp.float32)
    return w_blob, b_blob, w_fc_t, b_fc_row


@functools.partial(jax.jit, static_argnames=("time_size",))
def pde_rnn_forward(x, w_blob, b_blob, w_fc_t, b_fc_row, time_size):
    """x: (B, 1, IN_DIM) float32.  Returns (time_size, B, 1, OUT_DIM) f32."""
    b, s, in_dim = x.shape
    assert s == SEQ == 1 and in_dim == IN_DIM

    # pad external x to HID lanes once (zero weight rows absorb the padding)
    x_pad = jnp.zeros((b, HID), jnp.float32).at[:, :IN_DIM].set(
        x.reshape(b, IN_DIM).astype(jnp.float32))

    w_isz = w_blob.dtype.itemsize
    cost = pl.CostEstimate(
        flops=time_size * (NUM_LAYERS * 2 * b * (2 * HID) * (4 * HID)
                           + 2 * b * HID * OUT_DIM),
        transcendentals=time_size * NUM_LAYERS * b * (4 * HID + HID),
        bytes_accessed=(w_blob.size * w_isz + b_blob.size * 4
                        + w_fc_t.size * w_isz + b_fc_row.size * 4
                        + x_pad.size * 4 + b * time_size * OUT_DIM * 4),
    )

    out = pl.pallas_call(
        functools.partial(pde_rnn_kernel, time_size=time_size),
        out_shape=jax.ShapeDtypeStruct((b, time_size * OUT_DIM), jnp.float32),
        in_specs=[pl.BlockSpec(memory_space=pltpu.MemorySpace.VMEM)
                  for _ in range(5)],
        out_specs=pl.BlockSpec(memory_space=pltpu.MemorySpace.VMEM),
        cost_estimate=cost,
    )(x_pad, w_blob, b_blob, w_fc_t, b_fc_row)

    # (B, T*OUT) -> (T, B, 1, OUT) to match PyTorch `outputs`
    out = out.reshape(b, time_size, OUT_DIM).transpose(1, 0, 2)
    return out.reshape(time_size, b, 1, OUT_DIM)


def ref_forward(x, params, time_size):
    """Pure-JAX reference reproducing the PyTorch forward (spectral=False)."""
    b = x.shape[0]
    hs = [jnp.zeros((b, HID), jnp.float32) for _ in range(NUM_LAYERS)]
    x_in = x.reshape(b, IN_DIM)
    outs = []
    for _ in range(time_size):
        layer_in = x_in
        for layer in range(NUM_LAYERS):
            wi = params[f"w_ih_{layer}"]
            wh = params[f"w_hh_{layer}"]
            bi = params[f"b_ih_{layer}"]
            bh = params[f"b_hh_{layer}"]
            gi = layer_in @ wi.T + bi
            gh = hs[layer] @ wh.T + bh
            r = jax.nn.sigmoid(gi[:, :HID] + gh[:, :HID])
            z = jax.nn.sigmoid(gi[:, HID:2 * HID] + gh[:, HID:2 * HID])
            n = jnp.tanh(gi[:, 2 * HID:] + r * gh[:, 2 * HID:])
            hs[layer] = (1.0 - z) * n + z * hs[layer]
            layer_in = hs[layer]
        y = hs[-1] @ params["w_fc"].T + params["b_fc"]
        outs.append(y)
        x_in = y
    return jnp.stack(outs).reshape(time_size, b, 1, OUT_DIM)


if __name__ == "__main__":
    key = jax.random.PRNGKey(0)
    pkey, xkey = jax.random.split(key)
    params = init_params(pkey)
    x = jax.random.normal(xkey, (B, SEQ, IN_DIM), jnp.float32)

    ref = jax.block_until_ready(ref_forward(x, params, TIME_SIZE))

    # ---- bf16 matmul path (default / fast): loose check vs f32 reference ---
    packed_bf16 = pack_params(params, jnp.bfloat16)   # packed ONCE, reused
    out_bf16 = jax.block_until_ready(
        pde_rnn_forward(x, *packed_bf16, time_size=TIME_SIZE))
    assert out_bf16.shape == (TIME_SIZE, B, 1, OUT_DIM), out_bf16.shape
    np.testing.assert_allclose(np.asarray(out_bf16), np.asarray(ref),
                               rtol=5e-2, atol=5e-2)

    # ---- f32 fallback: tight check proves fc-fold / packing is exact -------
    packed_f32 = pack_params(params, jnp.float32)
    out_f32 = jax.block_until_ready(
        pde_rnn_forward(x, *packed_f32, time_size=TIME_SIZE))
    np.testing.assert_allclose(np.asarray(out_f32), np.asarray(ref),
                               rtol=2e-4, atol=2e-4)

    print("KERNEL_OK")
</pallas_src>

<mosaic_0001>
module attributes {stable_mosaic.version = 11 : i64} {
  func.func @pde_rnn_kernel(%arg0: memref<2x32xf32, #tpu.memory_space<vmem>>, %arg1: memref<4x64x128xbf16, #tpu.memory_space<vmem>>, %arg2: memref<4x128xf32, #tpu.memory_space<vmem>>, %arg3: memref<32x16xbf16, #tpu.memory_space<vmem>>, %arg4: memref<1x16xf32, #tpu.memory_space<vmem>>, %arg5: memref<2x128xf32, #tpu.memory_space<vmem>>) attributes {dimension_semantics = [], scalar_prefetch = 0 : i64, scratch_operands = 0 : i64, tpu.core_type = #tpu.core_type<tc>} {
    %c0 = arith.constant 0 : index
    %c0_0 = arith.constant 0 : index
    %c0_1 = arith.constant 0 : index
    %0 = vector.load %arg1[%c0, %c0_0, %c0_1] : memref<4x64x128xbf16, #tpu.memory_space<vmem>>, vector<4x64x128xbf16>
    %c0_2 = arith.constant 0 : index
    %c0_3 = arith.constant 0 : index
    %1 = vector.load %arg2[%c0_2, %c0_3] : memref<4x128xf32, #tpu.memory_space<vmem>>, vector<4x128xf32>
    %c0_4 = arith.constant 0 : index
    %c0_5 = arith.constant 0 : index
    %2 = vector.load %arg3[%c0_4, %c0_5] : memref<32x16xbf16, #tpu.memory_space<vmem>>, vector<32x16xbf16>
    %c0_6 = arith.constant 0 : index
    %c0_7 = arith.constant 0 : index
    %3 = vector.load %arg4[%c0_6, %c0_7] : memref<1x16xf32, #tpu.memory_space<vmem>>, vector<1x16xf32>
    %4 = vector.shape_cast %3 : vector<1x16xf32> to vector<1x16xf32>
    %5 = vector.broadcast %4 : vector<1x16xf32> to vector<2x16xf32>
    %6 = vector.extract_strided_slice %0 {offsets = [0, 0, 0], sizes = [1, 64, 128], strides = [1, 1, 1]} : vector<4x64x128xbf16> to vector<1x64x128xbf16>
    %7 = vector.shape_cast %6 : vector<1x64x128xbf16> to vector<64x128xbf16>
    %8 = vector.extract_strided_slice %0 {offsets = [1, 0, 0], sizes = [1, 64, 128], strides = [1, 1, 1]} : vector<4x64x128xbf16> to vector<1x64x128xbf16>
    %9 = vector.shape_cast %8 : vector<1x64x128xbf16> to vector<64x128xbf16>
    %10 = vector.extract_strided_slice %0 {offsets = [2, 0, 0], sizes = [1, 64, 128], strides = [1, 1, 1]} : vector<4x64x128xbf16> to vector<1x64x128xbf16>
    %11 = vector.shape_cast %10 : vector<1x64x128xbf16> to vector<64x128xbf16>
    %12 = vector.extract_strided_slice %0 {offsets = [3, 0, 0], sizes = [1, 64, 128], strides = [1, 1, 1]} : vector<4x64x128xbf16> to vector<1x64x128xbf16>
    %13 = vector.shape_cast %12 : vector<1x64x128xbf16> to vector<64x128xbf16>
    %14 = vector.extract_strided_slice %1 {offsets = [0, 0], sizes = [1, 128], strides = [1, 1]} : vector<4x128xf32> to vector<1x128xf32>
    %15 = vector.shape_cast %14 : vector<1x128xf32> to vector<128xf32>
    %16 = vector.shape_cast %15 : vector<128xf32> to vector<1x128xf32>
    %17 = vector.shape_cast %16 : vector<1x128xf32> to vector<1x128xf32>
    %18 = vector.broadcast %17 : vector<1x128xf32> to vector<2x128xf32>
    %19 = vector.extract_strided_slice %1 {offsets = [1, 0], sizes = [1, 128], strides = [1, 1]} : vector<4x128xf32> to vector<1x128xf32>
    %20 = vector.shape_cast %19 : vector<1x128xf32> to vector<128xf32>
    %21 = vector.shape_cast %20 : vector<128xf32> to vector<1x128xf32>
    %22 = vector.shape_cast %21 : vector<1x128xf32> to vector<1x128xf32>
    %23 = vector.broadcast %22 : vector<1x128xf32> to vector<2x128xf32>
    %24 = vector.extract_strided_slice %1 {offsets = [2, 0], sizes = [1, 128], strides = [1, 1]} : vector<4x128xf32> to vector<1x128xf32>
    %25 = vector.shape_cast %24 : vector<1x128xf32> to vector<128xf32>
    %26 = vector.shape_cast %25 : vector<128xf32> to vector<1x128xf32>
    %27 = vector.shape_cast %26 : vector<1x128xf32> to vector<1x128xf32>
    %28 = vector.broadcast %27 : vector<1x128xf32> to vector<2x128xf32>
    %29 = vector.extract_strided_slice %1 {offsets = [3, 0], sizes = [1, 128], strides = [1, 1]} : vector<4x128xf32> to vector<1x128xf32>
    %30 = vector.shape_cast %29 : vector<1x128xf32> to vector<128xf32>
    %31 = vector.shape_cast %30 : vector<128xf32> to vector<1x128xf32>
    %32 = vector.shape_cast %31 : vector<1x128xf32> to vector<1x128xf32>
    %33 = vector.broadcast %32 : vector<1x128xf32> to vector<2x128xf32>
    %c0_8 = arith.constant 0 : index
    %c0_9 = arith.constant 0 : index
    %34 = vector.load %arg0[%c0_8, %c0_9] : memref<2x32xf32, #tpu.memory_space<vmem>>, vector<2x32xf32>
    %cst = arith.constant 0.000000e+00 : f32
    %35 = vector.broadcast %cst : f32 to vector<2x32xf32>
    %cst_10 = arith.constant 0.000000e+00 : f32
    %36 = vector.broadcast %cst_10 : f32 to vector<2x32xf32>
    %cst_11 = arith.constant 0.000000e+00 : f32
    %37 = vector.broadcast %cst_11 : f32 to vector<2x32xf32>
    %38 = tpu.concatenate %34, %35 in 1 : vector<2x32xf32>, vector<2x32xf32> -> vector<2x64xf32>
    %39 = arith.truncf %38 : vector<2x64xf32> to vector<2x64xbf16>
    %cst_12 = arith.constant dense<0.000000e+00> : vector<2x128xf32>
    %40 = tpu.matmul %39, %7, %cst_12 {dimension_numbers = #tpu.dot_dimension_numbers<[1], [0], [0], [1], [0, 0, 1, 1], [], []>} : vector<2x64xbf16>, vector<64x128xbf16>, vector<2x128xf32> -> vector<2x128xf32>
    %41 = arith.addf %40, %18 : vector<2x128xf32>
    %42 = arith.negf %41 : vector<2x128xf32>
    %43 = math.exp %42 : vector<2x128xf32>
    %cst_13 = arith.constant 1.000000e+00 : f32
    %44 = vector.broadcast %cst_13 : f32 to vector<2x128xf32>
    %45 = arith.addf %44, %43 : vector<2x128xf32>
    %46 = arith.divf %44, %45 : vector<2x128xf32>
    %47 = vector.extract_strided_slice %46 {offsets = [0, 0], sizes = [2, 32], strides = [1, 1]} : vector<2x128xf32> to vector<2x32xf32>
    %48 = vector.extract_strided_slice %46 {offsets = [0, 32], sizes = [2, 32], strides = [1, 1]} : vector<2x128xf32> to vector<2x32xf32>
    %49 = vector.extract_strided_slice %41 {offsets = [0, 64], sizes = [2, 32], strides = [1, 1]} : vector<2x128xf32> to vector<2x32xf32>
    %50 = vector.extract_strided_slice %41 {offsets = [0, 96], sizes = [2, 32], strides = [1, 1]} : vector<2x128xf32> to vector<2x32xf32>
    %51 = arith.mulf %47, %50 : vector<2x32xf32>
    %52 = arith.addf %49, %51 : vector<2x32xf32>
    %53 = math.tanh %52 : vector<2x32xf32>
    %54 = arith.subf %35, %53 : vector<2x32xf32>
    %55 = arith.mulf %48, %54 : vector<2x32xf32>
    %56 = arith.addf %53, %55 : vector<2x32xf32>
    %57 = tpu.concatenate %56, %36 in 1 : vector<2x32xf32>, vector<2x32xf32> -> vector<2x64xf32>
    %58 = arith.truncf %57 : vector<2x64xf32> to vector<2x64xbf16>
    %cst_14 = arith.constant dense<0.000000e+00> : vector<2x128xf32>
    %59 = tpu.matmul %58, %11, %cst_14 {dimension_numbers = #tpu.dot_dimension_numbers<[1], [0], [0], [1], [0, 0, 1, 1], [], []>} : vector<2x64xbf16>, vector<64x128xbf16>, vector<2x128xf32> -> vector<2x128xf32>
    %60 = arith.addf %59, %28 : vector<2x128xf32>
    %61 = arith.negf %60 : vector<2x128xf32>
    %62 = math.exp %61 : vector<2x128xf32>
    %cst_15 = arith.constant 1.000000e+00 : f32
    %63 = vector.broadcast %cst_15 : f32 to vector<2x128xf32>
    %64 = arith.addf %63, %62 : vector<2x128xf32>
    %65 = arith.divf %63, %64 : vector<2x128xf32>
    %66 = vector.extract_strided_slice %65 {offsets = [0, 0], sizes = [2, 32], strides = [1, 1]} : vector<2x128xf32> to vector<2x32xf32>
    %67 = vector.extract_strided_slice %65 {offsets = [0, 32], sizes = [2, 32], strides = [1, 1]} : vector<2x128xf32> to vector<2x32xf32>
    %68 = vector.extract_strided_slice %60 {offsets = [0, 64], sizes = [2, 32], strides = [1, 1]} : vector<2x128xf32> to vector<2x32xf32>
    %69 = vector.extract_strided_slice %60 {offsets = [0, 96], sizes = [2, 32], strides = [1, 1]} : vector<2x128xf32> to vector<2x32xf32>
    %70 = arith.mulf %66, %69 : vector<2x32xf32>
    %71 = arith.addf %68, %70 : vector<2x32xf32>
    %72 = math.tanh %71 : vector<2x32xf32>
    %73 = arith.subf %36, %72 : vector<2x32xf32>
    %74 = arith.mulf %67, %73 : vector<2x32xf32>
    %75 = arith.addf %72, %74 : vector<2x32xf32>
    %76 = tpu.concatenate %75, %37 in 1 : vector<2x32xf32>, vector<2x32xf32> -> vector<2x64xf32>
    %77 = arith.truncf %76 : vector<2x64xf32> to vector<2x64xbf16>
    %cst_16 = arith.constant dense<0.000000e+00> : vector<2x128xf32>
    %78 = tpu.matmul %77, %13, %cst_16 {dimension_numbers = #tpu.dot_dimension_numbers<[1], [0], [0], [1], [0, 0, 1, 1], [], []>} : vector<2x64xbf16>, vector<64x128xbf16>, vector<2x128xf32> -> vector<2x128xf32>
    %79 = arith.addf %78, %33 : vector<2x128xf32>
    %80 = arith.negf %79 : vector<2x128xf32>
    %81 = math.exp %80 : vector<2x128xf32>
    %cst_17 = arith.constant 1.000000e+00 : f32
    %82 = vector.broadcast %cst_17 : f32 to vector<2x128xf32>
    %83 = arith.addf %82, %81 : vector<2x128xf32>
    %84 = arith.divf %82, %83 : vector<2x128xf32>
    %85 = vector.extract_strided_slice %84 {offsets = [0, 0], sizes = [2, 32], strides = [1, 1]} : vector<2x128xf32> to vector<2x32xf32>
    %86 = vector.extract_strided_slice %84 {offsets = [0, 32], sizes = [2, 32], strides = [1, 1]} : vector<2x128xf32> to vector<2x32xf32>
    %87 = vector.extract_strided_slice %79 {offsets = [0, 64], sizes = [2, 32], strides = [1, 1]} : vector<2x128xf32> to vector<2x32xf32>
    %88 = vector.extract_strided_slice %79 {offsets = [0, 96], sizes = [2, 32], strides = [1, 1]} : vector<2x128xf32> to vector<2x32xf32>
    %89 = arith.mulf %85, %88 : vector<2x32xf32>
    %90 = arith.addf %87, %89 : vector<2x32xf32>
    %91 = math.tanh %90 : vector<2x32xf32>
    %92 = arith.subf %37, %91 : vector<2x32xf32>
    %93 = arith.mulf %86, %92 : vector<2x32xf32>
    %94 = arith.addf %91, %93 : vector<2x32xf32>
    %95 = arith.truncf %94 : vector<2x32xf32> to vector<2x32xbf16>
    %cst_18 = arith.constant dense<0.000000e+00> : vector<2x16xf32>
    %96 = tpu.matmul %95, %2, %cst_18 {dimension_numbers = #tpu.dot_dimension_numbers<[1], [0], [0], [1], [0, 0, 1, 1], [], []>} : vector<2x32xbf16>, vector<32x16xbf16>, vector<2x16xf32> -> vector<2x16xf32>
    %97 = arith.addf %96, %5 : vector<2x16xf32>
    %98 = tpu.concatenate %94, %56 in 1 : vector<2x32xf32>, vector<2x32xf32> -> vector<2x64xf32>
    %99 = arith.truncf %98 : vector<2x64xf32> to vector<2x64xbf16>
    %cst_19 = arith.constant dense<0.000000e+00> : vector<2x128xf32>
    %100 = tpu.matmul %99, %9, %cst_19 {dimension_numbers = #tpu.dot_dimension_numbers<[1], [0], [0], [1], [0, 0, 1, 1], [], []>} : vector<2x64xbf16>, vector<64x128xbf16>, vector<2x128xf32> -> vector<2x128xf32>
    %101 = arith.addf %100, %23 : vector<2x128xf32>
    %102 = arith.negf %101 : vector<2x128xf32>
    %103 = math.exp %102 : vector<2x128xf32>
    %cst_20 = arith.constant 1.000000e+00 : f32
    %104 = vector.broadcast %cst_20 : f32 to vector<2x128xf32>
    %105 = arith.addf %104, %103 : vector<2x128xf32>
    %106 = arith.divf %104, %105 : vector<2x128xf32>
    %107 = vector.extract_strided_slice %106 {offsets = [0, 0], sizes = [2, 32], strides = [1, 1]} : vector<2x128xf32> to vector<2x32xf32>
    %108 = vector.extract_strided_slice %106 {offsets = [0, 32], sizes = [2, 32], strides = [1, 1]} : vector<2x128xf32> to vector<2x32xf32>
    %109 = vector.extract_strided_slice %101 {offsets = [0, 64], sizes = [2, 32], strides = [1, 1]} : vector<2x128xf32> to vector<2x32xf32>
    %110 = vector.extract_strided_slice %101 {offsets = [0, 96], sizes = [2, 32], strides = [1, 1]} : vector<2x128xf32> to vector<2x32xf32>
    %111 = arith.mulf %107, %110 : vector<2x32xf32>
    %112 = arith.addf %109, %111 : vector<2x32xf32>
    %113 = math.tanh %112 : vector<2x32xf32>
    %114 = arith.subf %56, %113 : vector<2x32xf32>
    %115 = arith.mulf %108, %114 : vector<2x32xf32>
    %116 = arith.addf %113, %115 : vector<2x32xf32>
    %117 = tpu.concatenate %116, %75 in 1 : vector<2x32xf32>, vector<2x32xf32> -> vector<2x64xf32>
    %118 = arith.truncf %117 : vector<2x64xf32> to vector<2x64xbf16>
    %cst_21 = arith.constant dense<0.000000e+00> : vector<2x128xf32>
    %119 = tpu.matmul %118, %11, %cst_21 {dimension_numbers = #tpu.dot_dimension_numbers<[1], [0], [0], [1], [0, 0, 1, 1], [], []>} : vector<2x64xbf16>, vector<64x128xbf16>, vector<2x128xf32> -> vector<2x128xf32>
    %120 = arith.addf %119, %28 : vector<2x128xf32>
    %121 = arith.negf %120 : vector<2x128xf32>
    %122 = math.exp %121 : vector<2x128xf32>
    %cst_22 = arith.constant 1.000000e+00 : f32
    %123 = vector.broadcast %cst_22 : f32 to vector<2x128xf32>
    %124 = arith.addf %123, %122 : vector<2x128xf32>
    %125 = arith.divf %123, %124 : vector<2x128xf32>
    %126 = vector.extract_strided_slice %125 {offsets = [0, 0], sizes = [2, 32], strides = [1, 1]} : vector<2x128xf32> to vector<2x32xf32>
    %127 = vector.extract_strided_slice %125 {offsets = [0, 32], sizes = [2, 32], strides = [1, 1]} : vector<2x128xf32> to vector<2x32xf32>
    %128 = vector.extract_strided_slice %120 {offsets = [0, 64], sizes = [2, 32], strides = [1, 1]} : vector<2x128xf32> to vector<2x32xf32>
    %129 = vector.extract_strided_slice %120 {offsets = [0, 96], sizes = [2, 32], strides = [1, 1]} : vector<2x128xf32> to vector<2x32xf32>
    %130 = arith.mulf %126, %129 : vector<2x32xf32>
    %131 = arith.addf %128, %130 : vector<2x32xf32>
    %132 = math.tanh %131 : vector<2x32xf32>
    %133 = arith.subf %75, %132 : vector<2x32xf32>
    %134 = arith.mulf %127, %133 : vector<2x32xf32>
    %135 = arith.addf %132, %134 : vector<2x32xf32>
    %136 = tpu.concatenate %135, %94 in 1 : vector<2x32xf32>, vector<2x32xf32> -> vector<2x64xf32>
    %137 = arith.truncf %136 : vector<2x64xf32> to vector<2x64xbf16>
    %cst_23 = arith.constant dense<0.000000e+00> : vector<2x128xf32>
    %138 = tpu.matmul %137, %13, %cst_23 {dimension_numbers = #tpu.dot_dimension_numbers<[1], [0], [0], [1], [0, 0, 1, 1], [], []>} : vector<2x64xbf16>, vector<64x128xbf16>, vector<2x128xf32> -> vector<2x128xf32>
    %139 = arith.addf %138, %33 : vector<2x128xf32>
    %140 = arith.negf %139 : vector<2x128xf32>
    %141 = math.exp %140 : vector<2x128xf32>
    %cst_24 = arith.constant 1.000000e+00 : f32
    %142 = vector.broadcast %cst_24 : f32 to vector<2x128xf32>
    %143 = arith.addf %142, %141 : vector<2x128xf32>
    %144 = arith.divf %142, %143 : vector<2x128xf32>
    %145 = vector.extract_strided_slice %144 {offsets = [0, 0], sizes = [2, 32], strides = [1, 1]} : vector<2x128xf32> to vector<2x32xf32>
    %146 = vector.extract_strided_slice %144 {offsets = [0, 32], sizes = [2, 32], strides = [1, 1]} : vector<2x128xf32> to vector<2x32xf32>
    %147 = vector.extract_strided_slice %139 {offsets = [0, 64], sizes = [2, 32], strides = [1, 1]} : vector<2x128xf32> to vector<2x32xf32>
    %148 = vector.extract_strided_slice %139 {offsets = [0, 96], sizes = [2, 32], strides = [1, 1]} : vector<2x128xf32> to vector<2x32xf32>
    %149 = arith.mulf %145, %148 : vector<2x32xf32>
    %150 = arith.addf %147, %149 : vector<2x32xf32>
    %151 = math.tanh %150 : vector<2x32xf32>
    %152 = arith.subf %94, %151 : vector<2x32xf32>
    %153 = arith.mulf %146, %152 : vector<2x32xf32>
    %154 = arith.addf %151, %153 : vector<2x32xf32>
    %155 = arith.truncf %154 : vector<2x32xf32> to vector<2x32xbf16>
    %cst_25 = arith.constant dense<0.000000e+00> : vector<2x16xf32>
    %156 = tpu.matmul %155, %2, %cst_25 {dimension_numbers = #tpu.dot_dimension_numbers<[1], [0], [0], [1], [0, 0, 1, 1], [], []>} : vector<2x32xbf16>, vector<32x16xbf16>, vector<2x16xf32> -> vector<2x16xf32>
    %157 = arith.addf %156, %5 : vector<2x16xf32>
    %158 = tpu.concatenate %154, %116 in 1 : vector<2x32xf32>, vector<2x32xf32> -> vector<2x64xf32>
    %159 = arith.truncf %158 : vector<2x64xf32> to vector<2x64xbf16>
    %cst_26 = arith.constant dense<0.000000e+00> : vector<2x128xf32>
    %160 = tpu.matmul %159, %9, %cst_26 {dimension_numbers = #tpu.dot_dimension_numbers<[1], [0], [0], [1], [0, 0, 1, 1], [], []>} : vector<2x64xbf16>, vector<64x128xbf16>, vector<2x128xf32> -> vector<2x128xf32>
    %161 = arith.addf %160, %23 : vector<2x128xf32>
    %162 = arith.negf %161 : vector<2x128xf32>
    %163 = math.exp %162 : vector<2x128xf32>
    %cst_27 = arith.constant 1.000000e+00 : f32
    %164 = vector.broadcast %cst_27 : f32 to vector<2x128xf32>
    %165 = arith.addf %164, %163 : vector<2x128xf32>
    %166 = arith.divf %164, %165 : vector<2x128xf32>
    %167 = vector.extract_strided_slice %166 {offsets = [0, 0], sizes = [2, 32], strides = [1, 1]} : vector<2x128xf32> to vector<2x32xf32>
    %168 = vector.extract_strided_slice %166 {offsets = [0, 32], sizes = [2, 32], strides = [1, 1]} : vector<2x128xf32> to vector<2x32xf32>
    %169 = vector.extract_strided_slice %161 {offsets = [0, 64], sizes = [2, 32], strides = [1, 1]} : vector<2x128xf32> to vector<2x32xf32>
    %170 = vector.extract_strided_slice %161 {offsets = [0, 96], sizes = [2, 32], strides = [1, 1]} : vector<2x128xf32> to vector<2x32xf32>
    %171 = arith.mulf %167, %170 : vector<2x32xf32>
    %172 = arith.addf %169, %171 : vector<2x32xf32>
    %173 = math.tanh %172 : vector<2x32xf32>
    %174 = arith.subf %116, %173 : vector<2x32xf32>
    %175 = arith.mulf %168, %174 : vector<2x32xf32>
    %176 = arith.addf %173, %175 : vector<2x32xf32>
    %177 = tpu.concatenate %176, %135 in 1 : vector<2x32xf32>, vector<2x32xf32> -> vector<2x64xf32>
    %178 = arith.truncf %177 : vector<2x64xf32> to vector<2x64xbf16>
    %cst_28 = arith.constant dense<0.000000e+00> : vector<2x128xf32>
    %179 = tpu.matmul %178, %11, %cst_28 {dimension_numbers = #tpu.dot_dimension_numbers<[1], [0], [0], [1], [0, 0, 1, 1], [], []>} : vector<2x64xbf16>, vector<64x128xbf16>, vector<2x128xf32> -> vector<2x128xf32>
    %180 = arith.addf %179, %28 : vector<2x128xf32>
    %181 = arith.negf %180 : vector<2x128xf32>
    %182 = math.exp %181 : vector<2x128xf32>
    %cst_29 = arith.constant 1.000000e+00 : f32
    %183 = vector.broadcast %cst_29 : f32 to vector<2x128xf32>
    %184 = arith.addf %183, %182 : vector<2x128xf32>
    %185 = arith.divf %183, %184 : vector<2x128xf32>
    %186 = vector.extract_strided_slice %185 {offsets = [0, 0], sizes = [2, 32], strides = [1, 1]} : vector<2x128xf32> to vector<2x32xf32>
    %187 = vector.extract_strided_slice %185 {offsets = [0, 32], sizes = [2, 32], strides = [1, 1]} : vector<2x128xf32> to vector<2x32xf32>
    %188 = vector.extract_strided_slice %180 {offsets = [0, 64], sizes = [2, 32], strides = [1, 1]} : vector<2x128xf32> to vector<2x32xf32>
    %189 = vector.extract_strided_slice %180 {offsets = [0, 96], sizes = [2, 32], strides = [1, 1]} : vector<2x128xf32> to vector<2x32xf32>
    %190 = arith.mulf %186, %189 : vector<2x32xf32>
    %191 = arith.addf %188, %190 : vector<2x32xf32>
    %192 = math.tanh %191 : vector<2x32xf32>
    %193 = arith.subf %135, %192 : vector<2x32xf32>
    %194 = arith.mulf %187, %193 : vector<2x32xf32>
    %195 = arith.addf %192, %194 : vector<2x32xf32>
    %196 = tpu.concatenate %195, %154 in 1 : vector<2x32xf32>, vector<2x32xf32> -> vector<2x64xf32>
    %197 = arith.truncf %196 : vector<2x64xf32> to vector<2x64xbf16>
    %cst_30 = arith.constant dense<0.000000e+00> : vector<2x128xf32>
    %198 = tpu.matmul %197, %13, %cst_30 {dimension_numbers = #tpu.dot_dimension_numbers<[1], [0], [0], [1], [0, 0, 1, 1], [], []>} : vector<2x64xbf16>, vector<64x128xbf16>, vector<2x128xf32> -> vector<2x128xf32>
    %199 = arith.addf %198, %33 : vector<2x128xf32>
    %200 = arith.negf %199 : vector<2x128xf32>
    %201 = math.exp %200 : vector<2x128xf32>
    %cst_31 = arith.constant 1.000000e+00 : f32
    %202 = vector.broadcast %cst_31 : f32 to vector<2x128xf32>
    %203 = arith.addf %202, %201 : vector<2x128xf32>
    %204 = arith.divf %202, %203 : vector<2x128xf32>
    %205 = vector.extract_strided_slice %204 {offsets = [0, 0], sizes = [2, 32], strides = [1, 1]} : vector<2x128xf32> to vector<2x32xf32>
    %206 = vector.extract_strided_slice %204 {offsets = [0, 32], sizes = [2, 32], strides = [1, 1]} : vector<2x128xf32> to vector<2x32xf32>
    %207 = vector.extract_strided_slice %199 {offsets = [0, 64], sizes = [2, 32], strides = [1, 1]} : vector<2x128xf32> to vector<2x32xf32>
    %208 = vector.extract_strided_slice %199 {offsets = [0, 96], sizes = [2, 32], strides = [1, 1]} : vector<2x128xf32> to vector<2x32xf32>
    %209 = arith.mulf %205, %208 : vector<2x32xf32>
    %210 = arith.addf %207, %209 : vector<2x32xf32>
    %211 = math.tanh %210 : vector<2x32xf32>
    %212 = arith.subf %154, %211 : vector<2x32xf32>
    %213 = arith.mulf %206, %212 : vector<2x32xf32>
    %214 = arith.addf %211, %213 : vector<2x32xf32>
    %215 = arith.truncf %214 : vector<2x32xf32> to vector<2x32xbf16>
    %cst_32 = arith.constant dense<0.000000e+00> : vector<2x16xf32>
    %216 = tpu.matmul %215, %2, %cst_32 {dimension_numbers = #tpu.dot_dimension_numbers<[1], [0], [0], [1], [0, 0, 1, 1], [], []>} : vector<2x32xbf16>, vector<32x16xbf16>, vector<2x16xf32> -> vector<2x16xf32>
    %217 = arith.addf %216, %5 : vector<2x16xf32>
    %218 = tpu.concatenate %214, %176 in 1 : vector<2x32xf32>, vector<2x32xf32> -> vector<2x64xf32>
    %219 = arith.truncf %218 : vector<2x64xf32> to vector<2x64xbf16>
    %cst_33 = arith.constant dense<0.000000e+00> : vector<2x128xf32>
    %220 = tpu.matmul %219, %9, %cst_33 {dimension_numbers = #tpu.dot_dimension_numbers<[1], [0], [0], [1], [0, 0, 1, 1], [], []>} : vector<2x64xbf16>, vector<64x128xbf16>, vector<2x128xf32> -> vector<2x128xf32>
    %221 = arith.addf %220, %23 : vector<2x128xf32>
    %222 = arith.negf %221 : vector<2x128xf32>
    %223 = math.exp %222 : vector<2x128xf32>
    %cst_34 = arith.constant 1.000000e+00 : f32
    %224 = vector.broadcast %cst_34 : f32 to vector<2x128xf32>
    %225 = arith.addf %224, %223 : vector<2x128xf32>
    %226 = arith.divf %224, %225 : vector<2x128xf32>
    %227 = vector.extract_strided_slice %226 {offsets = [0, 0], sizes = [2, 32], strides = [1, 1]} : vector<2x128xf32> to vector<2x32xf32>
    %228 = vector.extract_strided_slice %226 {offsets = [0, 32], sizes = [2, 32], strides = [1, 1]} : vector<2x128xf32> to vector<2x32xf32>
    %229 = vector.extract_strided_slice %221 {offsets = [0, 64], sizes = [2, 32], strides = [1, 1]} : vector<2x128xf32> to vector<2x32xf32>
    %230 = vector.extract_strided_slice %221 {offsets = [0, 96], sizes = [2, 32], strides = [1, 1]} : vector<2x128xf32> to vector<2x32xf32>
    %231 = arith.mulf %227, %230 : vector<2x32xf32>
    %232 = arith.addf %229, %231 : vector<2x32xf32>
    %233 = math.tanh %232 : vector<2x32xf32>
    %234 = arith.subf %176, %233 : vector<2x32xf32>
    %235 = arith.mulf %228, %234 : vector<2x32xf32>
    %236 = arith.addf %233, %235 : vector<2x32xf32>
    %237 = tpu.concatenate %236, %195 in 1 : vector<2x32xf32>, vector<2x32xf32> -> vector<2x64xf32>
    %238 = arith.truncf %237 : vector<2x64xf32> to vector<2x64xbf16>
    %cst_35 = arith.constant dense<0.000000e+00> : vector<2x128xf32>
    %239 = tpu.matmul %238, %11, %cst_35 {dimension_numbers = #tpu.dot_dimension_numbers<[1], [0], [0], [1], [0, 0, 1, 1], [], []>} : vector<2x64xbf16>, vector<64x128xbf16>, vector<2x128xf32> -> vector<2x128xf32>
    %240 = arith.addf %239, %28 : vector<2x128xf32>
    %241 = arith.negf %240 : vector<2x128xf32>
    %242 = math.exp %241 : vector<2x128xf32>
    %cst_36 = arith.constant 1.000000e+00 : f32
    %243 = vector.broadcast %cst_36 : f32 to vector<2x128xf32>
    %244 = arith.addf %243, %242 : vector<2x128xf32>
    %245 = arith.divf %243, %244 : vector<2x128xf32>
    %246 = vector.extract_strided_slice %245 {offsets = [0, 0], sizes = [2, 32], strides = [1, 1]} : vector<2x128xf32> to vector<2x32xf32>
    %247 = vector.extract_strided_slice %245 {offsets = [0, 32], sizes = [2, 32], strides = [1, 1]} : vector<2x128xf32> to vector<2x32xf32>
    %248 = vector.extract_strided_slice %240 {offsets = [0, 64], sizes = [2, 32], strides = [1, 1]} : vector<2x128xf32> to vector<2x32xf32>
    %249 = vector.extract_strided_slice %240 {offsets = [0, 96], sizes = [2, 32], strides = [1, 1]} : vector<2x128xf32> to vector<2x32xf32>
    %250 = arith.mulf %246, %249 : vector<2x32xf32>
    %251 = arith.addf %248, %250 : vector<2x32xf32>
    %252 = math.tanh %251 : vector<2x32xf32>
    %253 = arith.subf %195, %252 : vector<2x32xf32>
    %254 = arith.mulf %247, %253 : vector<2x32xf32>
    %255 = arith.addf %252, %254 : vector<2x32xf32>
    %256 = tpu.concatenate %255, %214 in 1 : vector<2x32xf32>, vector<2x32xf32> -> vector<2x64xf32>
    %257 = arith.truncf %256 : vector<2x64xf32> to vector<2x64xbf16>
    %cst_37 = arith.constant dense<0.000000e+00> : vector<2x128xf32>
    %258 = tpu.matmul %257, %13, %cst_37 {dimension_numbers = #tpu.dot_dimension_numbers<[1], [0], [0], [1], [0, 0, 1, 1], [], []>} : vector<2x64xbf16>, vector<64x128xbf16>, vector<2x128xf32> -> vector<2x128xf32>
    %259 = arith.addf %258, %33 : vector<2x128xf32>
    %260 = arith.negf %259 : vector<2x128xf32>
    %261 = math.exp %260 : vector<2x128xf32>
    %cst_38 = arith.constant 1.000000e+00 : f32
    %262 = vector.broadcast %cst_38 : f32 to vector<2x128xf32>
    %263 = arith.addf %262, %261 : vector<2x128xf32>
    %264 = arith.divf %262, %263 : vector<2x128xf32>
    %265 = vector.extract_strided_slice %264 {offsets = [0, 0], sizes = [2, 32], strides = [1, 1]} : vector<2x128xf32> to vector<2x32xf32>
    %266 = vector.extract_strided_slice %264 {offsets = [0, 32], sizes = [2, 32], strides = [1, 1]} : vector<2x128xf32> to vector<2x32xf32>
    %267 = vector.extract_strided_slice %259 {offsets = [0, 64], sizes = [2, 32], strides = [1, 1]} : vector<2x128xf32> to vector<2x32xf32>
    %268 = vector.extract_strided_slice %259 {offsets = [0, 96], sizes = [2, 32], strides = [1, 1]} : vector<2x128xf32> to vector<2x32xf32>
    %269 = arith.mulf %265, %268 : vector<2x32xf32>
    %270 = arith.addf %267, %269 : vector<2x32xf32>
    %271 = math.tanh %270 : vector<2x32xf32>
    %272 = arith.subf %214, %271 : vector<2x32xf32>
    %273 = arith.mulf %266, %272 : vector<2x32xf32>
    %274 = arith.addf %271, %273 : vector<2x32xf32>
    %275 = arith.truncf %274 : vector<2x32xf32> to vector<2x32xbf16>
    %cst_39 = arith.constant dense<0.000000e+00> : vector<2x16xf32>
    %276 = tpu.matmul %275, %2, %cst_39 {dimension_numbers = #tpu.dot_dimension_numbers<[1], [0], [0], [1], [0, 0, 1, 1], [], []>} : vector<2x32xbf16>, vector<32x16xbf16>, vector<2x16xf32> -> vector<2x16xf32>
    %277 = arith.addf %276, %5 : vector<2x16xf32>
    %278 = tpu.concatenate %274, %236 in 1 : vector<2x32xf32>, vector<2x32xf32> -> vector<2x64xf32>
    %279 = arith.truncf %278 : vector<2x64xf32> to vector<2x64xbf16>
    %cst_40 = arith.constant dense<0.000000e+00> : vector<2x128xf32>
    %280 = tpu.matmul %279, %9, %cst_40 {dimension_numbers = #tpu.dot_dimension_numbers<[1], [0], [0], [1], [0, 0, 1, 1], [], []>} : vector<2x64xbf16>, vector<64x128xbf16>, vector<2x128xf32> -> vector<2x128xf32>
    %281 = arith.addf %280, %23 : vector<2x128xf32>
    %282 = arith.negf %281 : vector<2x128xf32>
    %283 = math.exp %282 : vector<2x128xf32>
    %cst_41 = arith.constant 1.000000e+00 : f32
    %284 = vector.broadcast %cst_41 : f32 to vector<2x128xf32>
    %285 = arith.addf %284, %283 : vector<2x128xf32>
    %286 = arith.divf %284, %285 : vector<2x128xf32>
    %287 = vector.extract_strided_slice %286 {offsets = [0, 0], sizes = [2, 32], strides = [1, 1]} : vector<2x128xf32> to vector<2x32xf32>
    %288 = vector.extract_strided_slice %286 {offsets = [0, 32], sizes = [2, 32], strides = [1, 1]} : vector<2x128xf32> to vector<2x32xf32>
    %289 = vector.extract_strided_slice %281 {offsets = [0, 64], sizes = [2, 32], strides = [1, 1]} : vector<2x128xf32> to vector<2x32xf32>
    %290 = vector.extract_strided_slice %281 {offsets = [0, 96], sizes = [2, 32], strides = [1, 1]} : vector<2x128xf32> to vector<2x32xf32>
    %291 = arith.mulf %287, %290 : vector<2x32xf32>
    %292 = arith.addf %289, %291 : vector<2x32xf32>
    %293 = math.tanh %292 : vector<2x32xf32>
    %294 = arith.subf %236, %293 : vector<2x32xf32>
    %295 = arith.mulf %288, %294 : vector<2x32xf32>
    %296 = arith.addf %293, %295 : vector<2x32xf32>
    %297 = tpu.concatenate %296, %255 in 1 : vector<2x32xf32>, vector<2x32xf32> -> vector<2x64xf32>
    %298 = arith.truncf %297 : vector<2x64xf32> to vector<2x64xbf16>
    %cst_42 = arith.constant dense<0.000000e+00> : vector<2x128xf32>
    %299 = tpu.matmul %298, %11, %cst_42 {dimension_numbers = #tpu.dot_dimension_numbers<[1], [0], [0], [1], [0, 0, 1, 1], [], []>} : vector<2x64xbf16>, vector<64x128xbf16>, vector<2x128xf32> -> vector<2x128xf32>
    %300 = arith.addf %299, %28 : vector<2x128xf32>
    %301 = arith.negf %300 : vector<2x128xf32>
    %302 = math.exp %301 : vector<2x128xf32>
    %cst_43 = arith.constant 1.000000e+00 : f32
    %303 = vector.broadcast %cst_43 : f32 to vector<2x128xf32>
    %304 = arith.addf %303, %302 : vector<2x128xf32>
    %305 = arith.divf %303, %304 : vector<2x128xf32>
    %306 = vector.extract_strided_slice %305 {offsets = [0, 0], sizes = [2, 32], strides = [1, 1]} : vector<2x128xf32> to vector<2x32xf32>
    %307 = vector.extract_strided_slice %305 {offsets = [0, 32], sizes = [2, 32], strides = [1, 1]} : vector<2x128xf32> to vector<2x32xf32>
    %308 = vector.extract_strided_slice %300 {offsets = [0, 64], sizes = [2, 32], strides = [1, 1]} : vector<2x128xf32> to vector<2x32xf32>
    %309 = vector.extract_strided_slice %300 {offsets = [0, 96], sizes = [2, 32], strides = [1, 1]} : vector<2x128xf32> to vector<2x32xf32>
    %310 = arith.mulf %306, %309 : vector<2x32xf32>
    %311 = arith.addf %308, %310 : vector<2x32xf32>
    %312 = math.tanh %311 : vector<2x32xf32>
    %313 = arith.subf %255, %312 : vector<2x32xf32>
    %314 = arith.mulf %307, %313 : vector<2x32xf32>
    %315 = arith.addf %312, %314 : vector<2x32xf32>
    %316 = tpu.concatenate %315, %274 in 1 : vector<2x32xf32>, vector<2x32xf32> -> vector<2x64xf32>
    %317 = arith.truncf %316 : vector<2x64xf32> to vector<2x64xbf16>
    %cst_44 = arith.constant dense<0.000000e+00> : vector<2x128xf32>
    %318 = tpu.matmul %317, %13, %cst_44 {dimension_numbers = #tpu.dot_dimension_numbers<[1], [0], [0], [1], [0, 0, 1, 1], [], []>} : vector<2x64xbf16>, vector<64x128xbf16>, vector<2x128xf32> -> vector<2x128xf32>
    %319 = arith.addf %318, %33 : vector<2x128xf32>
    %320 = arith.negf %319 : vector<2x128xf32>
    %321 = math.exp %320 : vector<2x128xf32>
    %cst_45 = arith.constant 1.000000e+00 : f32
    %322 = vector.broadcast %cst_45 : f32 to vector<2x128xf32>
    %323 = arith.addf %322, %321 : vector<2x128xf32>
    %324 = arith.divf %322, %323 : vector<2x128xf32>
    %325 = vector.extract_strided_slice %324 {offsets = [0, 0], sizes = [2, 32], strides = [1, 1]} : vector<2x128xf32> to vector<2x32xf32>
    %326 = vector.extract_strided_slice %324 {offsets = [0, 32], sizes = [2, 32], strides = [1, 1]} : vector<2x128xf32> to vector<2x32xf32>
    %327 = vector.extract_strided_slice %319 {offsets = [0, 64], sizes = [2, 32], strides = [1, 1]} : vector<2x128xf32> to vector<2x32xf32>
    %328 = vector.extract_strided_slice %319 {offsets = [0, 96], sizes = [2, 32], strides = [1, 1]} : vector<2x128xf32> to vector<2x32xf32>
    %329 = arith.mulf %325, %328 : vector<2x32xf32>
    %330 = arith.addf %327, %329 : vector<2x32xf32>
    %331 = math.tanh %330 : vector<2x32xf32>
    %332 = arith.subf %274, %331 : vector<2x32xf32>
    %333 = arith.mulf %326, %332 : vector<2x32xf32>
    %334 = arith.addf %331, %333 : vector<2x32xf32>
    %335 = arith.truncf %334 : vector<2x32xf32> to vector<2x32xbf16>
    %cst_46 = arith.constant dense<0.000000e+00> : vector<2x16xf32>
    %336 = tpu.matmul %335, %2, %cst_46 {dimension_numbers = #tpu.dot_dimension_numbers<[1], [0], [0], [1], [0, 0, 1, 1], [], []>} : vector<2x32xbf16>, vector<32x16xbf16>, vector<2x16xf32> -> vector<2x16xf32>
    %337 = arith.addf %336, %5 : vector<2x16xf32>
    %338 = tpu.concatenate %334, %296 in 1 : vector<2x32xf32>, vector<2x32xf32> -> vector<2x64xf32>
    %339 = arith.truncf %338 : vector<2x64xf32> to vector<2x64xbf16>
    %cst_47 = arith.constant dense<0.000000e+00> : vector<2x128xf32>
    %340 = tpu.matmul %339, %9, %cst_47 {dimension_numbers = #tpu.dot_dimension_numbers<[1], [0], [0], [1], [0, 0, 1, 1], [], []>} : vector<2x64xbf16>, vector<64x128xbf16>, vector<2x128xf32> -> vector<2x128xf32>
    %341 = arith.addf %340, %23 : vector<2x128xf32>
    %342 = arith.negf %341 : vector<2x128xf32>
    %343 = math.exp %342 : vector<2x128xf32>
    %cst_48 = arith.constant 1.000000e+00 : f32
    %344 = vector.broadcast %cst_48 : f32 to vector<2x128xf32>
    %345 = arith.addf %344, %343 : vector<2x128xf32>
    %346 = arith.divf %344, %345 : vector<2x128xf32>
    %347 = vector.extract_strided_slice %346 {offsets = [0, 0], sizes = [2, 32], strides = [1, 1]} : vector<2x128xf32> to vector<2x32xf32>
    %348 = vector.extract_strided_slice %346 {offsets = [0, 32], sizes = [2, 32], strides = [1, 1]} : vector<2x128xf32> to vector<2x32xf32>
    %349 = vector.extract_strided_slice %341 {offsets = [0, 64], sizes = [2, 32], strides = [1, 1]} : vector<2x128xf32> to vector<2x32xf32>
    %350 = vector.extract_strided_slice %341 {offsets = [0, 96], sizes = [2, 32], strides = [1, 1]} : vector<2x128xf32> to vector<2x32xf32>
    %351 = arith.mulf %347, %350 : vector<2x32xf32>
    %352 = arith.addf %349, %351 : vector<2x32xf32>
    %353 = math.tanh %352 : vector<2x32xf32>
    %354 = arith.subf %296, %353 : vector<2x32xf32>
    %355 = arith.mulf %348, %354 : vector<2x32xf32>
    %356 = arith.addf %353, %355 : vector<2x32xf32>
    %357 = tpu.concatenate %356, %315 in 1 : vector<2x32xf32>, vector<2x32xf32> -> vector<2x64xf32>
    %358 = arith.truncf %357 : vector<2x64xf32> to vector<2x64xbf16>
    %cst_49 = arith.constant dense<0.000000e+00> : vector<2x128xf32>
    %359 = tpu.matmul %358, %11, %cst_49 {dimension_numbers = #tpu.dot_dimension_numbers<[1], [0], [0], [1], [0, 0, 1, 1], [], []>} : vector<2x64xbf16>, vector<64x128xbf16>, vector<2x128xf32> -> vector<2x128xf32>
    %360 = arith.addf %359, %28 : vector<2x128xf32>
    %361 = arith.negf %360 : vector<2x128xf32>
    %362 = math.exp %361 : vector<2x128xf32>
    %cst_50 = arith.constant 1.000000e+00 : f32
    %363 = vector.broadcast %cst_50 : f32 to vector<2x128xf32>
    %364 = arith.addf %363, %362 : vector<2x128xf32>
    %365 = arith.divf %363, %364 : vector<2x128xf32>
    %366 = vector.extract_strided_slice %365 {offsets = [0, 0], sizes = [2, 32], strides = [1, 1]} : vector<2x128xf32> to vector<2x32xf32>
    %367 = vector.extract_strided_slice %365 {offsets = [0, 32], sizes = [2, 32], strides = [1, 1]} : vector<2x128xf32> to vector<2x32xf32>
    %368 = vector.extract_strided_slice %360 {offsets = [0, 64], sizes = [2, 32], strides = [1, 1]} : vector<2x128xf32> to vector<2x32xf32>
    %369 = vector.extract_strided_slice %360 {offsets = [0, 96], sizes = [2, 32], strides = [1, 1]} : vector<2x128xf32> to vector<2x32xf32>
    %370 = arith.mulf %366, %369 : vector<2x32xf32>
    %371 = arith.addf %368, %370 : vector<2x32xf32>
    %372 = math.tanh %371 : vector<2x32xf32>
    %373 = arith.subf %315, %372 : vector<2x32xf32>
    %374 = arith.mulf %367, %373 : vector<2x32xf32>
    %375 = arith.addf %372, %374 : vector<2x32xf32>
    %376 = tpu.concatenate %375, %334 in 1 : vector<2x32xf32>, vector<2x32xf32> -> vector<2x64xf32>
    %377 = arith.truncf %376 : vector<2x64xf32> to vector<2x64xbf16>
    %cst_51 = arith.constant dense<0.000000e+00> : vector<2x128xf32>
    %378 = tpu.matmul %377, %13, %cst_51 {dimension_numbers = #tpu.dot_dimension_numbers<[1], [0], [0], [1], [0, 0, 1, 1], [], []>} : vector<2x64xbf16>, vector<64x128xbf16>, vector<2x128xf32> -> vector<2x128xf32>
    %379 = arith.addf %378, %33 : vector<2x128xf32>
    %380 = arith.negf %379 : vector<2x128xf32>
    %381 = math.exp %380 : vector<2x128xf32>
    %cst_52 = arith.constant 1.000000e+00 : f32
    %382 = vector.broadcast %cst_52 : f32 to vector<2x128xf32>
    %383 = arith.addf %382, %381 : vector<2x128xf32>
    %384 = arith.divf %382, %383 : vector<2x128xf32>
    %385 = vector.extract_strided_slice %384 {offsets = [0, 0], sizes = [2, 32], strides = [1, 1]} : vector<2x128xf32> to vector<2x32xf32>
    %386 = vector.extract_strided_slice %384 {offsets = [0, 32], sizes = [2, 32], strides = [1, 1]} : vector<2x128xf32> to vector<2x32xf32>
    %387 = vector.extract_strided_slice %379 {offsets = [0, 64], sizes = [2, 32], strides = [1, 1]} : vector<2x128xf32> to vector<2x32xf32>
    %388 = vector.extract_strided_slice %379 {offsets = [0, 96], sizes = [2, 32], strides = [1, 1]} : vector<2x128xf32> to vector<2x32xf32>
    %389 = arith.mulf %385, %388 : vector<2x32xf32>
    %390 = arith.addf %387, %389 : vector<2x32xf32>
    %391 = math.tanh %390 : vector<2x32xf32>
    %392 = arith.subf %334, %391 : vector<2x32xf32>
    %393 = arith.mulf %386, %392 : vector<2x32xf32>
    %394 = arith.addf %391, %393 : vector<2x32xf32>
    %395 = arith.truncf %394 : vector<2x32xf32> to vector<2x32xbf16>
    %cst_53 = arith.constant dense<0.000000e+00> : vector<2x16xf32>
    %396 = tpu.matmul %395, %2, %cst_53 {dimension_numbers = #tpu.dot_dimension_numbers<[1], [0], [0], [1], [0, 0, 1, 1], [], []>} : vector<2x32xbf16>, vector<32x16xbf16>, vector<2x16xf32> -> vector<2x16xf32>
    %397 = arith.addf %396, %5 : vector<2x16xf32>
    %398 = tpu.concatenate %394, %356 in 1 : vector<2x32xf32>, vector<2x32xf32> -> vector<2x64xf32>
    %399 = arith.truncf %398 : vector<2x64xf32> to vector<2x64xbf16>
    %cst_54 = arith.constant dense<0.000000e+00> : vector<2x128xf32>
    %400 = tpu.matmul %399, %9, %cst_54 {dimension_numbers = #tpu.dot_dimension_numbers<[1], [0], [0], [1], [0, 0, 1, 1], [], []>} : vector<2x64xbf16>, vector<64x128xbf16>, vector<2x128xf32> -> vector<2x128xf32>
    %401 = arith.addf %400, %23 : vector<2x128xf32>
    %402 = arith.negf %401 : vector<2x128xf32>
    %403 = math.exp %402 : vector<2x128xf32>
    %cst_55 = arith.constant 1.000000e+00 : f32
    %404 = vector.broadcast %cst_55 : f32 to vector<2x128xf32>
    %405 = arith.addf %404, %403 : vector<2x128xf32>
    %406 = arith.divf %404, %405 : vector<2x128xf32>
    %407 = vector.extract_strided_slice %406 {offsets = [0, 0], sizes = [2, 32], strides = [1, 1]} : vector<2x128xf32> to vector<2x32xf32>
    %408 = vector.extract_strided_slice %406 {offsets = [0, 32], sizes = [2, 32], strides = [1, 1]} : vector<2x128xf32> to vector<2x32xf32>
    %409 = vector.extract_strided_slice %401 {offsets = [0, 64], sizes = [2, 32], strides = [1, 1]} : vector<2x128xf32> to vector<2x32xf32>
    %410 = vector.extract_strided_slice %401 {offsets = [0, 96], sizes = [2, 32], strides = [1, 1]} : vector<2x128xf32> to vector<2x32xf32>
    %411 = arith.mulf %407, %410 : vector<2x32xf32>
    %412 = arith.addf %409, %411 : vector<2x32xf32>
    %413 = math.tanh %412 : vector<2x32xf32>
    %414 = arith.subf %356, %413 : vector<2x32xf32>
    %415 = arith.mulf %408, %414 : vector<2x32xf32>
    %416 = arith.addf %413, %415 : vector<2x32xf32>
    %417 = tpu.concatenate %416, %375 in 1 : vector<2x32xf32>, vector<2x32xf32> -> vector<2x64xf32>
    %418 = arith.truncf %417 : vector<2x64xf32> to vector<2x64xbf16>
    %cst_56 = arith.constant dense<0.000000e+00> : vector<2x128xf32>
    %419 = tpu.matmul %418, %11, %cst_56 {dimension_numbers = #tpu.dot_dimension_numbers<[1], [0], [0], [1], [0, 0, 1, 1], [], []>} : vector<2x64xbf16>, vector<64x128xbf16>, vector<2x128xf32> -> vector<2x128xf32>
    %420 = arith.addf %419, %28 : vector<2x128xf32>
    %421 = arith.negf %420 : vector<2x128xf32>
    %422 = math.exp %421 : vector<2x128xf32>
    %cst_57 = arith.constant 1.000000e+00 : f32
    %423 = vector.broadcast %cst_57 : f32 to vector<2x128xf32>
    %424 = arith.addf %423, %422 : vector<2x128xf32>
    %425 = arith.divf %423, %424 : vector<2x128xf32>
    %426 = vector.extract_strided_slice %425 {offsets = [0, 0], sizes = [2, 32], strides = [1, 1]} : vector<2x128xf32> to vector<2x32xf32>
    %427 = vector.extract_strided_slice %425 {offsets = [0, 32], sizes = [2, 32], strides = [1, 1]} : vector<2x128xf32> to vector<2x32xf32>
    %428 = vector.extract_strided_slice %420 {offsets = [0, 64], sizes = [2, 32], strides = [1, 1]} : vector<2x128xf32> to vector<2x32xf32>
    %429 = vector.extract_strided_slice %420 {offsets = [0, 96], sizes = [2, 32], strides = [1, 1]} : vector<2x128xf32> to vector<2x32xf32>
    %430 = arith.mulf %426, %429 : vector<2x32xf32>
    %431 = arith.addf %428, %430 : vector<2x32xf32>
    %432 = math.tanh %431 : vector<2x32xf32>
    %433 = arith.subf %375, %432 : vector<2x32xf32>
    %434 = arith.mulf %427, %433 : vector<2x32xf32>
    %435 = arith.addf %432, %434 : vector<2x32xf32>
    %436 = tpu.concatenate %435, %394 in 1 : vector<2x32xf32>, vector<2x32xf32> -> vector<2x64xf32>
    %437 = arith.truncf %436 : vector<2x64xf32> to vector<2x64xbf16>
    %cst_58 = arith.constant dense<0.000000e+00> : vector<2x128xf32>
    %438 = tpu.matmul %437, %13, %cst_58 {dimension_numbers = #tpu.dot_dimension_numbers<[1], [0], [0], [1], [0, 0, 1, 1], [], []>} : vector<2x64xbf16>, vector<64x128xbf16>, vector<2x128xf32> -> vector<2x128xf32>
    %439 = arith.addf %438, %33 : vector<2x128xf32>
    %440 = arith.negf %439 : vector<2x128xf32>
    %441 = math.exp %440 : vector<2x128xf32>
    %cst_59 = arith.constant 1.000000e+00 : f32
    %442 = vector.broadcast %cst_59 : f32 to vector<2x128xf32>
    %443 = arith.addf %442, %441 : vector<2x128xf32>
    %444 = arith.divf %442, %443 : vector<2x128xf32>
    %445 = vector.extract_strided_slice %444 {offsets = [0, 0], sizes = [2, 32], strides = [1, 1]} : vector<2x128xf32> to vector<2x32xf32>
    %446 = vector.extract_strided_slice %444 {offsets = [0, 32], sizes = [2, 32], strides = [1, 1]} : vector<2x128xf32> to vector<2x32xf32>
    %447 = vector.extract_strided_slice %439 {offsets = [0, 64], sizes = [2, 32], strides = [1, 1]} : vector<2x128xf32> to vector<2x32xf32>
    %448 = vector.extract_strided_slice %439 {offsets = [0, 96], sizes = [2, 32], strides = [1, 1]} : vector<2x128xf32> to vector<2x32xf32>
    %449 = arith.mulf %445, %448 : vector<2x32xf32>
    %450 = arith.addf %447, %449 : vector<2x32xf32>
    %451 = math.tanh %450 : vector<2x32xf32>
    %452 = arith.subf %394, %451 : vector<2x32xf32>
    %453 = arith.mulf %446, %452 : vector<2x32xf32>
    %454 = arith.addf %451, %453 : vector<2x32xf32>
    %455 = arith.truncf %454 : vector<2x32xf32> to vector<2x32xbf16>
    %cst_60 = arith.constant dense<0.000000e+00> : vector<2x16xf32>
    %456 = tpu.matmul %455, %2, %cst_60 {dimension_numbers = #tpu.dot_dimension_numbers<[1], [0], [0], [1], [0, 0, 1, 1], [], []>} : vector<2x32xbf16>, vector<32x16xbf16>, vector<2x16xf32> -> vector<2x16xf32>
    %457 = arith.addf %456, %5 : vector<2x16xf32>
    %458 = tpu.concatenate %454, %416 in 1 : vector<2x32xf32>, vector<2x32xf32> -> vector<2x64xf32>
    %459 = arith.truncf %458 : vector<2x64xf32> to vector<2x64xbf16>
    %cst_61 = arith.constant dense<0.000000e+00> : vector<2x128xf32>
    %460 = tpu.matmul %459, %9, %cst_61 {dimension_numbers = #tpu.dot_dimension_numbers<[1], [0], [0], [1], [0, 0, 1, 1], [], []>} : vector<2x64xbf16>, vector<64x128xbf16>, vector<2x128xf32> -> vector<2x128xf32>
    %461 = arith.addf %460, %23 : vector<2x128xf32>
    %462 = arith.negf %461 : vector<2x128xf32>
    %463 = math.exp %462 : vector<2x128xf32>
    %cst_62 = arith.constant 1.000000e+00 : f32
    %464 = vector.broadcast %cst_62 : f32 to vector<2x128xf32>
    %465 = arith.addf %464, %463 : vector<2x128xf32>
    %466 = arith.divf %464, %465 : vector<2x128xf32>
    %467 = vector.extract_strided_slice %466 {offsets = [0, 0], sizes = [2, 32], strides = [1, 1]} : vector<2x128xf32> to vector<2x32xf32>
    %468 = vector.extract_strided_slice %466 {offsets = [0, 32], sizes = [2, 32], strides = [1, 1]} : vector<2x128xf32> to vector<2x32xf32>
    %469 = vector.extract_strided_slice %461 {offsets = [0, 64], sizes = [2, 32], strides = [1, 1]} : vector<2x128xf32> to vector<2x32xf32>
    %470 = vector.extract_strided_slice %461 {offsets = [0, 96], sizes = [2, 32], strides = [1, 1]} : vector<2x128xf32> to vector<2x32xf32>
    %471 = arith.mulf %467, %470 : vector<2x32xf32>
    %472 = arith.addf %469, %471 : vector<2x32xf32>
    %473 = math.tanh %472 : vector<2x32xf32>
    %474 = arith.subf %416, %473 : vector<2x32xf32>
    %475 = arith.mulf %468, %474 : vector<2x32xf32>
    %476 = arith.addf %473, %475 : vector<2x32xf32>
    %477 = tpu.concatenate %476, %435 in 1 : vector<2x32xf32>, vector<2x32xf32> -> vector<2x64xf32>
    %478 = arith.truncf %477 : vector<2x64xf32> to vector<2x64xbf16>
    %cst_63 = arith.constant dense<0.000000e+00> : vector<2x128xf32>
    %479 = tpu.matmul %478, %11, %cst_63 {dimension_numbers = #tpu.dot_dimension_numbers<[1], [0], [0], [1], [0, 0, 1, 1], [], []>} : vector<2x64xbf16>, vector<64x128xbf16>, vector<2x128xf32> -> vector<2x128xf32>
    %480 = arith.addf %479, %28 : vector<2x128xf32>
    %481 = arith.negf %480 : vector<2x128xf32>
    %482 = math.exp %481 : vector<2x128xf32>
    %cst_64 = arith.constant 1.000000e+00 : f32
    %483 = vector.broadcast %cst_64 : f32 to vector<2x128xf32>
    %484 = arith.addf %483, %482 : vector<2x128xf32>
    %485 = arith.divf %483, %484 : vector<2x128xf32>
    %486 = vector.extract_strided_slice %485 {offsets = [0, 0], sizes = [2, 32], strides = [1, 1]} : vector<2x128xf32> to vector<2x32xf32>
    %487 = vector.extract_strided_slice %485 {offsets = [0, 32], sizes = [2, 32], strides = [1, 1]} : vector<2x128xf32> to vector<2x32xf32>
    %488 = vector.extract_strided_slice %480 {offsets = [0, 64], sizes = [2, 32], strides = [1, 1]} : vector<2x128xf32> to vector<2x32xf32>
    %489 = vector.extract_strided_slice %480 {offsets = [0, 96], sizes = [2, 32], strides = [1, 1]} : vector<2x128xf32> to vector<2x32xf32>
    %490 = arith.mulf %486, %489 : vector<2x32xf32>
    %491 = arith.addf %488, %490 : vector<2x32xf32>
    %492 = math.tanh %491 : vector<2x32xf32>
    %493 = arith.subf %435, %492 : vector<2x32xf32>
    %494 = arith.mulf %487, %493 : vector<2x32xf32>
    %495 = arith.addf %492, %494 : vector<2x32xf32>
    %496 = tpu.concatenate %495, %454 in 1 : vector<2x32xf32>, vector<2x32xf32> -> vector<2x64xf32>
    %497 = arith.truncf %496 : vector<2x64xf32> to vector<2x64xbf16>
    %cst_65 = arith.constant dense<0.000000e+00> : vector<2x128xf32>
    %498 = tpu.matmul %497, %13, %cst_65 {dimension_numbers = #tpu.dot_dimension_numbers<[1], [0], [0], [1], [0, 0, 1, 1], [], []>} : vector<2x64xbf16>, vector<64x128xbf16>, vector<2x128xf32> -> vector<2x128xf32>
    %499 = arith.addf %498, %33 : vector<2x128xf32>
    %500 = arith.negf %499 : vector<2x128xf32>
    %501 = math.exp %500 : vector<2x128xf32>
    %cst_66 = arith.constant 1.000000e+00 : f32
    %502 = vector.broadcast %cst_66 : f32 to vector<2x128xf32>
    %503 = arith.addf %502, %501 : vector<2x128xf32>
    %504 = arith.divf %502, %503 : vector<2x128xf32>
    %505 = vector.extract_strided_slice %504 {offsets = [0, 0], sizes = [2, 32], strides = [1, 1]} : vector<2x128xf32> to vector<2x32xf32>
    %506 = vector.extract_strided_slice %504 {offsets = [0, 32], sizes = [2, 32], strides = [1, 1]} : vector<2x128xf32> to vector<2x32xf32>
    %507 = vector.extract_strided_slice %499 {offsets = [0, 64], sizes = [2, 32], strides = [1, 1]} : vector<2x128xf32> to vector<2x32xf32>
    %508 = vector.extract_strided_slice %499 {offsets = [0, 96], sizes = [2, 32], strides = [1, 1]} : vector<2x128xf32> to vector<2x32xf32>
    %509 = arith.mulf %505, %508 : vector<2x32xf32>
    %510 = arith.addf %507, %509 : vector<2x32xf32>
    %511 = math.tanh %510 : vector<2x32xf32>
    %512 = arith.subf %454, %511 : vector<2x32xf32>
    %513 = arith.mulf %506, %512 : vector<2x32xf32>
    %514 = arith.addf %511, %513 : vector<2x32xf32>
    %515 = arith.truncf %514 : vector<2x32xf32> to vector<2x32xbf16>
    %cst_67 = arith.constant dense<0.000000e+00> : vector<2x16xf32>
    %516 = tpu.matmul %515, %2, %cst_67 {dimension_numbers = #tpu.dot_dimension_numbers<[1], [0], [0], [1], [0, 0, 1, 1], [], []>} : vector<2x32xbf16>, vector<32x16xbf16>, vector<2x16xf32> -> vector<2x16xf32>
    %517 = arith.addf %516, %5 : vector<2x16xf32>
    %518 = tpu.concatenate %97, %157, %217, %277, %337, %397, %457, %517 in 1 : vector<2x16xf32>, vector<2x16xf32>, vector<2x16xf32>, vector<2x16xf32>, vector<2x16xf32>, vector<2x16xf32>, vector<2x16xf32>, vector<2x16xf32> -> vector<2x128xf32>
    %c0_68 = arith.constant 0 : index
    %c0_69 = arith.constant 0 : index
    %519 = vector.load %arg5[%c0_68, %c0_69] : memref<2x128xf32, #tpu.memory_space<vmem>>, vector<2x128xf32>
    tpu.vector_store %arg5[%c0_68, %c0_69], %518 {strides = array<i32>} : memref<2x128xf32, #tpu.memory_space<vmem>>, vector<2x128xf32>,
    return
  }
}

</mosaic_0001>

<llo_original>
// kernel: pde_rnn_forward.1
$region0: #{pde_rnn_forward.1}
  #allocation0 [shape = 'u32[]', space=smem, size = 0x4, offset = 0x4, fixed_abs, tag = 'smem constant byte address 0x4 - core index']
  #allocation1 [shape = 'u32[144,128]{1,0:T(1,128)}', space=vmem, size = 0x12000, scoped, tag = 'internal scratch']
  %s0 = inlined_call_operand.vmem [shape: f32[2,32], index: 0, kind: input, shape index: {}]
  %s1 = inlined_call_operand.hbm [shape: bf16[4,64,128], index: 1, kind: input, shape index: {}]
  %s2 = inlined_call_operand.vmem [shape: f32[4,128], index: 2, kind: input, shape index: {}]
  %s3 = inlined_call_operand.vmem [shape: bf16[32,16], index: 3, kind: input, shape index: {}]
  %s4 = inlined_call_operand.vmem [shape: f32[1,16], index: 4, kind: input, shape index: {}]
  %s5 = inlined_call_operand.vmem [shape: f32[2,128], index: 5, kind: output, shape index: {}]
  %s6 = sld [smem:[#allocation0]]
  $region34: #{pde_rnn_forward.1} parent=0
    _
  %s8 = ssub.s32 1, %s6
  %s9 = scalar_select 0, %s8, %s6
  $region1: #{pde_rnn_forward.1} parent=0
    #allocation2 [shape = 'u8[65536]{0}', space=vmem, size = 0x10000, scoped, tag = 'input window, operand 1, single buffered']
    #allocation3 [shape = 's32[1]{0}', space=sflag, size = 0x4, scoped, tag = 'scoped memory for pde_rnn_forward.1']
    %10 = vsyncpa [#allocation3], 0
    // Predicated region
    $region2: #{pde_rnn_forward.1} parent=1 // pred_check
      _
    $region3: #{pde_rnn_forward.1} parent=1 // pred_check_branch
      %12 = sbr.rel (0) target = $region5
    $region4: #{pde_rnn_forward.1} parent=1 // pred_region
      _
    $region5: #{pde_rnn_forward.1} parent=1 // pred_fallthru
      _
    // Predicated region
    $region6: #{pde_rnn_forward.1} parent=1 // pred_check
      _
    $region7: #{pde_rnn_forward.1} parent=1 // pred_check_branch
      %14 = sbr.rel (0) target = $region9
    $region8: #{pde_rnn_forward.1} parent=1 // pred_region
      %s16 = ssub.s32 2048, 2048
      %17 = vsyncadd [#allocation3], %s16
      %s18 = sshll.u32 [#allocation2], 4
      %s19 = int_to_ptr.vmem [resolvable:$true] %s18
      %24 = dma.hbm_to_vmem [thread:$0]  %s1, 2048, %s19, [#allocation3], 64, 64, 4
    $region9: #{pde_rnn_forward.1} parent=1 // pred_fallthru
      _
    // Predicated region
    $region10: #{pde_rnn_forward.1} parent=1 // pred_check
      _
    $region11: #{pde_rnn_forward.1} parent=1 // pred_check_branch
      %26 = sbr.rel (0) target = $region13
    $region12: #{pde_rnn_forward.1} parent=1 // pred_region
      _
    $region13: #{pde_rnn_forward.1} parent=1 // pred_fallthru
      _
    // Predicated region
    $region14: #{pde_rnn_forward.1} parent=1 // pred_check
      _
    $region15: #{pde_rnn_forward.1} parent=1 // pred_check_branch
      %28 = sbr.rel (0) target = $region17
    $region16: #{pde_rnn_forward.1} parent=1 // pred_region
      _
    $region17: #{pde_rnn_forward.1} parent=1 // pred_fallthru
      _
    // Predicated region
    $region18: #{pde_rnn_forward.1} parent=1 // pred_check
      _
    $region19: #{pde_rnn_forward.1} parent=1 // pred_check_branch
      %30 = sbr.rel (0) target = $region21
    $region20: #{pde_rnn_forward.1} parent=1 // pred_region
      _
    $region21: #{pde_rnn_forward.1} parent=1 // pred_fallthru
      _
    // Predicated region
    $region22: #{pde_rnn_forward.1} parent=1 // pred_check
      _
    $region23: #{pde_rnn_forward.1} parent=1 // pred_check_branch
      %32 = sbr.rel (0) target = $region25
    $region24: #{pde_rnn_forward.1} parent=1 // pred_region
      %33 = dma.done [#allocation3], 2048
    $region25: #{pde_rnn_forward.1} parent=1 // pred_fallthru
      _
    %v35 = vld [vmem:[#allocation2] sm:$0xf]
    %v36 = vld [vmem:[#allocation2 + $0x4] sm:$0xf]
    %v37 = vld [vmem:[#allocation2 + $0x8] sm:$0xf]
    %v38 = vld [vmem:[#allocation2 + $0xc] sm:$0xf]
    %v39 = vld [vmem:[#allocation2 + $0x10] sm:$0xf]
    %v40 = vld [vmem:[#allocation2 + $0x14] sm:$0xf]
    %v41 = vld [vmem:[#allocation2 + $0x18] sm:$0xf]
    %v42 = vld [vmem:[#allocation2 + $0x1c] sm:$0xf]
    %v43 = vld [vmem:[#allocation2 + $0x20] sm:$0xf]
    %v44 = vld [vmem:[#allocation2 + $0x24] sm:$0xf]
    %v45 = vld [vmem:[#allocation2 + $0x28] sm:$0xf]
    %v46 = vld [vmem:[#allocation2 + $0x2c] sm:$0xf]
    %v47 = vld [vmem:[#allocation2 + $0x30] sm:$0xf]
    %v48 = vld [vmem:[#allocation2 + $0x34] sm:$0xf]
    %v49 = vld [vmem:[#allocation2 + $0x38] sm:$0xf]
    %v50 = vld [vmem:[#allocation2 + $0x3c] sm:$0xf]
    %v51 = vld [vmem:[#allocation2 + $0x40] sm:$0xf]
    %v52 = vld [vmem:[#allocation2 + $0x44] sm:$0xf]
    %v53 = vld [vmem:[#allocation2 + $0x48] sm:$0xf]
    %v54 = vld [vmem:[#allocation2 + $0x4c] sm:$0xf]
    %v55 = vld [vmem:[#allocation2 + $0x50] sm:$0xf]
    %v56 = vld [vmem:[#allocation2 + $0x54] sm:$0xf]
    %v57 = vld [vmem:[#allocation2 + $0x58] sm:$0xf]
    %v58 = vld [vmem:[#allocation2 + $0x5c] sm:$0xf]
    %v59 = vld [vmem:[#allocation2 + $0x60] sm:$0xf]
    %v60 = vld [vmem:[#allocation2 + $0x64] sm:$0xf]
    %v61 = vld [vmem:[#allocation2 + $0x68] sm:$0xf]
    %v62 = vld [vmem:[#allocation2 + $0x6c] sm:$0xf]
    %v63 = vld [vmem:[#allocation2 + $0x70] sm:$0xf]
    %v64 = vld [vmem:[#allocation2 + $0x74] sm:$0xf]
    %v65 = vld [vmem:[#allocation2 + $0x78] sm:$0xf]
    %v66 = vld [vmem:[#allocation2 + $0x7c] sm:$0xf]
    %v67 = vld [vmem:[%s2] sm:$0xf]
    %v68 = vld [vmem:[%s3] sm:$0xf]
    %v69 = vld [vmem:[%s3 + $0x4] sm:$0xf]
    %v70 = vld [vmem:[%s3 + $0x8] sm:$0xf]
    %v71 = vld [vmem:[%s3 + $0xc] sm:$0xf]
    %v72 = vld [vmem:[%s4] sm:$0x1]
    %v74 = vlaneseq
    %v75 = vshrl.u32 %v74, 7
    %v76 = vsub.s32 0, %v75
    %v77 = vrot.slane %v72, %v76
    %v79 = vlaneseq
    %v80 = vshrl.u32 %v79, 7
    %v81 = vsub.s32 0, %v80
    %v82 = vrot.slane %v67, %v81
    %v83 = vlaneseq
    %v84 = vshrl.u32 %v83, 7
    %v85 = vsub.s32 1, %v84
    %v86 = vrot.slane %v67, %v85
    %v87 = vlaneseq
    %v88 = vshrl.u32 %v87, 7
    %v89 = vsub.s32 2, %v88
    %v90 = vrot.slane %v67, %v89
    %v91 = vlaneseq
    %v92 = vshrl.u32 %v91, 7
    %v93 = vsub.s32 3, %v92
    %v94 = vrot.slane %v67, %v93
    %v95 = vld [vmem:[%s0] sm:$0x3]
    %vm96 = vcmask 261120
    %v97 = vsel %vm96, %v95, 0.0
    %v98 = vpack.c.bf16 %v97, %v97
    %v107 = vunpack.c.l.b16 %v35
    %v108 = vunpack.c.l.b16 %v36
    %v109 = vunpack.c.l.b16 %v37
    %v110 = vunpack.c.l.b16 %v38
    %v111 = vunpack.c.l.b16 %v39
    %v112 = vunpack.c.l.b16 %v40
    %v113 = vunpack.c.l.b16 %v41
    %v114 = vunpack.c.l.b16 %v42
    %v115 = vpack.c.b16 %v108, %v107
    %v116 = vpack.c.b16 %v110, %v109
    %v117 = vpack.c.b16 %v112, %v111
    %v118 = vpack.c.b16 %v114, %v113
    %vm123 = vcmask 523264
    %v125 = vsel %vm123, %v98, 0
    %127 = vmatprep.subr.bf16.mxu0 0
    %128 = vmatpush1.bf16.msra.mxu0 %v115
    %129 = vmatprep.subr.bf16.mxu0 0
    %130 = vmatpush1.bf16.msra.mxu0 %v116
    %131 = vmatprep.subr.bf16.mxu0 0
    %132 = vmatpush1.bf16.msra.mxu0 %v117
    %133 = vmatprep.subr.bf16.mxu0 0
    %134 = vmatpush1.bf16.msra.mxu0 %v118
    %135 = vmatprep.subr.bf16.mxu0 0
    %136 = vmatpush1.bf16.msra.mxu0 0
    %137 = vmatprep.subr.bf16.mxu0 0
    %138 = vmatpush1.bf16.msra.mxu0 0
    %139 = vmatprep.subr.bf16.mxu0 0
    %140 = vmatpush1.bf16.msra.mxu0 0
    %141 = vmatprep.subr.bf16.mxu0 0
    %142 = vmatpush1.bf16.msra.mxu0 0
    %143 = vmatprep.subr.bf16.mxu0 0
    %144 = vmatpush1.bf16.msra.mxu0 0
    %145 = vmatprep.subr.bf16.mxu0 0
    %146 = vmatpush1.bf16.msra.mxu0 0
    %147 = vmatprep.subr.bf16.mxu0 0
    %148 = vmatpush1.bf16.msra.mxu0 0
    %149 = vmatprep.subr.bf16.mxu0 0
    %150 = vmatpush1.bf16.msra.mxu0 0
    %151 = vmatprep.subr.bf16.mxu0 0
    %152 = vmatpush1.bf16.msra.mxu0 0
    %153 = vmatprep.subr.bf16.mxu0 0
    %154 = vmatpush1.bf16.msra.mxu0 0
    %155 = vmatprep.subr.bf16.mxu0 0
    %156 = vmatpush1.bf16.msra.mxu0 0
    %157 = vmatprep.subr.bf16.mxu0 0
    %158 = vmatpush1.bf16.msra.mxu0 0
    %159 = vmatprep.mubr.bf16.mxu0 0
    %160 = vmatmul.mubr.bf16.gmra.mrb[0].mxu0 %v125
    %v161 = vpop.f32.mrb[0].mxu0
    %v162 = vadd.f32 %v82, %v161
    %v163 = vpop.f32.mrb[0].mxu0
    %v164 = vpop.f32.mrb[0].mxu0
    %v165 = vpop.f32.mrb[0].mxu0
    %166 = vdwg.mxu0
    %v167 = vxor.u32 %v162, 2147483648
    %v168 = vmul.f32 %v167, 1.442695
    %v169 = vpow.pop %v168
    %v170 = vadd.f32 %v169, 1.0
    %v171 = vrcp.pop %v170
    %v172 = vmul.f32 1.0, %v171
    %174 = vrot.lane.b32.xlu0 %v162, 32
    %v175 = vpop.permute.xlu0 %174
    %v177 = vmul.f32 %v172, %v175
    %179 = vrot.lane.b32.xlu0 %v177, 64
    %v180 = vpop.permute.xlu0 %179
    %v182 = vadd.f32 %v162, %v180
    %v183 = vtanh.pop %v182
    %v184 = vsub.f32 0.0, %v183
    %186 = vrot.lane.b32.xlu0 %v184, 96
    %v187 = vpop.permute.xlu0 %186
    %v189 = vmul.f32 %v172, %v187
    %191 = vrot.lane.b32.xlu0 %v189, 32
    %v192 = vpop.permute.xlu0 %191
    %v194 = vadd.f32 %v183, %v192
    %196 = vrot.lane.b32.xlu0 %v194, 64
    %v197 = vpop.permute.xlu0 %196
    %v199 = vsel %vm96, %v197, 0.0
    %v200 = vpack.c.bf16 %v199, %v199
    %v209 = vunpack.c.l.b16 %v51
    %v210 = vunpack.c.l.b16 %v52
    %v211 = vunpack.c.l.b16 %v53
    %v212 = vunpack.c.l.b16 %v54
    %v213 = vunpack.c.l.b16 %v55
    %v214 = vunpack.c.l.b16 %v56
    %v215 = vunpack.c.l.b16 %v57
    %v216 = vunpack.c.l.b16 %v58
    %v217 = vpack.c.b16 %v210, %v209
    %v218 = vpack.c.b16 %v212, %v211
    %v219 = vpack.c.b16 %v214, %v213
    %v220 = vpack.c.b16 %v216, %v215
    %v226 = vsel %vm123, %v200, 0
    %228 = vmatprep.subr.bf16.mxu0 0
    %229 = vmatpush1.bf16.msra.mxu0 %v217
    %230 = vmatprep.subr.bf16.mxu0 0
    %231 = vmatpush1.bf16.msra.mxu0 %v218
    %232 = vmatprep.subr.bf16.mxu0 0
    %233 = vmatpush1.bf16.msra.mxu0 %v219
    %234 = vmatprep.subr.bf16.mxu0 0
    %235 = vmatpush1.bf16.msra.mxu0 %v220
    %236 = vmatprep.subr.bf16.mxu0 0
    %237 = vmatpush1.bf16.msra.mxu0 0
    %238 = vmatprep.subr.bf16.mxu0 0
    %239 = vmatpush1.bf16.msra.mxu0 0
    %240 = vmatprep.subr.bf16.mxu0 0
    %241 = vmatpush1.bf16.msra.mxu0 0
    %242 = vmatprep.subr.bf16.mxu0 0
    %243 = vmatpush1.bf16.msra.mxu0 0
    %244 = vmatprep.subr.bf16.mxu0 0
    %245 = vmatpush1.bf16.msra.mxu0 0
    %246 = vmatprep.subr.bf16.mxu0 0
    %247 = vmatpush1.bf16.msra.mxu0 0
    %248 = vmatprep.subr.bf16.mxu0 0
    %249 = vmatpush1.bf16.msra.mxu0 0
    %250 = vmatprep.subr.bf16.mxu0 0
    %251 = vmatpush1.bf16.msra.mxu0 0
    %252 = vmatprep.subr.bf16.mxu0 0
    %253 = vmatpush1.bf16.msra.mxu0 0
    %254 = vmatprep.subr.bf16.mxu0 0
    %255 = vmatpush1.bf16.msra.mxu0 0
    %256 = vmatprep.subr.bf16.mxu0 0
    %257 = vmatpush1.bf16.msra.mxu0 0
    %258 = vmatprep.subr.bf16.mxu0 0
    %259 = vmatpush1.bf16.msra.mxu0 0
    %260 = vmatprep.mubr.bf16.mxu0 0
    %261 = vmatmul.mubr.bf16.gmra.mrb[0].mxu0 %v226
    %v262 = vpop.f32.mrb[0].mxu0
    %v263 = vadd.f32 %v90, %v262
    %v264 = vpop.f32.mrb[0].mxu0
    %v265 = vpop.f32.mrb[0].mxu0
    %v266 = vpop.f32.mrb[0].mxu0
    %267 = vdwg.mxu0
    %v268 = vxor.u32 %v263, 2147483648
    %v269 = vmul.f32 %v268, 1.442695
    %v270 = vpow.pop %v269
    %v271 = vadd.f32 %v270, 1.0
    %v272 = vrcp.pop %v271
    %v273 = vmul.f32 1.0, %v272
    %275 = vrot.lane.b32.xlu0 %v263, 32
    %v276 = vpop.permute.xlu0 %275
    %v278 = vmul.f32 %v273, %v276
    %280 = vrot.lane.b32.xlu0 %v278, 64
    %v281 = vpop.permute.xlu0 %280
    %v283 = vadd.f32 %v263, %v281
    %v284 = vtanh.pop %v283
    %v285 = vsub.f32 0.0, %v284
    %287 = vrot.lane.b32.xlu0 %v285, 96
    %v288 = vpop.permute.xlu0 %287
    %v290 = vmul.f32 %v273, %v288
    %292 = vrot.lane.b32.xlu0 %v290, 32
    %v293 = vpop.permute.xlu0 %292
    %v295 = vadd.f32 %v284, %v293
    %297 = vrot.lane.b32.xlu0 %v295, 64
    %v298 = vpop.permute.xlu0 %297
    %v300 = vsel %vm96, %v298, 0.0
    %v301 = vpack.c.bf16 %v300, %v300
    %v310 = vunpack.c.l.b16 %v59
    %v311 = vunpack.c.l.b16 %v60
    %v312 = vunpack.c.l.b16 %v61
    %v313 = vunpack.c.l.b16 %v62
    %v314 = vunpack.c.l.b16 %v63
    %v315 = vunpack.c.l.b16 %v64
    %v316 = vunpack.c.l.b16 %v65
    %v317 = vunpack.c.l.b16 %v66
    %v318 = vpack.c.b16 %v311, %v310
    %v319 = vpack.c.b16 %v313, %v312
    %v320 = vpack.c.b16 %v315, %v314
    %v321 = vpack.c.b16 %v317, %v316
    %v327 = vsel %vm123, %v301, 0
    %329 = vmatprep.subr.bf16.mxu0 0
    %330 = vmatpush1.bf16.msra.mxu0 %v318
    %331 = vmatprep.subr.bf16.mxu0 0
    %332 = vmatpush1.bf16.msra.mxu0 %v319
    %333 = vmatprep.subr.bf16.mxu0 0
    %334 = vmatpush1.bf16.msra.mxu0 %v320
    %335 = vmatprep.subr.bf16.mxu0 0
    %336 = vmatpush1.bf16.msra.mxu0 %v321
    %337 = vmatprep.subr.bf16.mxu0 0
    %338 = vmatpush1.bf16.msra.mxu0 0
    %339 = vmatprep.subr.bf16.mxu0 0
    %340 = vmatpush1.bf16.msra.mxu0 0
    %341 = vmatprep.subr.bf16.mxu0 0
    %342 = vmatpush1.bf16.msra.mxu0 0
    %343 = vmatprep.subr.bf16.mxu0 0
    %344 = vmatpush1.bf16.msra.mxu0 0
    %345 = vmatprep.subr.bf16.mxu0 0
    %346 = vmatpush1.bf16.msra.mxu0 0
    %347 = vmatprep.subr.bf16.mxu0 0
    %348 = vmatpush1.bf16.msra.mxu0 0
    %349 = vmatprep.subr.bf16.mxu0 0
    %350 = vmatpush1.bf16.msra.mxu0 0
    %351 = vmatprep.subr.bf16.mxu0 0
    %352 = vmatpush1.bf16.msra.mxu0 0
    %353 = vmatprep.subr.bf16.mxu0 0
    %354 = vmatpush1.bf16.msra.mxu0 0
    %355 = vmatprep.subr.bf16.mxu0 0
    %356 = vmatpush1.bf16.msra.mxu0 0
    %357 = vmatprep.subr.bf16.mxu0 0
    %358 = vmatpush1.bf16.msra.mxu0 0
    %359 = vmatprep.subr.bf16.mxu0 0
    %360 = vmatpush1.bf16.msra.mxu0 0
    %361 = vmatprep.mubr.bf16.mxu0 0
    %362 = vmatmul.mubr.bf16.gmra.mrb[0].mxu0 %v327
    %v363 = vpop.f32.mrb[0].mxu0
    %v364 = vadd.f32 %v94, %v363
    %v365 = vpop.f32.mrb[0].mxu0
    %v366 = vpop.f32.mrb[0].mxu0
    %v367 = vpop.f32.mrb[0].mxu0
    %368 = vdwg.mxu0
    %v369 = vxor.u32 %v364, 2147483648
    %v370 = vmul.f32 %v369, 1.442695
    %v371 = vpow.pop %v370
    %v372 = vadd.f32 %v371, 1.0
    %v373 = vrcp.pop %v372
    %v374 = vmul.f32 1.0, %v373
    %376 = vrot.lane.b32.xlu0 %v364, 32
    %v377 = vpop.permute.xlu0 %376
    %v379 = vmul.f32 %v374, %v377
    %381 = vrot.lane.b32.xlu0 %v379, 64
    %v382 = vpop.permute.xlu0 %381
    %v384 = vadd.f32 %v364, %v382
    %v385 = vtanh.pop %v384
    %v386 = vsub.f32 0.0, %v385
    %388 = vrot.lane.b32.xlu0 %v386, 96
    %v389 = vpop.permute.xlu0 %388
    %v391 = vmul.f32 %v374, %v389
    %393 = vrot.lane.b32.xlu0 %v391, 32
    %v394 = vpop.permute.xlu0 %393
    %v396 = vadd.f32 %v385, %v394
    %v397 = vpack.c.bf16 %v396, %v396
    %399 = vrot.lane.b32.xlu0 %v397, 64
    %v400 = vpop.permute.xlu0 %399
    %v405 = vunpack.c.l.b16 %v68
    %v406 = vunpack.c.l.b16 %v69
    %v407 = vunpack.c.l.b16 %v70
    %v408 = vunpack.c.l.b16 %v71
    %v409 = vpack.c.b16 %v406, %v405
    %v410 = vpack.c.b16 %v408, %v407
    %v414 = vsel %vm96, %v400, 0
    %416 = vmatprep.subr.bf16.mxu0 0
    %417 = vmatpush1.bf16.msra.mxu0 %v409
    %418 = vmatprep.subr.bf16.mxu0 0
    %419 = vmatpush1.bf16.msra.mxu0 %v410
    %420 = vmatprep.subr.bf16.mxu0 0
    %421 = vmatpush1.bf16.msra.mxu0 0
    %422 = vmatprep.subr.bf16.mxu0 0
    %423 = vmatpush1.bf16.msra.mxu0 0
    %424 = vmatprep.subr.bf16.mxu0 0
    %425 = vmatpush1.bf16.msra.mxu0 0
    %426 = vmatprep.subr.bf16.mxu0 0
    %427 = vmatpush1.bf16.msra.mxu0 0
    %428 = vmatprep.subr.bf16.mxu0 0
    %429 = vmatpush1.bf16.msra.mxu0 0
    %430 = vmatprep.subr.bf16.mxu0 0
    %431 = vmatpush1.bf16.msra.mxu0 0
    %432 = vmatprep.subr.bf16.mxu0 0
    %433 = vmatpush1.bf16.msra.mxu0 0
    %434 = vmatprep.subr.bf16.mxu0 0
    %435 = vmatpush1.bf16.msra.mxu0 0
    %436 = vmatprep.subr.bf16.mxu0 0
    %437 = vmatpush1.bf16.msra.mxu0 0
    %438 = vmatprep.subr.bf16.mxu0 0
    %439 = vmatpush1.bf16.msra.mxu0 0
    %440 = vmatprep.subr.bf16.mxu0 0
    %441 = vmatpush1.bf16.msra.mxu0 0
    %442 = vmatprep.subr.bf16.mxu0 0
    %443 = vmatpush1.bf16.msra.mxu0 0
    %444 = vmatprep.subr.bf16.mxu0 0
    %445 = vmatpush1.bf16.msra.mxu0 0
    %446 = vmatprep.subr.bf16.mxu0 0
    %447 = vmatpush1.bf16.msra.mxu0 0
    %448 = vmatprep.mubr.bf16.mxu0 0
    %449 = vmatmul.mubr.bf16.gmra.mrb[0].mxu0 %v414
    %v450 = vpop.f32.mrb[0].mxu0
    %v451 = vadd.f32 %v77, %v450
    %v452 = vpop.f32.mrb[0].mxu0
    %v453 = vpop.f32.mrb[0].mxu0
    %v454 = vpop.f32.mrb[0].mxu0
    %455 = vdwg.mxu0
    %457 = vrot.lane.b32.xlu0 %v396, 64
    %v458 = vpop.permute.xlu0 %457
    %460 = vrot.lane.b32.xlu0 %v194, 96
    %v461 = vpop.permute.xlu0 %460
    %v463 = vsel %vm96, %v458, %v461
    %v464 = vpack.c.bf16 %v463, %v463
    %v473 = vunpack.c.l.b16 %v43
    %v474 = vunpack.c.l.b16 %v44
    %v475 = vunpack.c.l.b16 %v45
    %v476 = vunpack.c.l.b16 %v46
    %v477 = vunpack.c.l.b16 %v47
    %v478 = vunpack.c.l.b16 %v48
    %v479 = vunpack.c.l.b16 %v49
    %v480 = vunpack.c.l.b16 %v50
    %v481 = vpack.c.b16 %v474, %v473
    %v482 = vpack.c.b16 %v476, %v475
    %v483 = vpack.c.b16 %v478, %v477
    %v484 = vpack.c.b16 %v480, %v479
    %v490 = vsel %vm123, %v464, 0
    %492 = vmatprep.subr.bf16.mxu0 0
    %493 = vmatpush1.bf16.msra.mxu0 %v481
    %494 = vmatprep.subr.bf16.mxu0 0
    %495 = vmatpush1.bf16.msra.mxu0 %v482
    %496 = vmatprep.subr.bf16.mxu0 0
    %497 = vmatpush1.bf16.msra.mxu0 %v483
    %498 = vmatprep.subr.bf16.mxu0 0
    %499 = vmatpush1.bf16.msra.mxu0 %v484
    %500 = vmatprep.subr.bf16.mxu0 0
    %501 = vmatpush1.bf16.msra.mxu0 0
    %502 = vmatprep.subr.bf16.mxu0 0
    %503 = vmatpush1.bf16.msra.mxu0 0
    %504 = vmatprep.subr.bf16.mxu0 0
    %505 = vmatpush1.bf16.msra.mxu0 0
    %506 = vmatprep.subr.bf16.mxu0 0
    %507 = vmatpush1.bf16.msra.mxu0 0
    %508 = vmatprep.subr.bf16.mxu0 0
    %509 = vmatpush1.bf16.msra.mxu0 0
    %510 = vmatprep.subr.bf16.mxu0 0
    %511 = vmatpush1.bf16.msra.mxu0 0
    %512 = vmatprep.subr.bf16.mxu0 0
    %513 = vmatpush1.bf16.msra.mxu0 0
    %514 = vmatprep.subr.bf16.mxu0 0
    %515 = vmatpush1.bf16.msra.mxu0 0
    %516 = vmatprep.subr.bf16.mxu0 0
    %517 = vmatpush1.bf16.msra.mxu0 0
    %518 = vmatprep.subr.bf16.mxu0 0
    %519 = vmatpush1.bf16.msra.mxu0 0
    %520 = vmatprep.subr.bf16.mxu0 0
    %521 = vmatpush1.bf16.msra.mxu0 0
    %522 = vmatprep.subr.bf16.mxu0 0
    %523 = vmatpush1.bf16.msra.mxu0 0
    %524 = vmatprep.mubr.bf16.mxu0 0
    %525 = vmatmul.mubr.bf16.gmra.mrb[0].mxu0 %v490
    %v526 = vpop.f32.mrb[0].mxu0
    %v527 = vadd.f32 %v86, %v526
    %v528 = vpop.f32.mrb[0].mxu0
    %v529 = vpop.f32.mrb[0].mxu0
    %v530 = vpop.f32.mrb[0].mxu0
    %531 = vdwg.mxu0
    %v532 = vxor.u32 %v527, 2147483648
    %v533 = vmul.f32 %v532, 1.442695
    %v534 = vpow.pop %v533
    %v535 = vadd.f32 %v534, 1.0
    %v536 = vrcp.pop %v535
    %v537 = vmul.f32 1.0, %v536
    %539 = vrot.lane.b32.xlu0 %v527, 32
    %v540 = vpop.permute.xlu0 %539
    %v542 = vmul.f32 %v537, %v540
    %544 = vrot.lane.b32.xlu0 %v542, 64
    %v545 = vpop.permute.xlu0 %544
    %v547 = vadd.f32 %v527, %v545
    %v548 = vtanh.pop %v547
    %v549 = vsub.f32 %v194, %v548
    %551 = vrot.lane.b32.xlu0 %v549, 96
    %v552 = vpop.permute.xlu0 %551
    %v554 = vmul.f32 %v537, %v552
    %556 = vrot.lane.b32.xlu0 %v554, 32
    %v557 = vpop.permute.xlu0 %556
    %v559 = vadd.f32 %v548, %v557
    %561 = vrot.lane.b32.xlu0 %v559, 64
    %v562 = vpop.permute.xlu0 %561
    %564 = vrot.lane.b32.xlu0 %v295, 96
    %v565 = vpop.permute.xlu0 %564
    %v567 = vsel %vm96, %v562, %v565
    %v568 = vpack.c.bf16 %v567, %v567
    %v570 = vsel %vm123, %v568, 0
    %572 = vmatprep.subr.bf16.mxu0 0
    %573 = vmatpush1.bf16.msra.mxu0 %v217
    %574 = vmatprep.subr.bf16.mxu0 0
    %575 = vmatpush1.bf16.msra.mxu0 %v218
    %576 = vmatprep.subr.bf16.mxu0 0
    %577 = vmatpush1.bf16.msra.mxu0 %v219
    %578 = vmatprep.subr.bf16.mxu0 0
    %579 = vmatpush1.bf16.msra.mxu0 %v220
    %580 = vmatprep.subr.bf16.mxu0 0
    %581 = vmatpush1.bf16.msra.mxu0 0
    %582 = vmatprep.subr.bf16.mxu0 0
    %583 = vmatpush1.bf16.msra.mxu0 0
    %584 = vmatprep.subr.bf16.mxu0 0
    %585 = vmatpush1.bf16.msra.mxu0 0
    %586 = vmatprep.subr.bf16.mxu0 0
    %587 = vmatpush1.bf16.msra.mxu0 0
    %588 = vmatprep.subr.bf16.mxu0 0
    %589 = vmatpush1.bf16.msra.mxu0 0
    %590 = vmatprep.subr.bf16.mxu0 0
    %591 = vmatpush1.bf16.msra.mxu0 0
    %592 = vmatprep.subr.bf16.mxu0 0
    %593 = vmatpush1.bf16.msra.mxu0 0
    %594 = vmatprep.subr.bf16.mxu0 0
    %595 = vmatpush1.bf16.msra.mxu0 0
    %596 = vmatprep.subr.bf16.mxu0 0
    %597 = vmatpush1.bf16.msra.mxu0 0
    %598 = vmatprep.subr.bf16.mxu0 0
    %599 = vmatpush1.bf16.msra.mxu0 0
    %600 = vmatprep.subr.bf16.mxu0 0
    %601 = vmatpush1.bf16.msra.mxu0 0
    %602 = vmatprep.subr.bf16.mxu0 0
    %603 = vmatpush1.bf16.msra.mxu0 0
    %604 = vmatprep.mubr.bf16.mxu0 0
    %605 = vmatmul.mubr.bf16.gmra.mrb[0].mxu0 %v570
    %v606 = vpop.f32.mrb[0].mxu0
    %v607 = vadd.f32 %v90, %v606
    %v608 = vpop.f32.mrb[0].mxu0
    %v609 = vpop.f32.mrb[0].mxu0
    %v610 = vpop.f32.mrb[0].mxu0
    %611 = vdwg.mxu0
    %v612 = vxor.u32 %v607, 2147483648
    %v613 = vmul.f32 %v612, 1.442695
    %v614 = vpow.pop %v613
    %v615 = vadd.f32 %v614, 1.0
    %v616 = vrcp.pop %v615
    %v617 = vmul.f32 1.0, %v616
    %619 = vrot.lane.b32.xlu0 %v607, 32
    %v620 = vpop.permute.xlu0 %619
    %v622 = vmul.f32 %v617, %v620
    %624 = vrot.lane.b32.xlu0 %v622, 64
    %v625 = vpop.permute.xlu0 %624
    %v627 = vadd.f32 %v607, %v625
    %v628 = vtanh.pop %v627
    %v629 = vsub.f32 %v295, %v628
    %631 = vrot.lane.b32.xlu0 %v629, 96
    %v632 = vpop.permute.xlu0 %631
    %v634 = vmul.f32 %v617, %v632
    %636 = vrot.lane.b32.xlu0 %v634, 32
    %v637 = vpop.permute.xlu0 %636
    %v639 = vadd.f32 %v628, %v637
    %641 = vrot.lane.b32.xlu0 %v639, 64
    %v642 = vpop.permute.xlu0 %641
    %644 = vrot.lane.b32.xlu0 %v396, 96
    %v645 = vpop.permute.xlu0 %644
    %v647 = vsel %vm96, %v642, %v645
    %v648 = vpack.c.bf16 %v647, %v647
    %v650 = vsel %vm123, %v648, 0
    %652 = vmatprep.subr.bf16.mxu0 0
    %653 = vmatpush1.bf16.msra.mxu0 %v318
    %654 = vmatprep.subr.bf16.mxu0 0
    %655 = vmatpush1.bf16.msra.mxu0 %v319
    %656 = vmatprep.subr.bf16.mxu0 0
    %657 = vmatpush1.bf16.msra.mxu0 %v320
    %658 = vmatprep.subr.bf16.mxu0 0
    %659 = vmatpush1.bf16.msra.mxu0 %v321
    %660 = vmatprep.subr.bf16.mxu0 0
    %661 = vmatpush1.bf16.msra.mxu0 0
    %662 = vmatprep.subr.bf16.mxu0 0
    %663 = vmatpush1.bf16.msra.mxu0 0
    %664 = vmatprep.subr.bf16.mxu0 0
    %665 = vmatpush1.bf16.msra.mxu0 0
    %666 = vmatprep.subr.bf16.mxu0 0
    %667 = vmatpush1.bf16.msra.mxu0 0
    %668 = vmatprep.subr.bf16.mxu0 0
    %669 = vmatpush1.bf16.msra.mxu0 0
    %670 = vmatprep.subr.bf16.mxu0 0
    %671 = vmatpush1.bf16.msra.mxu0 0
    %672 = vmatprep.subr.bf16.mxu0 0
    %673 = vmatpush1.bf16.msra.mxu0 0
    %674 = vmatprep.subr.bf16.mxu0 0
    %675 = vmatpush1.bf16.msra.mxu0 0
    %676 = vmatprep.subr.bf16.mxu0 0
    %677 = vmatpush1.bf16.msra.mxu0 0
    %678 = vmatprep.subr.bf16.mxu0 0
    %679 = vmatpush1.bf16.msra.mxu0 0
    %680 = vmatprep.subr.bf16.mxu0 0
    %681 = vmatpush1.bf16.msra.mxu0 0
    %682 = vmatprep.subr.bf16.mxu0 0
    %683 = vmatpush1.bf16.msra.mxu0 0
    %684 = vmatprep.mubr.bf16.mxu0 0
    %685 = vmatmul.mubr.bf16.gmra.mrb[0].mxu0 %v650
    %v686 = vpop.f32.mrb[0].mxu0
    %v687 = vadd.f32 %v94, %v686
    %v688 = vpop.f32.mrb[0].mxu0
    %v689 = vpop.f32.mrb[0].mxu0
    %v690 = vpop.f32.mrb[0].mxu0
    %691 = vdwg.mxu0
    %v692 = vxor.u32 %v687, 2147483648
    %v693 = vmul.f32 %v692, 1.442695
    %v694 = vpow.pop %v693
    %v695 = vadd.f32 %v694, 1.0
    %v696 = vrcp.pop %v695
    %v697 = vmul.f32 1.0, %v696
    %699 = vrot.lane.b32.xlu0 %v687, 32
    %v700 = vpop.permute.xlu0 %699
    %v702 = vmul.f32 %v697, %v700
    %704 = vrot.lane.b32.xlu0 %v702, 64
    %v705 = vpop.permute.xlu0 %704
    %v707 = vadd.f32 %v687, %v705
    %v708 = vtanh.pop %v707
    %v709 = vsub.f32 %v396, %v708
    %711 = vrot.lane.b32.xlu0 %v709, 96
    %v712 = vpop.permute.xlu0 %711
    %v714 = vmul.f32 %v697, %v712
    %716 = vrot.lane.b32.xlu0 %v714, 32
    %v717 = vpop.permute.xlu0 %716
    %v719 = vadd.f32 %v708, %v717
    %v720 = vpack.c.bf16 %v719, %v719
    %722 = vrot.lane.b32.xlu0 %v720, 64
    %v723 = vpop.permute.xlu0 %722
    %v725 = vsel %vm96, %v723, 0
    %727 = vmatprep.subr.bf16.mxu0 0
    %728 = vmatpush1.bf16.msra.mxu0 %v409
    %729 = vmatprep.subr.bf16.mxu0 0
    %730 = vmatpush1.bf16.msra.mxu0 %v410
    %731 = vmatprep.subr.bf16.mxu0 0
    %732 = vmatpush1.bf16.msra.mxu0 0
    %733 = vmatprep.subr.bf16.mxu0 0
    %734 = vmatpush1.bf16.msra.mxu0 0
    %735 = vmatprep.subr.bf16.mxu0 0
    %736 = vmatpush1.bf16.msra.mxu0 0
    %737 = vmatprep.subr.bf16.mxu0 0
    %738 = vmatpush1.bf16.msra.mxu0 0
    %739 = vmatprep.subr.bf16.mxu0 0
    %740 = vmatpush1.bf16.msra.mxu0 0
    %741 = vmatprep.subr.bf16.mxu0 0
    %742 = vmatpush1.bf16.msra.mxu0 0
    %743 = vmatprep.subr.bf16.mxu0 0
    %744 = vmatpush1.bf16.msra.mxu0 0
    %745 = vmatprep.subr.bf16.mxu0 0
    %746 = vmatpush1.bf16.msra.mxu0 0
    %747 = vmatprep.subr.bf16.mxu0 0
    %748 = vmatpush1.bf16.msra.mxu0 0
    %749 = vmatprep.subr.bf16.mxu0 0
    %750 = vmatpush1.bf16.msra.mxu0 0
    %751 = vmatprep.subr.bf16.mxu0 0
    %752 = vmatpush1.bf16.msra.mxu0 0
    %753 = vmatprep.subr.bf16.mxu0 0
    %754 = vmatpush1.bf16.msra.mxu0 0
    %755 = vmatprep.subr.bf16.mxu0 0
    %756 = vmatpush1.bf16.msra.mxu0 0
    %757 = vmatprep.subr.bf16.mxu0 0
    %758 = vmatpush1.bf16.msra.mxu0 0
    %759 = vmatprep.mubr.bf16.mxu0 0
    %760 = vmatmul.mubr.bf16.gmra.mrb[0].mxu0 %v725
    %v761 = vpop.f32.mrb[0].mxu0
    %v762 = vadd.f32 %v77, %v761
    %v763 = vpop.f32.mrb[0].mxu0
    %v764 = vpop.f32.mrb[0].mxu0
    %v765 = vpop.f32.mrb[0].mxu0
    %766 = vdwg.mxu0
    %768 = vrot.lane.b32.xlu0 %v719, 64
    %v769 = vpop.permute.xlu0 %768
    %771 = vrot.lane.b32.xlu0 %v559, 96
    %v772 = vpop.permute.xlu0 %771
    %v774 = vsel %vm96, %v769, %v772
    %v775 = vpack.c.bf16 %v774, %v774
    %v777 = vsel %vm123, %v775, 0
    %779 = vmatprep.subr.bf16.mxu0 0
    %780 = vmatpush1.bf16.msra.mxu0 %v481
    %781 = vmatprep.subr.bf16.mxu0 0
    %782 = vmatpush1.bf16.msra.mxu0 %v482
    %783 = vmatprep.subr.bf16.mxu0 0
    %784 = vmatpush1.bf16.msra.mxu0 %v483
    %785 = vmatprep.subr.bf16.mxu0 0
    %786 = vmatpush1.bf16.msra.mxu0 %v484
    %787 = vmatprep.subr.bf16.mxu0 0
    %788 = vmatpush1.bf16.msra.mxu0 0
    %789 = vmatprep.subr.bf16.mxu0 0
    %790 = vmatpush1.bf16.msra.mxu0 0
    %791 = vmatprep.subr.bf16.mxu0 0
    %792 = vmatpush1.bf16.msra.mxu0 0
    %793 = vmatprep.subr.bf16.mxu0 0
    %794 = vmatpush1.bf16.msra.mxu0 0
    %795 = vmatprep.subr.bf16.mxu0 0
    %796 = vmatpush1.bf16.msra.mxu0 0
    %797 = vmatprep.subr.bf16.mxu0 0
    %798 = vmatpush1.bf16.msra.mxu0 0
    %799 = vmatprep.subr.bf16.mxu0 0
    %800 = vmatpush1.bf16.msra.mxu0 0
    %801 = vmatprep.subr.bf16.mxu0 0
    %802 = vmatpush1.bf16.msra.mxu0 0
    %803 = vmatprep.subr.bf16.mxu0 0
    %804 = vmatpush1.bf16.msra.mxu0 0
    %805 = vmatprep.subr.bf16.mxu0 0
    %806 = vmatpush1.bf16.msra.mxu0 0
    %807 = vmatprep.subr.bf16.mxu0 0
    %808 = vmatpush1.bf16.msra.mxu0 0
    %809 = vmatprep.subr.bf16.mxu0 0
    %810 = vmatpush1.bf16.msra.mxu0 0
    %811 = vmatprep.mubr.bf16.mxu0 0
    %812 = vmatmul.mubr.bf16.gmra.mrb[0].mxu0 %v777
    %v813 = vpop.f32.mrb[0].mxu0
    %v814 = vadd.f32 %v86, %v813
    %v815 = vpop.f32.mrb[0].mxu0
    %v816 = vpop.f32.mrb[0].mxu0
    %v817 = vpop.f32.mrb[0].mxu0
    %818 = vdwg.mxu0
    %v819 = vxor.u32 %v814, 2147483648
    %v820 = vmul.f32 %v819, 1.442695
    %v821 = vpow.pop %v820
    %v822 = vadd.f32 %v821, 1.0
    %v823 = vrcp.pop %v822
    %v824 = vmul.f32 1.0, %v823
    %826 = vrot.lane.b32.xlu0 %v814, 32
    %v827 = vpop.permute.xlu0 %826
    %v829 = vmul.f32 %v824, %v827
    %831 = vrot.lane.b32.xlu0 %v829, 64
    %v832 = vpop.permute.xlu0 %831
    %v834 = vadd.f32 %v814, %v832
    %v835 = vtanh.pop %v834
    %v836 = vsub.f32 %v559, %v835
    %838 = vrot.lane.b32.xlu0 %v836, 96
    %v839 = vpop.permute.xlu0 %838
    %v841 = vmul.f32 %v824, %v839
    %843 = vrot.lane.b32.xlu0 %v841, 32
    %v844 = vpop.permute.xlu0 %843
    %v846 = vadd.f32 %v835, %v844
    %848 = vrot.lane.b32.xlu0 %v846, 64
    %v849 = vpop.permute.xlu0 %848
    %851 = vrot.lane.b32.xlu0 %v639, 96
    %v852 = vpop.permute.xlu0 %851
    %v854 = vsel %vm96, %v849, %v852
    %v855 = vpack.c.bf16 %v854, %v854
    %v857 = vsel %vm123, %v855, 0
    %859 = vmatprep.subr.bf16.mxu0 0
    %860 = vmatpush1.bf16.msra.mxu0 %v217
    %861 = vmatprep.subr.bf16.mxu0 0
    %862 = vmatpush1.bf16.msra.mxu0 %v218
    %863 = vmatprep.subr.bf16.mxu0 0
    %864 = vmatpush1.bf16.msra.mxu0 %v219
    %865 = vmatprep.subr.bf16.mxu0 0
    %866 = vmatpush1.bf16.msra.mxu0 %v220
    %867 = vmatprep.subr.bf16.mxu0 0
    %868 = vmatpush1.bf16.msra.mxu0 0
    %869 = vmatprep.subr.bf16.mxu0 0
    %870 = vmatpush1.bf16.msra.mxu0 0
    %871 = vmatprep.subr.bf16.mxu0 0
    %872 = vmatpush1.bf16.msra.mxu0 0
    %873 = vmatprep.subr.bf16.mxu0 0
    %874 = vmatpush1.bf16.msra.mxu0 0
    %875 = vmatprep.subr.bf16.mxu0 0
    %876 = vmatpush1.bf16.msra.mxu0 0
    %877 = vmatprep.subr.bf16.mxu0 0
    %878 = vmatpush1.bf16.msra.mxu0 0
    %879 = vmatprep.subr.bf16.mxu0 0
    %880 = vmatpush1.bf16.msra.mxu0 0
    %881 = vmatprep.subr.bf16.mxu0 0
    %882 = vmatpush1.bf16.msra.mxu0 0
    %883 = vmatprep.subr.bf16.mxu0 0
    %884 = vmatpush1.bf16.msra.mxu0 0
    %885 = vmatprep.subr.bf16.mxu0 0
    %886 = vmatpush1.bf16.msra.mxu0 0
    %887 = vmatprep.subr.bf16.mxu0 0
    %888 = vmatpush1.bf16.msra.mxu0 0
    %889 = vmatprep.subr.bf16.mxu0 0
    %890 = vmatpush1.bf16.msra.mxu0 0
    %891 = vmatprep.mubr.bf16.mxu0 0
    %892 = vmatmul.mubr.bf16.gmra.mrb[0].mxu0 %v857
    %v893 = vpop.f32.mrb[0].mxu0
    %v894 = vadd.f32 %v90, %v893
    %v895 = vpop.f32.mrb[0].mxu0
    %v896 = vpop.f32.mrb[0].mxu0
    %v897 = vpop.f32.mrb[0].mxu0
    %898 = vdwg.mxu0
    %v899 = vxor.u32 %v894, 2147483648
    %v900 = vmul.f32 %v899, 1.442695
    %v901 = vpow.pop %v900
    %v902 = vadd.f32 %v901, 1.0
    %v903 = vrcp.pop %v902
    %v904 = vmul.f32 1.0, %v903
    %906 = vrot.lane.b32.xlu0 %v894, 32
    %v907 = vpop.permute.xlu0 %906
    %v909 = vmul.f32 %v904, %v907
    %911 = vrot.lane.b32.xlu0 %v909, 64
    %v912 = vpop.permute.xlu0 %911
    %v914 = vadd.f32 %v894, %v912
    %v915 = vtanh.pop %v914
    %v916 = vsub.f32 %v639, %v915
    %918 = vrot.lane.b32.xlu0 %v916, 96
    %v919 = vpop.permute.xlu0 %918
    %v921 = vmul.f32 %v904, %v919
    %923 = vrot.lane.b32.xlu0 %v921, 32
    %v924 = vpop.permute.xlu0 %923
    %v926 = vadd.f32 %v915, %v924
    %928 = vrot.lane.b32.xlu0 %v926, 64
    %v929 = vpop.permute.xlu0 %928
    %931 = vrot.lane.b32.xlu0 %v719, 96
    %v932 = vpop.permute.xlu0 %931
    %v934 = vsel %vm96, %v929, %v932
    %v935 = vpack.c.bf16 %v934, %v934
    %v937 = vsel %vm123, %v935, 0
    %939 = vmatprep.subr.bf16.mxu0 0
    %940 = vmatpush1.bf16.msra.mxu0 %v318
    %941 = vmatprep.subr.bf16.mxu0 0
    %942 = vmatpush1.bf16.msra.mxu0 %v319
    %943 = vmatprep.subr.bf16.mxu0 0
    %944 = vmatpush1.bf16.msra.mxu0 %v320
    %945 = vmatprep.subr.bf16.mxu0 0
    %946 = vmatpush1.bf16.msra.mxu0 %v321
    %947 = vmatprep.subr.bf16.mxu0 0
    %948 = vmatpush1.bf16.msra.mxu0 0
    %949 = vmatprep.subr.bf16.mxu0 0
    %950 = vmatpush1.bf16.msra.mxu0 0
    %951 = vmatprep.subr.bf16.mxu0 0
    %952 = vmatpush1.bf16.msra.mxu0 0
    %953 = vmatprep.subr.bf16.mxu0 0
    %954 = vmatpush1.bf16.msra.mxu0 0
    %955 = vmatprep.subr.bf16.mxu0 0
    %956 = vmatpush1.bf16.msra.mxu0 0
    %957 = vmatprep.subr.bf16.mxu0 0
    %958 = vmatpush1.bf16.msra.mxu0 0
    %959 = vmatprep.subr.bf16.mxu0 0
    %960 = vmatpush1.bf16.msra.mxu0 0
    %961 = vmatprep.subr.bf16.mxu0 0
    %962 = vmatpush1.bf16.msra.mxu0 0
    %963 = vmatprep.subr.bf16.mxu0 0
    %964 = vmatpush1.bf16.msra.mxu0 0
    %965 = vmatprep.subr.bf16.mxu0 0
    %966 = vmatpush1.bf16.msra.mxu0 0
    %967 = vmatprep.subr.bf16.mxu0 0
    %968 = vmatpush1.bf16.msra.mxu0 0
    %969 = vmatprep.subr.bf16.mxu0 0
    %970 = vmatpush1.bf16.msra.mxu0 0
    %971 = vmatprep.mubr.bf16.mxu0 0
    %972 = vmatmul.mubr.bf16.gmra.mrb[0].mxu0 %v937
    %v973 = vpop.f32.mrb[0].mxu0
    %v974 = vadd.f32 %v94, %v973
    %v975 = vpop.f32.mrb[0].mxu0
    %v976 = vpop.f32.mrb[0].mxu0
    %v977 = vpop.f32.mrb[0].mxu0
    %978 = vdwg.mxu0
    %v979 = vxor.u32 %v974, 2147483648
    %v980 = vmul.f32 %v979, 1.442695
    %v981 = vpow.pop %v980
    %v982 = vadd.f32 %v981, 1.0
    %v983 = vrcp.pop %v982
    %v984 = vmul.f32 1.0, %v983
    %986 = vrot.lane.b32.xlu0 %v974, 32
    %v987 = vpop.permute.xlu0 %986
    %v989 = vmul.f32 %v984, %v987
    %991 = vrot.lane.b32.xlu0 %v989, 64
    %v992 = vpop.permute.xlu0 %991
    %v994 = vadd.f32 %v974, %v992
    %v995 = vtanh.pop %v994
    %v996 = vsub.f32 %v719, %v995
    %998 = vrot.lane.b32.xlu0 %v996, 96
    %v999 = vpop.permute.xlu0 %998
    %v1001 = vmul.f32 %v984, %v999
    %1003 = vrot.lane.b32.xlu0 %v1001, 32
    %v1004 = vpop.permute.xlu0 %1003
    %v1006 = vadd.f32 %v995, %v1004
    %v1007 = vpack.c.bf16 %v1006, %v1006
    %1009 = vrot.lane.b32.xlu0 %v1007, 64
    %v1010 = vpop.permute.xlu0 %1009
    %v1012 = vsel %vm96, %v1010, 0
    %1014 = vmatprep.subr.bf16.mxu0 0
    %1015 = vmatpush1.bf16.msra.mxu0 %v409
    %1016 = vmatprep.subr.bf16.mxu0 0
    %1017 = vmatpush1.bf16.msra.mxu0 %v410
    %1018 = vmatprep.subr.bf16.mxu0 0
    %1019 = vmatpush1.bf16.msra.mxu0 0
    %1020 = vmatprep.subr.bf16.mxu0 0
    %1021 = vmatpush1.bf16.msra.mxu0 0
    %1022 = vmatprep.subr.bf16.mxu0 0
    %1023 = vmatpush1.bf16.msra.mxu0 0
    %1024 = vmatprep.subr.bf16.mxu0 0
    %1025 = vmatpush1.bf16.msra.mxu0 0
    %1026 = vmatprep.subr.bf16.mxu0 0
    %1027 = vmatpush1.bf16.msra.mxu0 0
    %1028 = vmatprep.subr.bf16.mxu0 0
    %1029 = vmatpush1.bf16.msra.mxu0 0
    %1030 = vmatprep.subr.bf16.mxu0 0
    %1031 = vmatpush1.bf16.msra.mxu0 0
    %1032 = vmatprep.subr.bf16.mxu0 0
    %1033 = vmatpush1.bf16.msra.mxu0 0
    %1034 = vmatprep.subr.bf16.mxu0 0
    %1035 = vmatpush1.bf16.msra.mxu0 0
    %1036 = vmatprep.subr.bf16.mxu0 0
    %1037 = vmatpush1.bf16.msra.mxu0 0
    %1038 = vmatprep.subr.bf16.mxu0 0
    %1039 = vmatpush1.bf16.msra.mxu0 0
    %1040 = vmatprep.subr.bf16.mxu0 0
    %1041 = vmatpush1.bf16.msra.mxu0 0
    %1042 = vmatprep.subr.bf16.mxu0 0
    %1043 = vmatpush1.bf16.msra.mxu0 0
    %1044 = vmatprep.subr.bf16.mxu0 0
    %1045 = vmatpush1.bf16.msra.mxu0 0
    %1046 = vmatprep.mubr.bf16.mxu0 0
    %1047 = vmatmul.mubr.bf16.gmra.mrb[0].mxu0 %v1012
    %v1048 = vpop.f32.mrb[0].mxu0
    %v1049 = vadd.f32 %v77, %v1048
    %v1050 = vpop.f32.mrb[0].mxu0
    %v1051 = vpop.f32.mrb[0].mxu0
    %v1052 = vpop.f32.mrb[0].mxu0
    %1053 = vdwg.mxu0
    %1055 = vrot.lane.b32.xlu0 %v1006, 64
    %v1056 = vpop.permute.xlu0 %1055
    %1058 = vrot.lane.b32.xlu0 %v846, 96
    %v1059 = vpop.permute.xlu0 %1058
    %v1061 = vsel %vm96, %v1056, %v1059
    %v1062 = vpack.c.bf16 %v1061, %v1061
    %v1064 = vsel %vm123, %v1062, 0
    %1066 = vmatprep.subr.bf16.mxu0 0
    %1067 = vmatpush1.bf16.msra.mxu0 %v481
    %1068 = vmatprep.subr.bf16.mxu0 0
    %1069 = vmatpush1.bf16.msra.mxu0 %v482
    %1070 = vmatprep.subr.bf16.mxu0 0
    %1071 = vmatpush1.bf16.msra.mxu0 %v483
    %1072 = vmatprep.subr.bf16.mxu0 0
    %1073 = vmatpush1.bf16.msra.mxu0 %v484
    %1074 = vmatprep.subr.bf16.mxu0 0
    %1075 = vmatpush1.bf16.msra.mxu0 0
    %1076 = vmatprep.subr.bf16.mxu0 0
    %1077 = vmatpush1.bf16.msra.mxu0 0
    %1078 = vmatprep.subr.bf16.mxu0 0
    %1079 = vmatpush1.bf16.msra.mxu0 0
    %1080 = vmatprep.subr.bf16.mxu0 0
    %1081 = vmatpush1.bf16.msra.mxu0 0
    %1082 = vmatprep.subr.bf16.mxu0 0
    %1083 = vmatpush1.bf16.msra.mxu0 0
    %1084 = vmatprep.subr.bf16.mxu0 0
    %1085 = vmatpush1.bf16.msra.mxu0 0
    %1086 = vmatprep.subr.bf16.mxu0 0
    %1087 = vmatpush1.bf16.msra.mxu0 0
    %1088 = vmatprep.subr.bf16.mxu0 0
    %1089 = vmatpush1.bf16.msra.mxu0 0
    %1090 = vmatprep.subr.bf16.mxu0 0
    %1091 = vmatpush1.bf16.msra.mxu0 0
    %1092 = vmatprep.subr.bf16.mxu0 0
    %1093 = vmatpush1.bf16.msra.mxu0 0
    %1094 = vmatprep.subr.bf16.mxu0 0
    %1095 = vmatpush1.bf16.msra.mxu0 0
    %1096 = vmatprep.subr.bf16.mxu0 0
    %1097 = vmatpush1.bf16.msra.mxu0 0
    %1098 = vmatprep.mubr.bf16.mxu0 0
    %1099 = vmatmul.mubr.bf16.gmra.mrb[0].mxu0 %v1064
    %v1100 = vpop.f32.mrb[0].mxu0
    %v1101 = vadd.f32 %v86, %v1100
    %v1102 = vpop.f32.mrb[0].mxu0
    %v1103 = vpop.f32.mrb[0].mxu0
    %v1104 = vpop.f32.mrb[0].mxu0
    %1105 = vdwg.mxu0
    %v1106 = vxor.u32 %v1101, 2147483648
    %v1107 = vmul.f32 %v1106, 1.442695
    %v1108 = vpow.pop %v1107
    %v1109 = vadd.f32 %v1108, 1.0
    %v1110 = vrcp.pop %v1109
    %v1111 = vmul.f32 1.0, %v1110
    %1113 = vrot.lane.b32.xlu0 %v1101, 32
    %v1114 = vpop.permute.xlu0 %1113
    %v1116 = vmul.f32 %v1111, %v1114
    %1118 = vrot.lane.b32.xlu0 %v1116, 64
    %v1119 = vpop.permute.xlu0 %1118
    %v1121 = vadd.f32 %v1101, %v1119
    %v1122 = vtanh.pop %v1121
    %v1123 = vsub.f32 %v846, %v1122
    %1125 = vrot.lane.b32.xlu0 %v1123, 96
    %v1126 = vpop.permute.xlu0 %1125
    %v1128 = vmul.f32 %v1111, %v1126
    %1130 = vrot.lane.b32.xlu0 %v1128, 32
    %v1131 = vpop.permute.xlu0 %1130
    %v1133 = vadd.f32 %v1122, %v1131
    %1135 = vrot.lane.b32.xlu0 %v1133, 64
    %v1136 = vpop.permute.xlu0 %1135
    %1138 = vrot.lane.b32.xlu0 %v926, 96
    %v1139 = vpop.permute.xlu0 %1138
    %v1141 = vsel %vm96, %v1136, %v1139
    %v1142 = vpack.c.bf16 %v1141, %v1141
    %v1144 = vsel %vm123, %v1142, 0
    %1146 = vmatprep.subr.bf16.mxu0 0
    %1147 = vmatpush1.bf16.msra.mxu0 %v217
    %1148 = vmatprep.subr.bf16.mxu0 0
    %1149 = vmatpush1.bf16.msra.mxu0 %v218
    %1150 = vmatprep.subr.bf16.mxu0 0
    %1151 = vmatpush1.bf16.msra.mxu0 %v219
    %1152 = vmatprep.subr.bf16.mxu0 0
    %1153 = vmatpush1.bf16.msra.mxu0 %v220
    %1154 = vmatprep.subr.bf16.mxu0 0
    %1155 = vmatpush1.bf16.msra.mxu0 0
    %1156 = vmatprep.subr.bf16.mxu0 0
    %1157 = vmatpush1.bf16.msra.mxu0 0
    %1158 = vmatprep.subr.bf16.mxu0 0
    %1159 = vmatpush1.bf16.msra.mxu0 0
    %1160 = vmatprep.subr.bf16.mxu0 0
    %1161 = vmatpush1.bf16.msra.mxu0 0
    %1162 = vmatprep.subr.bf16.mxu0 0
    %1163 = vmatpush1.bf16.msra.mxu0 0
    %1164 = vmatprep.subr.bf16.mxu0 0
    %1165 = vmatpush1.bf16.msra.mxu0 0
    %1166 = vmatprep.subr.bf16.mxu0 0
    %1167 = vmatpush1.bf16.msra.mxu0 0
    %1168 = vmatprep.subr.bf16.mxu0 0
    %1169 = vmatpush1.bf16.msra.mxu0 0
    %1170 = vmatprep.subr.bf16.mxu0 0
    %1171 = vmatpush1.bf16.msra.mxu0 0
    %1172 = vmatprep.subr.bf16.mxu0 0
    %1173 = vmatpush1.bf16.msra.mxu0 0
    %1174 = vmatprep.subr.bf16.mxu0 0
    %1175 = vmatpush1.bf16.msra.mxu0 0
    %1176 = vmatprep.subr.bf16.mxu0 0
    %1177 = vmatpush1.bf16.msra.mxu0 0
    %1178 = vmatprep.mubr.bf16.mxu0 0
    %1179 = vmatmul.mubr.bf16.gmra.mrb[0].mxu0 %v1144
    %v1180 = vpop.f32.mrb[0].mxu0
    %v1181 = vadd.f32 %v90, %v1180
    %v1182 = vpop.f32.mrb[0].mxu0
    %v1183 = vpop.f32.mrb[0].mxu0
    %v1184 = vpop.f32.mrb[0].mxu0
    %1185 = vdwg.mxu0
    %v1186 = vxor.u32 %v1181, 2147483648
    %v1187 = vmul.f32 %v1186, 1.442695
    %v1188 = vpow.pop %v1187
    %v1189 = vadd.f32 %v1188, 1.0
    %v1190 = vrcp.pop %v1189
    %v1191 = vmul.f32 1.0, %v1190
    %1193 = vrot.lane.b32.xlu0 %v1181, 32
    %v1194 = vpop.permute.xlu0 %1193
    %v1196 = vmul.f32 %v1191, %v1194
    %1198 = vrot.lane.b32.xlu0 %v1196, 64
    %v1199 = vpop.permute.xlu0 %1198
    %v1201 = vadd.f32 %v1181, %v1199
    %v1202 = vtanh.pop %v1201
    %v1203 = vsub.f32 %v926, %v1202
    %1205 = vrot.lane.b32.xlu0 %v1203, 96
    %v1206 = vpop.permute.xlu0 %1205
    %v1208 = vmul.f32 %v1191, %v1206
    %1210 = vrot.lane.b32.xlu0 %v1208, 32
    %v1211 = vpop.permute.xlu0 %1210
    %v1213 = vadd.f32 %v1202, %v1211
    %1215 = vrot.lane.b32.xlu0 %v1213, 64
    %v1216 = vpop.permute.xlu0 %1215
    %1218 = vrot.lane.b32.xlu0 %v1006, 96
    %v1219 = vpop.permute.xlu0 %1218
    %v1221 = vsel %vm96, %v1216, %v1219
    %v1222 = vpack.c.bf16 %v1221, %v1221
    %v1224 = vsel %vm123, %v1222, 0
    %1226 = vmatprep.subr.bf16.mxu0 0
    %1227 = vmatpush1.bf16.msra.mxu0 %v318
    %1228 = vmatprep.subr.bf16.mxu0 0
    %1229 = vmatpush1.bf16.msra.mxu0 %v319
    %1230 = vmatprep.subr.bf16.mxu0 0
    %1231 = vmatpush1.bf16.msra.mxu0 %v320
    %1232 = vmatprep.subr.bf16.mxu0 0
    %1233 = vmatpush1.bf16.msra.mxu0 %v321
    %1234 = vmatprep.subr.bf16.mxu0 0
    %1235 = vmatpush1.bf16.msra.mxu0 0
    %1236 = vmatprep.subr.bf16.mxu0 0
    %1237 = vmatpush1.bf16.msra.mxu0 0
    %1238 = vmatprep.subr.bf16.mxu0 0
    %1239 = vmatpush1.bf16.msra.mxu0 0
    %1240 = vmatprep.subr.bf16.mxu0 0
    %1241 = vmatpush1.bf16.msra.mxu0 0
    %1242 = vmatprep.subr.bf16.mxu0 0
    %1243 = vmatpush1.bf16.msra.mxu0 0
    %1244 = vmatprep.subr.bf16.mxu0 0
    %1245 = vmatpush1.bf16.msra.mxu0 0
    %1246 = vmatprep.subr.bf16.mxu0 0
    %1247 = vmatpush1.bf16.msra.mxu0 0
    %1248 = vmatprep.subr.bf16.mxu0 0
    %1249 = vmatpush1.bf16.msra.mxu0 0
    %1250 = vmatprep.subr.bf16.mxu0 0
    %1251 = vmatpush1.bf16.msra.mxu0 0
    %1252 = vmatprep.subr.bf16.mxu0 0
    %1253 = vmatpush1.bf16.msra.mxu0 0
    %1254 = vmatprep.subr.bf16.mxu0 0
    %1255 = vmatpush1.bf16.msra.mxu0 0
    %1256 = vmatprep.subr.bf16.mxu0 0
    %1257 = vmatpush1.bf16.msra.mxu0 0
    %1258 = vmatprep.mubr.bf16.mxu0 0
    %1259 = vmatmul.mubr.bf16.gmra.mrb[0].mxu0 %v1224
    %v1260 = vpop.f32.mrb[0].mxu0
    %v1261 = vadd.f32 %v94, %v1260
    %v1262 = vpop.f32.mrb[0].mxu0
    %v1263 = vpop.f32.mrb[0].mxu0
    %v1264 = vpop.f32.mrb[0].mxu0
    %1265 = vdwg.mxu0
    %v1266 = vxor.u32 %v1261, 2147483648
    %v1267 = vmul.f32 %v1266, 1.442695
    %v1268 = vpow.pop %v1267
    %v1269 = vadd.f32 %v1268, 1.0
    %v1270 = vrcp.pop %v1269
    %v1271 = vmul.f32 1.0, %v1270
    %1273 = vrot.lane.b32.xlu0 %v1261, 32
    %v1274 = vpop.permute.xlu0 %1273
    %v1276 = vmul.f32 %v1271, %v1274
    %1278 = vrot.lane.b32.xlu0 %v1276, 64
    %v1279 = vpop.permute.xlu0 %1278
    %v1281 = vadd.f32 %v1261, %v1279
    %v1282 = vtanh.pop %v1281
    %v1283 = vsub.f32 %v1006, %v1282
    %1285 = vrot.lane.b32.xlu0 %v1283, 96
    %v1286 = vpop.permute.xlu0 %1285
    %v1288 = vmul.f32 %v1271, %v1286
    %1290 = vrot.lane.b32.xlu0 %v1288, 32
    %v1291 = vpop.permute.xlu0 %1290
    %v1293 = vadd.f32 %v1282, %v1291
    %v1294 = vpack.c.bf16 %v1293, %v1293
    %1296 = vrot.lane.b32.xlu0 %v1294, 64
    %v1297 = vpop.permute.xlu0 %1296
    %v1299 = vsel %vm96, %v1297, 0
    %1301 = vmatprep.subr.bf16.mxu0 0
    %1302 = vmatpush1.bf16.msra.mxu0 %v409
    %1303 = vmatprep.subr.bf16.mxu0 0
    %1304 = vmatpush1.bf16.msra.mxu0 %v410
    %1305 = vmatprep.subr.bf16.mxu0 0
    %1306 = vmatpush1.bf16.msra.mxu0 0
    %1307 = vmatprep.subr.bf16.mxu0 0
    %1308 = vmatpush1.bf16.msra.mxu0 0
    %1309 = vmatprep.subr.bf16.mxu0 0
    %1310 = vmatpush1.bf16.msra.mxu0 0
    %1311 = vmatprep.subr.bf16.mxu0 0
    %1312 = vmatpush1.bf16.msra.mxu0 0
    %1313 = vmatprep.subr.bf16.mxu0 0
    %1314 = vmatpush1.bf16.msra.mxu0 0
    %1315 = vmatprep.subr.bf16.mxu0 0
    %1316 = vmatpush1.bf16.msra.mxu0 0
    %1317 = vmatprep.subr.bf16.mxu0 0
    %1318 = vmatpush1.bf16.msra.mxu0 0
    %1319 = vmatprep.subr.bf16.mxu0 0
    %1320 = vmatpush1.bf16.msra.mxu0 0
    %1321 = vmatprep.subr.bf16.mxu0 0
    %1322 = vmatpush1.bf16.msra.mxu0 0
    %1323 = vmatprep.subr.bf16.mxu0 0
    %1324 = vmatpush1.bf16.msra.mxu0 0
    %1325 = vmatprep.subr.bf16.mxu0 0
    %1326 = vmatpush1.bf16.msra.mxu0 0
    %1327 = vmatprep.subr.bf16.mxu0 0
    %1328 = vmatpush1.bf16.msra.mxu0 0
    %1329 = vmatprep.subr.bf16.mxu0 0
    %1330 = vmatpush1.bf16.msra.mxu0 0
    %1331 = vmatprep.subr.bf16.mxu0 0
    %1332 = vmatpush1.bf16.msra.mxu0 0
    %1333 = vmatprep.mubr.bf16.mxu0 0
    %1334 = vmatmul.mubr.bf16.gmra.mrb[0].mxu0 %v1299
    %v1335 = vpop.f32.mrb[0].mxu0
    %v1336 = vadd.f32 %v77, %v1335
    %v1337 = vpop.f32.mrb[0].mxu0
    %v1338 = vpop.f32.mrb[0].mxu0
    %v1339 = vpop.f32.mrb[0].mxu0
    %1340 = vdwg.mxu0
    %1342 = vrot.lane.b32.xlu0 %v1293, 64
    %v1343 = vpop.permute.xlu0 %1342
    %1345 = vrot.lane.b32.xlu0 %v1133, 96
    %v1346 = vpop.permute.xlu0 %1345
    %v1348 = vsel %vm96, %v1343, %v1346
    %v1349 = vpack.c.bf16 %v1348, %v1348
    %v1351 = vsel %vm123, %v1349, 0
    %1353 = vmatprep.subr.bf16.mxu0 0
    %1354 = vmatpush1.bf16.msra.mxu0 %v481
    %1355 = vmatprep.subr.bf16.mxu0 0
    %1356 = vmatpush1.bf16.msra.mxu0 %v482
    %1357 = vmatprep.subr.bf16.mxu0 0
    %1358 = vmatpush1.bf16.msra.mxu0 %v483
    %1359 = vmatprep.subr.bf16.mxu0 0
    %1360 = vmatpush1.bf16.msra.mxu0 %v484
    %1361 = vmatprep.subr.bf16.mxu0 0
    %1362 = vmatpush1.bf16.msra.mxu0 0
    %1363 = vmatprep.subr.bf16.mxu0 0
    %1364 = vmatpush1.bf16.msra.mxu0 0
    %1365 = vmatprep.subr.bf16.mxu0 0
    %1366 = vmatpush1.bf16.msra.mxu0 0
    %1367 = vmatprep.subr.bf16.mxu0 0
    %1368 = vmatpush1.bf16.msra.mxu0 0
    %1369 = vmatprep.subr.bf16.mxu0 0
    %1370 = vmatpush1.bf16.msra.mxu0 0
    %1371 = vmatprep.subr.bf16.mxu0 0
    %1372 = vmatpush1.bf16.msra.mxu0 0
    %1373 = vmatprep.subr.bf16.mxu0 0
    %1374 = vmatpush1.bf16.msra.mxu0 0
    %1375 = vmatprep.subr.bf16.mxu0 0
    %1376 = vmatpush1.bf16.msra.mxu0 0
    %1377 = vmatprep.subr.bf16.mxu0 0
    %1378 = vmatpush1.bf16.msra.mxu0 0
    %1379 = vmatprep.subr.bf16.mxu0 0
    %1380 = vmatpush1.bf16.msra.mxu0 0
    %1381 = vmatprep.subr.bf16.mxu0 0
    %1382 = vmatpush1.bf16.msra.mxu0 0
    %1383 = vmatprep.subr.bf16.mxu0 0
    %1384 = vmatpush1.bf16.msra.mxu0 0
    %1385 = vmatprep.mubr.bf16.mxu0 0
    %1386 = vmatmul.mubr.bf16.gmra.mrb[0].mxu0 %v1351
    %v1387 = vpop.f32.mrb[0].mxu0
    %v1388 = vadd.f32 %v86, %v1387
    %v1389 = vpop.f32.mrb[0].mxu0
    %v1390 = vpop.f32.mrb[0].mxu0
    %v1391 = vpop.f32.mrb[0].mxu0
    %1392 = vdwg.mxu0
    %v1393 = vxor.u32 %v1388, 2147483648
    %v1394 = vmul.f32 %v1393, 1.442695
    %v1395 = vpow.pop %v1394
    %v1396 = vadd.f32 %v1395, 1.0
    %v1397 = vrcp.pop %v1396
    %v1398 = vmul.f32 1.0, %v1397
    %1400 = vrot.lane.b32.xlu0 %v1388, 32
    %v1401 = vpop.permute.xlu0 %1400
    %v1403 = vmul.f32 %v1398, %v1401
    %1405 = vrot.lane.b32.xlu0 %v1403, 64
    %v1406 = vpop.permute.xlu0 %1405
    %v1408 = vadd.f32 %v1388, %v1406
    %v1409 = vtanh.pop %v1408
    %v1410 = vsub.f32 %v1133, %v1409
    %1412 = vrot.lane.b32.xlu0 %v1410, 96
    %v1413 = vpop.permute.xlu0 %1412
    %v1415 = vmul.f32 %v1398, %v1413
    %1417 = vrot.lane.b32.xlu0 %v1415, 32
    %v1418 = vpop.permute.xlu0 %1417
    %v1420 = vadd.f32 %v1409, %v1418
    %1422 = vrot.lane.b32.xlu0 %v1420, 64
    %v1423 = vpop.permute.xlu0 %1422
    %1425 = vrot.lane.b32.xlu0 %v1213, 96
    %v1426 = vpop.permute.xlu0 %1425
    %v1428 = vsel %vm96, %v1423, %v1426
    %v1429 = vpack.c.bf16 %v1428, %v1428
    %v1431 = vsel %vm123, %v1429, 0
    %1433 = vmatprep.subr.bf16.mxu0 0
    %1434 = vmatpush1.bf16.msra.mxu0 %v217
    %1435 = vmatprep.subr.bf16.mxu0 0
    %1436 = vmatpush1.bf16.msra.mxu0 %v218
    %1437 = vmatprep.subr.bf16.mxu0 0
    %1438 = vmatpush1.bf16.msra.mxu0 %v219
    %1439 = vmatprep.subr.bf16.mxu0 0
    %1440 = vmatpush1.bf16.msra.mxu0 %v220
    %1441 = vmatprep.subr.bf16.mxu0 0
    %1442 = vmatpush1.bf16.msra.mxu0 0
    %1443 = vmatprep.subr.bf16.mxu0 0
    %1444 = vmatpush1.bf16.msra.mxu0 0
    %1445 = vmatprep.subr.bf16.mxu0 0
    %1446 = vmatpush1.bf16.msra.mxu0 0
    %1447 = vmatprep.subr.bf16.mxu0 0
    %1448 = vmatpush1.bf16.msra.mxu0 0
    %1449 = vmatprep.subr.bf16.mxu0 0
    %1450 = vmatpush1.bf16.msra.mxu0 0
    %1451 = vmatprep.subr.bf16.mxu0 0
    %1452 = vmatpush1.bf16.msra.mxu0 0
    %1453 = vmatprep.subr.bf16.mxu0 0
    %1454 = vmatpush1.bf16.msra.mxu0 0
    %1455 = vmatprep.subr.bf16.mxu0 0
    %1456 = vmatpush1.bf16.msra.mxu0 0
    %1457 = vmatprep.subr.bf16.mxu0 0
    %1458 = vmatpush1.bf16.msra.mxu0 0
    %1459 = vmatprep.subr.bf16.mxu0 0
    %1460 = vmatpush1.bf16.msra.mxu0 0
    %1461 = vmatprep.subr.bf16.mxu0 0
    %1462 = vmatpush1.bf16.msra.mxu0 0
    %1463 = vmatprep.subr.bf16.mxu0 0
    %1464 = vmatpush1.bf16.msra.mxu0 0
    %1465 = vmatprep.mubr.bf16.mxu0 0
    %1466 = vmatmul.mubr.bf16.gmra.mrb[0].mxu0 %v1431
    %v1467 = vpop.f32.mrb[0].mxu0
    %v1468 = vadd.f32 %v90, %v1467
    %v1469 = vpop.f32.mrb[0].mxu0
    %v1470 = vpop.f32.mrb[0].mxu0
    %v1471 = vpop.f32.mrb[0].mxu0
    %1472 = vdwg.mxu0
    %v1473 = vxor.u32 %v1468, 2147483648
    %v1474 = vmul.f32 %v1473, 1.442695
    %v1475 = vpow.pop %v1474
    %v1476 = vadd.f32 %v1475, 1.0
    %v1477 = vrcp.pop %v1476
    %v1478 = vmul.f32 1.0, %v1477
    %1480 = vrot.lane.b32.xlu0 %v1468, 32
    %v1481 = vpop.permute.xlu0 %1480
    %v1483 = vmul.f32 %v1478, %v1481
    %1485 = vrot.lane.b32.xlu0 %v1483, 64
    %v1486 = vpop.permute.xlu0 %1485
    %v1488 = vadd.f32 %v1468, %v1486
    %v1489 = vtanh.pop %v1488
    %v1490 = vsub.f32 %v1213, %v1489
    %1492 = vrot.lane.b32.xlu0 %v1490, 96
    %v1493 = vpop.permute.xlu0 %1492
    %v1495 = vmul.f32 %v1478, %v1493
    %1497 = vrot.lane.b32.xlu0 %v1495, 32
    %v1498 = vpop.permute.xlu0 %1497
    %v1500 = vadd.f32 %v1489, %v1498
    %1502 = vrot.lane.b32.xlu0 %v1500, 64
    %v1503 = vpop.permute.xlu0 %1502
    %1505 = vrot.lane.b32.xlu0 %v1293, 96
    %v1506 = vpop.permute.xlu0 %1505
    %v1508 = vsel %vm96, %v1503, %v1506
    %v1509 = vpack.c.bf16 %v1508, %v1508
    %v1511 = vsel %vm123, %v1509, 0
    %1513 = vmatprep.subr.bf16.mxu0 0
    %1514 = vmatpush1.bf16.msra.mxu0 %v318
    %1515 = vmatprep.subr.bf16.mxu0 0
    %1516 = vmatpush1.bf16.msra.mxu0 %v319
    %1517 = vmatprep.subr.bf16.mxu0 0
    %1518 = vmatpush1.bf16.msra.mxu0 %v320
    %1519 = vmatprep.subr.bf16.mxu0 0
    %1520 = vmatpush1.bf16.msra.mxu0 %v321
    %1521 = vmatprep.subr.bf16.mxu0 0
    %1522 = vmatpush1.bf16.msra.mxu0 0
    %1523 = vmatprep.subr.bf16.mxu0 0
    %1524 = vmatpush1.bf16.msra.mxu0 0
    %1525 = vmatprep.subr.bf16.mxu0 0
    %1526 = vmatpush1.bf16.msra.mxu0 0
    %1527 = vmatprep.subr.bf16.mxu0 0
    %1528 = vmatpush1.bf16.msra.mxu0 0
    %1529 = vmatprep.subr.bf16.mxu0 0
    %1530 = vmatpush1.bf16.msra.mxu0 0
    %1531 = vmatprep.subr.bf16.mxu0 0
    %1532 = vmatpush1.bf16.msra.mxu0 0
    %1533 = vmatprep.subr.bf16.mxu0 0
    %1534 = vmatpush1.bf16.msra.mxu0 0
    %1535 = vmatprep.subr.bf16.mxu0 0
    %1536 = vmatpush1.bf16.msra.mxu0 0
    %1537 = vmatprep.subr.bf16.mxu0 0
    %1538 = vmatpush1.bf16.msra.mxu0 0
    %1539 = vmatprep.subr.bf16.mxu0 0
    %1540 = vmatpush1.bf16.msra.mxu0 0
    %1541 = vmatprep.subr.bf16.mxu0 0
    %1542 = vmatpush1.bf16.msra.mxu0 0
    %1543 = vmatprep.subr.bf16.mxu0 0
    %1544 = vmatpush1.bf16.msra.mxu0 0
    %1545 = vmatprep.mubr.bf16.mxu0 0
    %1546 = vmatmul.mubr.bf16.gmra.mrb[0].mxu0 %v1511
    %v1547 = vpop.f32.mrb[0].mxu0
    %v1548 = vadd.f32 %v94, %v1547
    %v1549 = vpop.f32.mrb[0].mxu0
    %v1550 = vpop.f32.mrb[0].mxu0
    %v1551 = vpop.f32.mrb[0].mxu0
    %1552 = vdwg.mxu0
    %v1553 = vxor.u32 %v1548, 2147483648
    %v1554 = vmul.f32 %v1553, 1.442695
    %v1555 = vpow.pop %v1554
    %v1556 = vadd.f32 %v1555, 1.0
    %v1557 = vrcp.pop %v1556
    %v1558 = vmul.f32 1.0, %v1557
    %1560 = vrot.lane.b32.xlu0 %v1548, 32
    %v1561 = vpop.permute.xlu0 %1560
    %v1563 = vmul.f32 %v1558, %v1561
    %1565 = vrot.lane.b32.xlu0 %v1563, 64
    %v1566 = vpop.permute.xlu0 %1565
    %v1568 = vadd.f32 %v1548, %v1566
    %v1569 = vtanh.pop %v1568
    %v1570 = vsub.f32 %v1293, %v1569
    %1572 = vrot.lane.b32.xlu0 %v1570, 96
    %v1573 = vpop.permute.xlu0 %1572
    %v1575 = vmul.f32 %v1558, %v1573
    %1577 = vrot.lane.b32.xlu0 %v1575, 32
    %v1578 = vpop.permute.xlu0 %1577
    %v1580 = vadd.f32 %v1569, %v1578
    %v1581 = vpack.c.bf16 %v1580, %v1580
    %1583 = vrot.lane.b32.xlu0 %v1581, 64
    %v1584 = vpop.permute.xlu0 %1583
    %v1586 = vsel %vm96, %v1584, 0
    %1588 = vmatprep.subr.bf16.mxu0 0
    %1589 = vmatpush1.bf16.msra.mxu0 %v409
    %1590 = vmatprep.subr.bf16.mxu0 0
    %1591 = vmatpush1.bf16.msra.mxu0 %v410
    %1592 = vmatprep.subr.bf16.mxu0 0
    %1593 = vmatpush1.bf16.msra.mxu0 0
    %1594 = vmatprep.subr.bf16.mxu0 0
    %1595 = vmatpush1.bf16.msra.mxu0 0
    %1596 = vmatprep.subr.bf16.mxu0 0
    %1597 = vmatpush1.bf16.msra.mxu0 0
    %1598 = vmatprep.subr.bf16.mxu0 0
    %1599 = vmatpush1.bf16.msra.mxu0 0
    %1600 = vmatprep.subr.bf16.mxu0 0
    %1601 = vmatpush1.bf16.msra.mxu0 0
    %1602 = vmatprep.subr.bf16.mxu0 0
    %1603 = vmatpush1.bf16.msra.mxu0 0
    %1604 = vmatprep.subr.bf16.mxu0 0
    %1605 = vmatpush1.bf16.msra.mxu0 0
    %1606 = vmatprep.subr.bf16.mxu0 0
    %1607 = vmatpush1.bf16.msra.mxu0 0
    %1608 = vmatprep.subr.bf16.mxu0 0
    %1609 = vmatpush1.bf16.msra.mxu0 0
    %1610 = vmatprep.subr.bf16.mxu0 0
    %1611 = vmatpush1.bf16.msra.mxu0 0
    %1612 = vmatprep.subr.bf16.mxu0 0
    %1613 = vmatpush1.bf16.msra.mxu0 0
    %1614 = vmatprep.subr.bf16.mxu0 0
    %1615 = vmatpush1.bf16.msra.mxu0 0
    %1616 = vmatprep.subr.bf16.mxu0 0
    %1617 = vmatpush1.bf16.msra.mxu0 0
    %1618 = vmatprep.subr.bf16.mxu0 0
    %1619 = vmatpush1.bf16.msra.mxu0 0
    %1620 = vmatprep.mubr.bf16.mxu0 0
    %1621 = vmatmul.mubr.bf16.gmra.mrb[0].mxu0 %v1586
    %v1622 = vpop.f32.mrb[0].mxu0
    %v1623 = vadd.f32 %v77, %v1622
    %v1624 = vpop.f32.mrb[0].mxu0
    %v1625 = vpop.f32.mrb[0].mxu0
    %v1626 = vpop.f32.mrb[0].mxu0
    %1627 = vdwg.mxu0
    %1629 = vrot.lane.b32.xlu0 %v1580, 64
    %v1630 = vpop.permute.xlu0 %1629
    %1632 = vrot.lane.b32.xlu0 %v1420, 96
    %v1633 = vpop.permute.xlu0 %1632
    %v1635 = vsel %vm96, %v1630, %v1633
    %v1636 = vpack.c.bf16 %v1635, %v1635
    %v1638 = vsel %vm123, %v1636, 0
    %1640 = vmatprep.subr.bf16.mxu0 0
    %1641 = vmatpush1.bf16.msra.mxu0 %v481
    %1642 = vmatprep.subr.bf16.mxu0 0
    %1643 = vmatpush1.bf16.msra.mxu0 %v482
    %1644 = vmatprep.subr.bf16.mxu0 0
    %1645 = vmatpush1.bf16.msra.mxu0 %v483
    %1646 = vmatprep.subr.bf16.mxu0 0
    %1647 = vmatpush1.bf16.msra.mxu0 %v484
    %1648 = vmatprep.subr.bf16.mxu0 0
    %1649 = vmatpush1.bf16.msra.mxu0 0
    %1650 = vmatprep.subr.bf16.mxu0 0
    %1651 = vmatpush1.bf16.msra.mxu0 0
    %1652 = vmatprep.subr.bf16.mxu0 0
    %1653 = vmatpush1.bf16.msra.mxu0 0
    %1654 = vmatprep.subr.bf16.mxu0 0
    %1655 = vmatpush1.bf16.msra.mxu0 0
    %1656 = vmatprep.subr.bf16.mxu0 0
    %1657 = vmatpush1.bf16.msra.mxu0 0
    %1658 = vmatprep.subr.bf16.mxu0 0
    %1659 = vmatpush1.bf16.msra.mxu0 0
    %1660 = vmatprep.subr.bf16.mxu0 0
    %1661 = vmatpush1.bf16.msra.mxu0 0
    %1662 = vmatprep.subr.bf16.mxu0 0
    %1663 = vmatpush1.bf16.msra.mxu0 0
    %1664 = vmatprep.subr.bf16.mxu0 0
    %1665 = vmatpush1.bf16.msra.mxu0 0
    %1666 = vmatprep.subr.bf16.mxu0 0
    %1667 = vmatpush1.bf16.msra.mxu0 0
    %1668 = vmatprep.subr.bf16.mxu0 0
    %1669 = vmatpush1.bf16.msra.mxu0 0
    %1670 = vmatprep.subr.bf16.mxu0 0
    %1671 = vmatpush1.bf16.msra.mxu0 0
    %1672 = vmatprep.mubr.bf16.mxu0 0
    %1673 = vmatmul.mubr.bf16.gmra.mrb[0].mxu0 %v1638
    %v1674 = vpop.f32.mrb[0].mxu0
    %v1675 = vadd.f32 %v86, %v1674
    %v1676 = vpop.f32.mrb[0].mxu0
    %v1677 = vpop.f32.mrb[0].mxu0
    %v1678 = vpop.f32.mrb[0].mxu0
    %1679 = vdwg.mxu0
    %v1680 = vxor.u32 %v1675, 2147483648
    %v1681 = vmul.f32 %v1680, 1.442695
    %v1682 = vpow.pop %v1681
    %v1683 = vadd.f32 %v1682, 1.0
    %v1684 = vrcp.pop %v1683
    %v1685 = vmul.f32 1.0, %v1684
    %1687 = vrot.lane.b32.xlu0 %v1675, 32
    %v1688 = vpop.permute.xlu0 %1687
    %v1690 = vmul.f32 %v1685, %v1688
    %1692 = vrot.lane.b32.xlu0 %v1690, 64
    %v1693 = vpop.permute.xlu0 %1692
    %v1695 = vadd.f32 %v1675, %v1693
    %v1696 = vtanh.pop %v1695
    %v1697 = vsub.f32 %v1420, %v1696
    %1699 = vrot.lane.b32.xlu0 %v1697, 96
    %v1700 = vpop.permute.xlu0 %1699
    %v1702 = vmul.f32 %v1685, %v1700
    %1704 = vrot.lane.b32.xlu0 %v1702, 32
    %v1705 = vpop.permute.xlu0 %1704
    %v1707 = vadd.f32 %v1696, %v1705
    %1709 = vrot.lane.b32.xlu0 %v1707, 64
    %v1710 = vpop.permute.xlu0 %1709
    %1712 = vrot.lane.b32.xlu0 %v1500, 96
    %v1713 = vpop.permute.xlu0 %1712
    %v1715 = vsel %vm96, %v1710, %v1713
    %v1716 = vpack.c.bf16 %v1715, %v1715
    %v1718 = vsel %vm123, %v1716, 0
    %1720 = vmatprep.subr.bf16.mxu0 0
    %1721 = vmatpush1.bf16.msra.mxu0 %v217
    %1722 = vmatprep.subr.bf16.mxu0 0
    %1723 = vmatpush1.bf16.msra.mxu0 %v218
    %1724 = vmatprep.subr.bf16.mxu0 0
    %1725 = vmatpush1.bf16.msra.mxu0 %v219
    %1726 = vmatprep.subr.bf16.mxu0 0
    %1727 = vmatpush1.bf16.msra.mxu0 %v220
    %1728 = vmatprep.subr.bf16.mxu0 0
    %1729 = vmatpush1.bf16.msra.mxu0 0
    %1730 = vmatprep.subr.bf16.mxu0 0
    %1731 = vmatpush1.bf16.msra.mxu0 0
    %1732 = vmatprep.subr.bf16.mxu0 0
    %1733 = vmatpush1.bf16.msra.mxu0 0
    %1734 = vmatprep.subr.bf16.mxu0 0
    %1735 = vmatpush1.bf16.msra.mxu0 0
    %1736 = vmatprep.subr.bf16.mxu0 0
    %1737 = vmatpush1.bf16.msra.mxu0 0
    %1738 = vmatprep.subr.bf16.mxu0 0
    %1739 = vmatpush1.bf16.msra.mxu0 0
    %1740 = vmatprep.subr.bf16.mxu0 0
    %1741 = vmatpush1.bf16.msra.mxu0 0
    %1742 = vmatprep.subr.bf16.mxu0 0
    %1743 = vmatpush1.bf16.msra.mxu0 0
    %1744 = vmatprep.subr.bf16.mxu0 0
    %1745 = vmatpush1.bf16.msra.mxu0 0
    %1746 = vmatprep.subr.bf16.mxu0 0
    %1747 = vmatpush1.bf16.msra.mxu0 0
    %1748 = vmatprep.subr.bf16.mxu0 0
    %1749 = vmatpush1.bf16.msra.mxu0 0
    %1750 = vmatprep.subr.bf16.mxu0 0
    %1751 = vmatpush1.bf16.msra.mxu0 0
    %1752 = vmatprep.mubr.bf16.mxu0 0
    %1753 = vmatmul.mubr.bf16.gmra.mrb[0].mxu0 %v1718
    %v1754 = vpop.f32.mrb[0].mxu0
    %v1755 = vadd.f32 %v90, %v1754
    %v1756 = vpop.f32.mrb[0].mxu0
    %v1757 = vpop.f32.mrb[0].mxu0
    %v1758 = vpop.f32.mrb[0].mxu0
    %1759 = vdwg.mxu0
    %v1760 = vxor.u32 %v1755, 2147483648
    %v1761 = vmul.f32 %v1760, 1.442695
    %v1762 = vpow.pop %v1761
    %v1763 = vadd.f32 %v1762, 1.0
    %v1764 = vrcp.pop %v1763
    %v1765 = vmul.f32 1.0, %v1764
    %1767 = vrot.lane.b32.xlu0 %v1755, 32
    %v1768 = vpop.permute.xlu0 %1767
    %v1770 = vmul.f32 %v1765, %v1768
    %1772 = vrot.lane.b32.xlu0 %v1770, 64
    %v1773 = vpop.permute.xlu0 %1772
    %v1775 = vadd.f32 %v1755, %v1773
    %v1776 = vtanh.pop %v1775
    %v1777 = vsub.f32 %v1500, %v1776
    %1779 = vrot.lane.b32.xlu0 %v1777, 96
    %v1780 = vpop.permute.xlu0 %1779
    %v1782 = vmul.f32 %v1765, %v1780
    %1784 = vrot.lane.b32.xlu0 %v1782, 32
    %v1785 = vpop.permute.xlu0 %1784
    %v1787 = vadd.f32 %v1776, %v1785
    %1789 = vrot.lane.b32.xlu0 %v1787, 64
    %v1790 = vpop.permute.xlu0 %1789
    %1792 = vrot.lane.b32.xlu0 %v1580, 96
    %v1793 = vpop.permute.xlu0 %1792
    %v1795 = vsel %vm96, %v1790, %v1793
    %v1796 = vpack.c.bf16 %v1795, %v1795
    %v1798 = vsel %vm123, %v1796, 0
    %1800 = vmatprep.subr.bf16.mxu0 0
    %1801 = vmatpush1.bf16.msra.mxu0 %v318
    %1802 = vmatprep.subr.bf16.mxu0 0
    %1803 = vmatpush1.bf16.msra.mxu0 %v319
    %1804 = vmatprep.subr.bf16.mxu0 0
    %1805 = vmatpush1.bf16.msra.mxu0 %v320
    %1806 = vmatprep.subr.bf16.mxu0 0
    %1807 = vmatpush1.bf16.msra.mxu0 %v321
    %1808 = vmatprep.subr.bf16.mxu0 0
    %1809 = vmatpush1.bf16.msra.mxu0 0
    %1810 = vmatprep.subr.bf16.mxu0 0
    %1811 = vmatpush1.bf16.msra.mxu0 0
    %1812 = vmatprep.subr.bf16.mxu0 0
    %1813 = vmatpush1.bf16.msra.mxu0 0
    %1814 = vmatprep.subr.bf16.mxu0 0
    %1815 = vmatpush1.bf16.msra.mxu0 0
    %1816 = vmatprep.subr.bf16.mxu0 0
    %1817 = vmatpush1.bf16.msra.mxu0 0
    %1818 = vmatprep.subr.bf16.mxu0 0
    %1819 = vmatpush1.bf16.msra.mxu0 0
    %1820 = vmatprep.subr.bf16.mxu0 0
    %1821 = vmatpush1.bf16.msra.mxu0 0
    %1822 = vmatprep.subr.bf16.mxu0 0
    %1823 = vmatpush1.bf16.msra.mxu0 0
    %1824 = vmatprep.subr.bf16.mxu0 0
    %1825 = vmatpush1.bf16.msra.mxu0 0
    %1826 = vmatprep.subr.bf16.mxu0 0
    %1827 = vmatpush1.bf16.msra.mxu0 0
    %1828 = vmatprep.subr.bf16.mxu0 0
    %1829 = vmatpush1.bf16.msra.mxu0 0
    %1830 = vmatprep.subr.bf16.mxu0 0
    %1831 = vmatpush1.bf16.msra.mxu0 0
    %1832 = vmatprep.mubr.bf16.mxu0 0
    %1833 = vmatmul.mubr.bf16.gmra.mrb[0].mxu0 %v1798
    %v1834 = vpop.f32.mrb[0].mxu0
    %v1835 = vadd.f32 %v94, %v1834
    %v1836 = vpop.f32.mrb[0].mxu0
    %v1837 = vpop.f32.mrb[0].mxu0
    %v1838 = vpop.f32.mrb[0].mxu0
    %1839 = vdwg.mxu0
    %v1840 = vxor.u32 %v1835, 2147483648
    %v1841 = vmul.f32 %v1840, 1.442695
    %v1842 = vpow.pop %v1841
    %v1843 = vadd.f32 %v1842, 1.0
    %v1844 = vrcp.pop %v1843
    %v1845 = vmul.f32 1.0, %v1844
    %1847 = vrot.lane.b32.xlu0 %v1835, 32
    %v1848 = vpop.permute.xlu0 %1847
    %v1850 = vmul.f32 %v1845, %v1848
    %1852 = vrot.lane.b32.xlu0 %v1850, 64
    %v1853 = vpop.permute.xlu0 %1852
    %v1855 = vadd.f32 %v1835, %v1853
    %v1856 = vtanh.pop %v1855
    %v1857 = vsub.f32 %v1580, %v1856
    %1859 = vrot.lane.b32.xlu0 %v1857, 96
    %v1860 = vpop.permute.xlu0 %1859
    %v1862 = vmul.f32 %v1845, %v1860
    %1864 = vrot.lane.b32.xlu0 %v1862, 32
    %v1865 = vpop.permute.xlu0 %1864
    %v1867 = vadd.f32 %v1856, %v1865
    %v1868 = vpack.c.bf16 %v1867, %v1867
    %1870 = vrot.lane.b32.xlu0 %v1868, 64
    %v1871 = vpop.permute.xlu0 %1870
    %v1873 = vsel %vm96, %v1871, 0
    %1875 = vmatprep.subr.bf16.mxu0 0
    %1876 = vmatpush1.bf16.msra.mxu0 %v409
    %1877 = vmatprep.subr.bf16.mxu0 0
    %1878 = vmatpush1.bf16.msra.mxu0 %v410
    %1879 = vmatprep.subr.bf16.mxu0 0
    %1880 = vmatpush1.bf16.msra.mxu0 0
    %1881 = vmatprep.subr.bf16.mxu0 0
    %1882 = vmatpush1.bf16.msra.mxu0 0
    %1883 = vmatprep.subr.bf16.mxu0 0
    %1884 = vmatpush1.bf16.msra.mxu0 0
    %1885 = vmatprep.subr.bf16.mxu0 0
    %1886 = vmatpush1.bf16.msra.mxu0 0
    %1887 = vmatprep.subr.bf16.mxu0 0
    %1888 = vmatpush1.bf16.msra.mxu0 0
    %1889 = vmatprep.subr.bf16.mxu0 0
    %1890 = vmatpush1.bf16.msra.mxu0 0
    %1891 = vmatprep.subr.bf16.mxu0 0
    %1892 = vmatpush1.bf16.msra.mxu0 0
    %1893 = vmatprep.subr.bf16.mxu0 0
    %1894 = vmatpush1.bf16.msra.mxu0 0
    %1895 = vmatprep.subr.bf16.mxu0 0
    %1896 = vmatpush1.bf16.msra.mxu0 0
    %1897 = vmatprep.subr.bf16.mxu0 0
    %1898 = vmatpush1.bf16.msra.mxu0 0
    %1899 = vmatprep.subr.bf16.mxu0 0
    %1900 = vmatpush1.bf16.msra.mxu0 0
    %1901 = vmatprep.subr.bf16.mxu0 0
    %1902 = vmatpush1.bf16.msra.mxu0 0
    %1903 = vmatprep.subr.bf16.mxu0 0
    %1904 = vmatpush1.bf16.msra.mxu0 0
    %1905 = vmatprep.subr.bf16.mxu0 0
    %1906 = vmatpush1.bf16.msra.mxu0 0
    %1907 = vmatprep.mubr.bf16.mxu0 0
    %1908 = vmatmul.mubr.bf16.gmra.mrb[0].mxu0 %v1873
    %v1909 = vpop.f32.mrb[0].mxu0
    %v1910 = vadd.f32 %v77, %v1909
    %v1911 = vpop.f32.mrb[0].mxu0
    %v1912 = vpop.f32.mrb[0].mxu0
    %v1913 = vpop.f32.mrb[0].mxu0
    %1914 = vdwg.mxu0
    %1916 = vrot.lane.b32.xlu0 %v1867, 64
    %v1917 = vpop.permute.xlu0 %1916
    %1919 = vrot.lane.b32.xlu0 %v1707, 96
    %v1920 = vpop.permute.xlu0 %1919
    %v1922 = vsel %vm96, %v1917, %v1920
    %v1923 = vpack.c.bf16 %v1922, %v1922
    %v1925 = vsel %vm123, %v1923, 0
    %1927 = vmatprep.subr.bf16.mxu0 0
    %1928 = vmatpush1.bf16.msra.mxu0 %v481
    %1929 = vmatprep.subr.bf16.mxu0 0
    %1930 = vmatpush1.bf16.msra.mxu0 %v482
    %1931 = vmatprep.subr.bf16.mxu0 0
    %1932 = vmatpush1.bf16.msra.mxu0 %v483
    %1933 = vmatprep.subr.bf16.mxu0 0
    %1934 = vmatpush1.bf16.msra.mxu0 %v484
    %1935 = vmatprep.subr.bf16.mxu0 0
    %1936 = vmatpush1.bf16.msra.mxu0 0
    %1937 = vmatprep.subr.bf16.mxu0 0
    %1938 = vmatpush1.bf16.msra.mxu0 0
    %1939 = vmatprep.subr.bf16.mxu0 0
    %1940 = vmatpush1.bf16.msra.mxu0 0
    %1941 = vmatprep.subr.bf16.mxu0 0
    %1942 = vmatpush1.bf16.msra.mxu0 0
    %1943 = vmatprep.subr.bf16.mxu0 0
    %1944 = vmatpush1.bf16.msra.mxu0 0
    %1945 = vmatprep.subr.bf16.mxu0 0
    %1946 = vmatpush1.bf16.msra.mxu0 0
    %1947 = vmatprep.subr.bf16.mxu0 0
    %1948 = vmatpush1.bf16.msra.mxu0 0
    %1949 = vmatprep.subr.bf16.mxu0 0
    %1950 = vmatpush1.bf16.msra.mxu0 0
    %1951 = vmatprep.subr.bf16.mxu0 0
    %1952 = vmatpush1.bf16.msra.mxu0 0
    %1953 = vmatprep.subr.bf16.mxu0 0
    %1954 = vmatpush1.bf16.msra.mxu0 0
    %1955 = vmatprep.subr.bf16.mxu0 0
    %1956 = vmatpush1.bf16.msra.mxu0 0
    %1957 = vmatprep.subr.bf16.mxu0 0
    %1958 = vmatpush1.bf16.msra.mxu0 0
    %1959 = vmatprep.mubr.bf16.mxu0 0
    %1960 = vmatmul.mubr.bf16.gmra.mrb[0].mxu0 %v1925
    %v1961 = vpop.f32.mrb[0].mxu0
    %v1962 = vadd.f32 %v86, %v1961
    %v1963 = vpop.f32.mrb[0].mxu0
    %v1964 = vpop.f32.mrb[0].mxu0
    %v1965 = vpop.f32.mrb[0].mxu0
    %1966 = vdwg.mxu0
    %v1967 = vxor.u32 %v1962, 2147483648
    %v1968 = vmul.f32 %v1967, 1.442695
    %v1969 = vpow.pop %v1968
    %v1970 = vadd.f32 %v1969, 1.0
    %v1971 = vrcp.pop %v1970
    %v1972 = vmul.f32 1.0, %v1971
    %1974 = vrot.lane.b32.xlu0 %v1962, 32
    %v1975 = vpop.permute.xlu0 %1974
    %v1977 = vmul.f32 %v1972, %v1975
    %1979 = vrot.lane.b32.xlu0 %v1977, 64
    %v1980 = vpop.permute.xlu0 %1979
    %v1982 = vadd.f32 %v1962, %v1980
    %v1983 = vtanh.pop %v1982
    %v1984 = vsub.f32 %v1707, %v1983
    %1986 = vrot.lane.b32.xlu0 %v1984, 96
    %v1987 = vpop.permute.xlu0 %1986
    %v1989 = vmul.f32 %v1972, %v1987
    %1991 = vrot.lane.b32.xlu0 %v1989, 32
    %v1992 = vpop.permute.xlu0 %1991
    %v1994 = vadd.f32 %v1983, %v1992
    %1996 = vrot.lane.b32.xlu0 %v1994, 64
    %v1997 = vpop.permute.xlu0 %1996
    %1999 = vrot.lane.b32.xlu0 %v1787, 96
    %v2000 = vpop.permute.xlu0 %1999
    %v2002 = vsel %vm96, %v1997, %v2000
    %v2003 = vpack.c.bf16 %v2002, %v2002
    %v2005 = vsel %vm123, %v2003, 0
    %2007 = vmatprep.subr.bf16.mxu0 0
    %2008 = vmatpush1.bf16.msra.mxu0 %v217
    %2009 = vmatprep.subr.bf16.mxu0 0
    %2010 = vmatpush1.bf16.msra.mxu0 %v218
    %2011 = vmatprep.subr.bf16.mxu0 0
    %2012 = vmatpush1.bf16.msra.mxu0 %v219
    %2013 = vmatprep.subr.bf16.mxu0 0
    %2014 = vmatpush1.bf16.msra.mxu0 %v220
    %2015 = vmatprep.subr.bf16.mxu0 0
    %2016 = vmatpush1.bf16.msra.mxu0 0
    %2017 = vmatprep.subr.bf16.mxu0 0
    %2018 = vmatpush1.bf16.msra.mxu0 0
    %2019 = vmatprep.subr.bf16.mxu0 0
    %2020 = vmatpush1.bf16.msra.mxu0 0
    %2021 = vmatprep.subr.bf16.mxu0 0
    %2022 = vmatpush1.bf16.msra.mxu0 0
    %2023 = vmatprep.subr.bf16.mxu0 0
    %2024 = vmatpush1.bf16.msra.mxu0 0
    %2025 = vmatprep.subr.bf16.mxu0 0
    %2026 = vmatpush1.bf16.msra.mxu0 0
    %2027 = vmatprep.subr.bf16.mxu0 0
    %2028 = vmatpush1.bf16.msra.mxu0 0
    %2029 = vmatprep.subr.bf16.mxu0 0
    %2030 = vmatpush1.bf16.msra.mxu0 0
    %2031 = vmatprep.subr.bf16.mxu0 0
    %2032 = vmatpush1.bf16.msra.mxu0 0
    %2033 = vmatprep.subr.bf16.mxu0 0
    %2034 = vmatpush1.bf16.msra.mxu0 0
    %2035 = vmatprep.subr.bf16.mxu0 0
    %2036 = vmatpush1.bf16.msra.mxu0 0
    %2037 = vmatprep.subr.bf16.mxu0 0
    %2038 = vmatpush1.bf16.msra.mxu0 0
    %2039 = vmatprep.mubr.bf16.mxu0 0
    %2040 = vmatmul.mubr.bf16.gmra.mrb[0].mxu0 %v2005
    %v2041 = vpop.f32.mrb[0].mxu0
    %v2042 = vadd.f32 %v90, %v2041
    %v2043 = vpop.f32.mrb[0].mxu0
    %v2044 = vpop.f32.mrb[0].mxu0
    %v2045 = vpop.f32.mrb[0].mxu0
    %2046 = vdwg.mxu0
    %v2047 = vxor.u32 %v2042, 2147483648
    %v2048 = vmul.f32 %v2047, 1.442695
    %v2049 = vpow.pop %v2048
    %v2050 = vadd.f32 %v2049, 1.0
    %v2051 = vrcp.pop %v2050
    %v2052 = vmul.f32 1.0, %v2051
    %2054 = vrot.lane.b32.xlu0 %v2042, 32
    %v2055 = vpop.permute.xlu0 %2054
    %v2057 = vmul.f32 %v2052, %v2055
    %2059 = vrot.lane.b32.xlu0 %v2057, 64
    %v2060 = vpop.permute.xlu0 %2059
    %v2062 = vadd.f32 %v2042, %v2060
    %v2063 = vtanh.pop %v2062
    %v2064 = vsub.f32 %v1787, %v2063
    %2066 = vrot.lane.b32.xlu0 %v2064, 96
    %v2067 = vpop.permute.xlu0 %2066
    %v2069 = vmul.f32 %v2052, %v2067
    %2071 = vrot.lane.b32.xlu0 %v2069, 32
    %v2072 = vpop.permute.xlu0 %2071
    %v2074 = vadd.f32 %v2063, %v2072
    %2076 = vrot.lane.b32.xlu0 %v2074, 64
    %v2077 = vpop.permute.xlu0 %2076
    %2079 = vrot.lane.b32.xlu0 %v1867, 96
    %v2080 = vpop.permute.xlu0 %2079
    %v2082 = vsel %vm96, %v2077, %v2080
    %v2083 = vpack.c.bf16 %v2082, %v2082
    %v2085 = vsel %vm123, %v2083, 0
    %2087 = vmatprep.subr.bf16.mxu0 0
    %2088 = vmatpush1.bf16.msra.mxu0 %v318
    %2089 = vmatprep.subr.bf16.mxu0 0
    %2090 = vmatpush1.bf16.msra.mxu0 %v319
    %2091 = vmatprep.subr.bf16.mxu0 0
    %2092 = vmatpush1.bf16.msra.mxu0 %v320
    %2093 = vmatprep.subr.bf16.mxu0 0
    %2094 = vmatpush1.bf16.msra.mxu0 %v321
    %2095 = vmatprep.subr.bf16.mxu0 0
    %2096 = vmatpush1.bf16.msra.mxu0 0
    %2097 = vmatprep.subr.bf16.mxu0 0
    %2098 = vmatpush1.bf16.msra.mxu0 0
    %2099 = vmatprep.subr.bf16.mxu0 0
    %2100 = vmatpush1.bf16.msra.mxu0 0
    %2101 = vmatprep.subr.bf16.mxu0 0
    %2102 = vmatpush1.bf16.msra.mxu0 0
    %2103 = vmatprep.subr.bf16.mxu0 0
    %2104 = vmatpush1.bf16.msra.mxu0 0
    %2105 = vmatprep.subr.bf16.mxu0 0
    %2106 = vmatpush1.bf16.msra.mxu0 0
    %2107 = vmatprep.subr.bf16.mxu0 0
    %2108 = vmatpush1.bf16.msra.mxu0 0
    %2109 = vmatprep.subr.bf16.mxu0 0
    %2110 = vmatpush1.bf16.msra.mxu0 0
    %2111 = vmatprep.subr.bf16.mxu0 0
    %2112 = vmatpush1.bf16.msra.mxu0 0
    %2113 = vmatprep.subr.bf16.mxu0 0
    %2114 = vmatpush1.bf16.msra.mxu0 0
    %2115 = vmatprep.subr.bf16.mxu0 0
    %2116 = vmatpush1.bf16.msra.mxu0 0
    %2117 = vmatprep.subr.bf16.mxu0 0
    %2118 = vmatpush1.bf16.msra.mxu0 0
    %2119 = vmatprep.mubr.bf16.mxu0 0
    %2120 = vmatmul.mubr.bf16.gmra.mrb[0].mxu0 %v2085
    %v2121 = vpop.f32.mrb[0].mxu0
    %v2122 = vadd.f32 %v94, %v2121
    %v2123 = vpop.f32.mrb[0].mxu0
    %v2124 = vpop.f32.mrb[0].mxu0
    %v2125 = vpop.f32.mrb[0].mxu0
    %2126 = vdwg.mxu0
    %v2127 = vxor.u32 %v2122, 2147483648
    %v2128 = vmul.f32 %v2127, 1.442695
    %v2129 = vpow.pop %v2128
    %v2130 = vadd.f32 %v2129, 1.0
    %v2131 = vrcp.pop %v2130
    %v2132 = vmul.f32 1.0, %v2131
    %2134 = vrot.lane.b32.xlu0 %v2122, 32
    %v2135 = vpop.permute.xlu0 %2134
    %v2137 = vmul.f32 %v2132, %v2135
    %2139 = vrot.lane.b32.xlu0 %v2137, 64
    %v2140 = vpop.permute.xlu0 %2139
    %v2142 = vadd.f32 %v2122, %v2140
    %v2143 = vtanh.pop %v2142
    %v2144 = vsub.f32 %v1867, %v2143
    %2146 = vrot.lane.b32.xlu0 %v2144, 96
    %v2147 = vpop.permute.xlu0 %2146
    %v2149 = vmul.f32 %v2132, %v2147
    %2151 = vrot.lane.b32.xlu0 %v2149, 32
    %v2152 = vpop.permute.xlu0 %2151
    %v2154 = vadd.f32 %v2143, %v2152
    %v2155 = vpack.c.bf16 %v2154, %v2154
    %2157 = vrot.lane.b32.xlu0 %v2155, 64
    %v2158 = vpop.permute.xlu0 %2157
    %v2160 = vsel %vm96, %v2158, 0
    %2162 = vmatprep.subr.bf16.mxu0 0
    %2163 = vmatpush1.bf16.msra.mxu0 %v409
    %2164 = vmatprep.subr.bf16.mxu0 0
    %2165 = vmatpush1.bf16.msra.mxu0 %v410
    %2166 = vmatprep.subr.bf16.mxu0 0
    %2167 = vmatpush1.bf16.msra.mxu0 0
    %2168 = vmatprep.subr.bf16.mxu0 0
    %2169 = vmatpush1.bf16.msra.mxu0 0
    %2170 = vmatprep.subr.bf16.mxu0 0
    %2171 = vmatpush1.bf16.msra.mxu0 0
    %2172 = vmatprep.subr.bf16.mxu0 0
    %2173 = vmatpush1.bf16.msra.mxu0 0
    %2174 = vmatprep.subr.bf16.mxu0 0
    %2175 = vmatpush1.bf16.msra.mxu0 0
    %2176 = vmatprep.subr.bf16.mxu0 0
    %2177 = vmatpush1.bf16.msra.mxu0 0
    %2178 = vmatprep.subr.bf16.mxu0 0
    %2179 = vmatpush1.bf16.msra.mxu0 0
    %2180 = vmatprep.subr.bf16.mxu0 0
    %2181 = vmatpush1.bf16.msra.mxu0 0
    %2182 = vmatprep.subr.bf16.mxu0 0
    %2183 = vmatpush1.bf16.msra.mxu0 0
    %2184 = vmatprep.subr.bf16.mxu0 0
    %2185 = vmatpush1.bf16.msra.mxu0 0
    %2186 = vmatprep.subr.bf16.mxu0 0
    %2187 = vmatpush1.bf16.msra.mxu0 0
    %2188 = vmatprep.subr.bf16.mxu0 0
    %2189 = vmatpush1.bf16.msra.mxu0 0
    %2190 = vmatprep.subr.bf16.mxu0 0
    %2191 = vmatpush1.bf16.msra.mxu0 0
    %2192 = vmatprep.subr.bf16.mxu0 0
    %2193 = vmatpush1.bf16.msra.mxu0 0
    %2194 = vmatprep.mubr.bf16.mxu0 0
    %2195 = vmatmul.mubr.bf16.gmra.mrb[0].mxu0 %v2160
    %v2196 = vpop.f32.mrb[0].mxu0
    %v2197 = vadd.f32 %v77, %v2196
    %v2198 = vpop.f32.mrb[0].mxu0
    %v2199 = vpop.f32.mrb[0].mxu0
    %v2200 = vpop.f32.mrb[0].mxu0
    %2201 = vdwg.mxu0
    %2203 = vrot.lane.b32.xlu0 %v2154, 64
    %v2204 = vpop.permute.xlu0 %2203
    %2206 = vrot.lane.b32.xlu0 %v1994, 96
    %v2207 = vpop.permute.xlu0 %2206
    %v2209 = vsel %vm96, %v2204, %v2207
    %v2210 = vpack.c.bf16 %v2209, %v2209
    %v2212 = vsel %vm123, %v2210, 0
    %2214 = vmatprep.subr.bf16.mxu0 0
    %2215 = vmatpush1.bf16.msra.mxu0 %v481
    %2216 = vmatprep.subr.bf16.mxu0 0
    %2217 = vmatpush1.bf16.msra.mxu0 %v482
    %2218 = vmatprep.subr.bf16.mxu0 0
    %2219 = vmatpush1.bf16.msra.mxu0 %v483
    %2220 = vmatprep.subr.bf16.mxu0 0
    %2221 = vmatpush1.bf16.msra.mxu0 %v484
    %2222 = vmatprep.subr.bf16.mxu0 0
    %2223 = vmatpush1.bf16.msra.mxu0 0
    %2224 = vmatprep.subr.bf16.mxu0 0
    %2225 = vmatpush1.bf16.msra.mxu0 0
    %2226 = vmatprep.subr.bf16.mxu0 0
    %2227 = vmatpush1.bf16.msra.mxu0 0
    %2228 = vmatprep.subr.bf16.mxu0 0
    %2229 = vmatpush1.bf16.msra.mxu0 0
    %2230 = vmatprep.subr.bf16.mxu0 0
    %2231 = vmatpush1.bf16.msra.mxu0 0
    %2232 = vmatprep.subr.bf16.mxu0 0
    %2233 = vmatpush1.bf16.msra.mxu0 0
    %2234 = vmatprep.subr.bf16.mxu0 0
    %2235 = vmatpush1.bf16.msra.mxu0 0
    %2236 = vmatprep.subr.bf16.mxu0 0
    %2237 = vmatpush1.bf16.msra.mxu0 0
    %2238 = vmatprep.subr.bf16.mxu0 0
    %2239 = vmatpush1.bf16.msra.mxu0 0
    %2240 = vmatprep.subr.bf16.mxu0 0
    %2241 = vmatpush1.bf16.msra.mxu0 0
    %2242 = vmatprep.subr.bf16.mxu0 0
    %2243 = vmatpush1.bf16.msra.mxu0 0
    %2244 = vmatprep.subr.bf16.mxu0 0
    %2245 = vmatpush1.bf16.msra.mxu0 0
    %2246 = vmatprep.mubr.bf16.mxu0 0
    %2247 = vmatmul.mubr.bf16.gmra.mrb[0].mxu0 %v2212
    %v2248 = vpop.f32.mrb[0].mxu0
    %v2249 = vadd.f32 %v86, %v2248
    %v2250 = vpop.f32.mrb[0].mxu0
    %v2251 = vpop.f32.mrb[0].mxu0
    %v2252 = vpop.f32.mrb[0].mxu0
    %2253 = vdwg.mxu0
    %v2254 = vxor.u32 %v2249, 2147483648
    %v2255 = vmul.f32 %v2254, 1.442695
    %v2256 = vpow.pop %v2255
    %v2257 = vadd.f32 %v2256, 1.0
    %v2258 = vrcp.pop %v2257
    %v2259 = vmul.f32 1.0, %v2258
    %2261 = vrot.lane.b32.xlu0 %v2249, 32
    %v2262 = vpop.permute.xlu0 %2261
    %v2264 = vmul.f32 %v2259, %v2262
    %2266 = vrot.lane.b32.xlu0 %v2264, 64
    %v2267 = vpop.permute.xlu0 %2266
    %v2269 = vadd.f32 %v2249, %v2267
    %v2270 = vtanh.pop %v2269
    %v2271 = vsub.f32 %v1994, %v2270
    %2273 = vrot.lane.b32.xlu0 %v2271, 96
    %v2274 = vpop.permute.xlu0 %2273
    %v2276 = vmul.f32 %v2259, %v2274
    %2278 = vrot.lane.b32.xlu0 %v2276, 32
    %v2279 = vpop.permute.xlu0 %2278
    %v2281 = vadd.f32 %v2270, %v2279
    %2283 = vrot.lane.b32.xlu0 %v2281, 64
    %v2284 = vpop.permute.xlu0 %2283
    %2286 = vrot.lane.b32.xlu0 %v2074, 96
    %v2287 = vpop.permute.xlu0 %2286
    %v2289 = vsel %vm96, %v2284, %v2287
    %v2290 = vpack.c.bf16 %v2289, %v2289
    %v2292 = vsel %vm123, %v2290, 0
    %2294 = vmatprep.subr.bf16.mxu0 0
    %2295 = vmatpush1.bf16.msra.mxu0 %v217
    %2296 = vmatprep.subr.bf16.mxu0 0
    %2297 = vmatpush1.bf16.msra.mxu0 %v218
    %2298 = vmatprep.subr.bf16.mxu0 0
    %2299 = vmatpush1.bf16.msra.mxu0 %v219
    %2300 = vmatprep.subr.bf16.mxu0 0
    %2301 = vmatpush1.bf16.msra.mxu0 %v220
    %2302 = vmatprep.subr.bf16.mxu0 0
    %2303 = vmatpush1.bf16.msra.mxu0 0
    %2304 = vmatprep.subr.bf16.mxu0 0
    %2305 = vmatpush1.bf16.msra.mxu0 0
    %2306 = vmatprep.subr.bf16.mxu0 0
    %2307 = vmatpush1.bf16.msra.mxu0 0
    %2308 = vmatprep.subr.bf16.mxu0 0
    %2309 = vmatpush1.bf16.msra.mxu0 0
    %2310 = vmatprep.subr.bf16.mxu0 0
    %2311 = vmatpush1.bf16.msra.mxu0 0
    %2312 = vmatprep.subr.bf16.mxu0 0
    %2313 = vmatpush1.bf16.msra.mxu0 0
    %2314 = vmatprep.subr.bf16.mxu0 0
    %2315 = vmatpush1.bf16.msra.mxu0 0
    %2316 = vmatprep.subr.bf16.mxu0 0
    %2317 = vmatpush1.bf16.msra.mxu0 0
    %2318 = vmatprep.subr.bf16.mxu0 0
    %2319 = vmatpush1.bf16.msra.mxu0 0
    %2320 = vmatprep.subr.bf16.mxu0 0
    %2321 = vmatpush1.bf16.msra.mxu0 0
    %2322 = vmatprep.subr.bf16.mxu0 0
    %2323 = vmatpush1.bf16.msra.mxu0 0
    %2324 = vmatprep.subr.bf16.mxu0 0
    %2325 = vmatpush1.bf16.msra.mxu0 0
    %2326 = vmatprep.mubr.bf16.mxu0 0
    %2327 = vmatmul.mubr.bf16.gmra.mrb[0].mxu0 %v2292
    %v2328 = vpop.f32.mrb[0].mxu0
    %v2329 = vadd.f32 %v90, %v2328
    %v2330 = vpop.f32.mrb[0].mxu0
    %v2331 = vpop.f32.mrb[0].mxu0
    %v2332 = vpop.f32.mrb[0].mxu0
    %2333 = vdwg.mxu0
    %v2334 = vxor.u32 %v2329, 2147483648
    %v2335 = vmul.f32 %v2334, 1.442695
    %v2336 = vpow.pop %v2335
    %v2337 = vadd.f32 %v2336, 1.0
    %v2338 = vrcp.pop %v2337
    %v2339 = vmul.f32 1.0, %v2338
    %2341 = vrot.lane.b32.xlu0 %v2329, 32
    %v2342 = vpop.permute.xlu0 %2341
    %v2344 = vmul.f32 %v2339, %v2342
    %2346 = vrot.lane.b32.xlu0 %v2344, 64
    %v2347 = vpop.permute.xlu0 %2346
    %v2349 = vadd.f32 %v2329, %v2347
    %v2350 = vtanh.pop %v2349
    %v2351 = vsub.f32 %v2074, %v2350
    %2353 = vrot.lane.b32.xlu0 %v2351, 96
    %v2354 = vpop.permute.xlu0 %2353
    %v2356 = vmul.f32 %v2339, %v2354
    %2358 = vrot.lane.b32.xlu0 %v2356, 32
    %v2359 = vpop.permute.xlu0 %2358
    %v2361 = vadd.f32 %v2350, %v2359
    %2363 = vrot.lane.b32.xlu0 %v2361, 64
    %v2364 = vpop.permute.xlu0 %2363
    %2366 = vrot.lane.b32.xlu0 %v2154, 96
    %v2367 = vpop.permute.xlu0 %2366
    %v2369 = vsel %vm96, %v2364, %v2367
    %v2370 = vpack.c.bf16 %v2369, %v2369
    %v2372 = vsel %vm123, %v2370, 0
    %2374 = vmatprep.subr.bf16.mxu0 0
    %2375 = vmatpush1.bf16.msra.mxu0 %v318
    %2376 = vmatprep.subr.bf16.mxu0 0
    %2377 = vmatpush1.bf16.msra.mxu0 %v319
    %2378 = vmatprep.subr.bf16.mxu0 0
    %2379 = vmatpush1.bf16.msra.mxu0 %v320
    %2380 = vmatprep.subr.bf16.mxu0 0
    %2381 = vmatpush1.bf16.msra.mxu0 %v321
    %2382 = vmatprep.subr.bf16.mxu0 0
    %2383 = vmatpush1.bf16.msra.mxu0 0
    %2384 = vmatprep.subr.bf16.mxu0 0
    %2385 = vmatpush1.bf16.msra.mxu0 0
    %2386 = vmatprep.subr.bf16.mxu0 0
    %2387 = vmatpush1.bf16.msra.mxu0 0
    %2388 = vmatprep.subr.bf16.mxu0 0
    %2389 = vmatpush1.bf16.msra.mxu0 0
    %2390 = vmatprep.subr.bf16.mxu0 0
    %2391 = vmatpush1.bf16.msra.mxu0 0
    %2392 = vmatprep.subr.bf16.mxu0 0
    %2393 = vmatpush1.bf16.msra.mxu0 0
    %2394 = vmatprep.subr.bf16.mxu0 0
    %2395 = vmatpush1.bf16.msra.mxu0 0
    %2396 = vmatprep.subr.bf16.mxu0 0
    %2397 = vmatpush1.bf16.msra.mxu0 0
    %2398 = vmatprep.subr.bf16.mxu0 0
    %2399 = vmatpush1.bf16.msra.mxu0 0
    %2400 = vmatprep.subr.bf16.mxu0 0
    %2401 = vmatpush1.bf16.msra.mxu0 0
    %2402 = vmatprep.subr.bf16.mxu0 0
    %2403 = vmatpush1.bf16.msra.mxu0 0
    %2404 = vmatprep.subr.bf16.mxu0 0
    %2405 = vmatpush1.bf16.msra.mxu0 0
    %2406 = vmatprep.mubr.bf16.mxu0 0
    %2407 = vmatmul.mubr.bf16.gmra.mrb[0].mxu0 %v2372
    %v2408 = vpop.f32.mrb[0].mxu0
    %v2409 = vadd.f32 %v94, %v2408
    %v2410 = vpop.f32.mrb[0].mxu0
    %v2411 = vpop.f32.mrb[0].mxu0
    %v2412 = vpop.f32.mrb[0].mxu0
    %2413 = vdwg.mxu0
    %v2414 = vxor.u32 %v2409, 2147483648
    %v2415 = vmul.f32 %v2414, 1.442695
    %v2416 = vpow.pop %v2415
    %v2417 = vadd.f32 %v2416, 1.0
    %v2418 = vrcp.pop %v2417
    %v2419 = vmul.f32 1.0, %v2418
    %2421 = vrot.lane.b32.xlu0 %v2409, 32
    %v2422 = vpop.permute.xlu0 %2421
    %v2424 = vmul.f32 %v2419, %v2422
    %2426 = vrot.lane.b32.xlu0 %v2424, 64
    %v2427 = vpop.permute.xlu0 %2426
    %v2429 = vadd.f32 %v2409, %v2427
    %v2430 = vtanh.pop %v2429
    %v2431 = vsub.f32 %v2154, %v2430
    %2433 = vrot.lane.b32.xlu0 %v2431, 96
    %v2434 = vpop.permute.xlu0 %2433
    %v2436 = vmul.f32 %v2419, %v2434
    %2438 = vrot.lane.b32.xlu0 %v2436, 32
    %v2439 = vpop.permute.xlu0 %2438
    %v2441 = vadd.f32 %v2430, %v2439
    %v2442 = vpack.c.bf16 %v2441, %v2441
    %2444 = vrot.lane.b32.xlu0 %v2442, 64
    %v2445 = vpop.permute.xlu0 %2444
    %v2447 = vsel %vm96, %v2445, 0
    %2449 = vmatprep.subr.bf16.mxu0 0
    %2450 = vmatpush1.bf16.msra.mxu0 %v409
    %2451 = vmatprep.subr.bf16.mxu0 0
    %2452 = vmatpush1.bf16.msra.mxu0 %v410
    %2453 = vmatprep.subr.bf16.mxu0 0
    %2454 = vmatpush1.bf16.msra.mxu0 0
    %2455 = vmatprep.subr.bf16.mxu0 0
    %2456 = vmatpush1.bf16.msra.mxu0 0
    %2457 = vmatprep.subr.bf16.mxu0 0
    %2458 = vmatpush1.bf16.msra.mxu0 0
    %2459 = vmatprep.subr.bf16.mxu0 0
    %2460 = vmatpush1.bf16.msra.mxu0 0
    %2461 = vmatprep.subr.bf16.mxu0 0
    %2462 = vmatpush1.bf16.msra.mxu0 0
    %2463 = vmatprep.subr.bf16.mxu0 0
    %2464 = vmatpush1.bf16.msra.mxu0 0
    %2465 = vmatprep.subr.bf16.mxu0 0
    %2466 = vmatpush1.bf16.msra.mxu0 0
    %2467 = vmatprep.subr.bf16.mxu0 0
    %2468 = vmatpush1.bf16.msra.mxu0 0
    %2469 = vmatprep.subr.bf16.mxu0 0
    %2470 = vmatpush1.bf16.msra.mxu0 0
    %2471 = vmatprep.subr.bf16.mxu0 0
    %2472 = vmatpush1.bf16.msra.mxu0 0
    %2473 = vmatprep.subr.bf16.mxu0 0
    %2474 = vmatpush1.bf16.msra.mxu0 0
    %2475 = vmatprep.subr.bf16.mxu0 0
    %2476 = vmatpush1.bf16.msra.mxu0 0
    %2477 = vmatprep.subr.bf16.mxu0 0
    %2478 = vmatpush1.bf16.msra.mxu0 0
    %2479 = vmatprep.subr.bf16.mxu0 0
    %2480 = vmatpush1.bf16.msra.mxu0 0
    %2481 = vmatprep.mubr.bf16.mxu0 0
    %2482 = vmatmul.mubr.bf16.gmra.mrb[0].mxu0 %v2447
    %v2483 = vpop.f32.mrb[0].mxu0
    %v2484 = vadd.f32 %v77, %v2483
    %v2485 = vpop.f32.mrb[0].mxu0
    %v2486 = vpop.f32.mrb[0].mxu0
    %v2487 = vpop.f32.mrb[0].mxu0
    %2488 = vdwg.mxu0
    %2490 = vrot.lane.b32.xlu0 %v762, 16
    %v2491 = vpop.permute.xlu0 %2490
    %2494 = vrot.lane.b32.xlu0 %v1049, 32
    %v2495 = vpop.permute.xlu0 %2494
    %2498 = vrot.lane.b32.xlu0 %v1336, 48
    %v2499 = vpop.permute.xlu0 %2498
    %2502 = vrot.lane.b32.xlu0 %v1623, 64
    %v2503 = vpop.permute.xlu0 %2502
    %2506 = vrot.lane.b32.xlu0 %v1910, 80
    %v2507 = vpop.permute.xlu0 %2506
    %2510 = vrot.lane.b32.xlu0 %v2197, 96
    %v2511 = vpop.permute.xlu0 %2510
    %2514 = vrot.lane.b32.xlu0 %v2484, 112
    %v2515 = vpop.permute.xlu0 %2514
    %vm2517 = vcmask 130048
    %v2518 = vsel %vm2517, %v451, %v2491
    %v2519 = vsel %vm96, %v2518, %v2495
    %vm2520 = vcmask 392192
    %v2521 = vsel %vm2520, %v2519, %v2499
    %v2522 = vsel %vm123, %v2521, %v2503
    %vm2523 = vcmask 654336
    %v2524 = vsel %vm2523, %v2522, %v2507
    %vm2525 = vcmask 785408
    %v2526 = vsel %vm2525, %v2524, %v2511
    %vm2527 = vcmask 916480
    %v2528 = vsel %vm2527, %v2526, %v2515
    %2529 = vst [vmem:[%s5] sm:$0x3] %v2528
    // Predicated region
    $region26: #{pde_rnn_forward.1} parent=1 // pred_check
      _
    $region27: #{pde_rnn_forward.1} parent=1 // pred_check_branch
      %2531 = sbr.rel (0) target = $region29
    $region28: #{pde_rnn_forward.1} parent=1 // pred_region
      _
    $region29: #{pde_rnn_forward.1} parent=1 // pred_fallthru
      _
    // Predicated region
    $region30: #{pde_rnn_forward.1} parent=1 // pred_check
      _
    $region31: #{pde_rnn_forward.1} parent=1 // pred_check_branch
      %2533 = sbr.rel (0) target = $region33
    $region32: #{pde_rnn_forward.1} parent=1 // pred_region
      _
    $region33: #{pde_rnn_forward.1} parent=1 // pred_fallthru
      _
    %2534 = vsyncpa [#allocation3], 1

</llo_original>
